<compile_context>
chip_gen: v7x
topology: tpu7x:2x2x1
jax: 0.10.0
libtpu: 0.0.40
codegen_flags: <defaults>
</compile_context>

<pallas_src>
import math
import functools

import jax
import jax.numpy as jnp
from jax import lax
from jax.experimental import pallas as pl
from jax.experimental.pallas import tpu as pltpu


def _round_up(v, m):
    return (v + m - 1) // m * m


# ---------------------------------------------------------------------------
# Fused kernel: one grid step == one group of Nb batch samples.
# ---------------------------------------------------------------------------

def _fused_block_kernel(x_ref, w1_ref, b1_ref, w2_ref, b2_ref, wsc_ref, bsc_ref,
                        masks_ref, *rest, W, downsample):
    """Refs (channel dims padded to multiples of 8; L = Nb*H*W, Lo = Nb*Ho*Wo):

      x_ref    : (cin_p, L)         input group, dot dtype (bf16/f32), samples lane-concat
      w1_ref   : (9, hch_p, cin_p)  c1 weights, tap-major (t = ky*3 + kx), dot dtype
      b1_ref   : (hch_p, 1)         f32
      w2_ref   : (9, cout_p, hch_p) c2 weights, dot dtype
      b2_ref   : (cout_p, 1)        f32
      wsc_ref  : (cout_p, cin_p)    1x1 shortcut weights, dot dtype
      bsc_ref  : (cout_p, 1)        f32
      masks_ref: (9, L)             f32 0/1 masks = conv zero padding + sample isolation
      pool_ref : (L, Lo)            0/0.25 avg-pool matrix, dot dtype   (downsample only)
      o_ref    : (cout_p, Lo)       output group (lane-dense)
    """
    if downsample:
        pool_ref, o_ref = rest
    else:
        (o_ref,) = rest

    f32 = jnp.float32
    L = x_ref.shape[1]

    xd = x_ref[...]                                  # dot dtype straight from DMA
    xf = xd.astype(f32)

    # ---- shortcut branch: 1x1 conv == (cout_p, cin_p) @ (cin_p, L) ----------
    sc = jnp.dot(wsc_ref[...], xd, preferred_element_type=f32) + bsc_ref[...]

    # ---- 3x3 "same" conv: 9 rolled taps + masks, 9 accumulating MXU dots ----
    # act stays f32 for element-wise work (v5e VPU has no bf16); cast only at the
    # matmul input.  Rolls run on the XLU slot; masks on the VPU; no VMEM scratch.
    def conv3x3(act, w_ref, b_ref):
        o_p = w_ref.shape[1]
        acc = jnp.zeros((o_p, L), f32)
        for ky in range(3):
            for kx in range(3):
                t = ky * 3 + kx
                off = (ky - 1) * W + (kx - 1)        # flat tap offset
                if off == 0:
                    tap = act                        # center tap: no roll, no mask
                else:
                    tap = pltpu.roll(act, shift=(-off) % L, axis=1)
                    tap = tap * masks_ref[t:t + 1, :]   # zero padding / sample isolation
                acc = acc + jnp.dot(w_ref[t], tap.astype(w_ref.dtype),
                                    preferred_element_type=f32)
        return acc + b_ref[...]

    h = conv3x3(jnp.maximum(xf, 0.0), w1_ref, b1_ref)             # (hch_p, L)
    h = conv3x3(jnp.maximum(h, 0.0), w2_ref, b2_ref)              # (cout_p, L)

    s = sc + h                                                    # (cout_p, L) f32
    if downsample:
        # 2x2 average pool == one matmul with a constant 0/0.25 matrix (dot dtype).
        # TODO(synk): band-local pooling once the H row-band grid axis exists.
        s = jnp.dot(s.astype(pool_ref.dtype), pool_ref[...],
                    preferred_element_type=f32)                   # (cout_p, Lo)
    o_ref[...] = s.astype(o_ref.dtype)


# ---------------------------------------------------------------------------
# Wrapper: NCHW in / NCHW out, matching the PyTorch module.
# ---------------------------------------------------------------------------

@functools.partial(jax.jit, static_argnames=("downsample", "dot_dtype"))
def block_no_sn_forward(x_nchw, params, *, downsample, dot_dtype=jnp.bfloat16):
    N, cin, H, W = x_nchw.shape
    if downsample:
        assert H % 2 == 0 and W % 2 == 0
    f32 = jnp.float32

    w1, b1 = params["w1"], params["b1"]         # (h_ch, cin, 3, 3), (h_ch,)
    w2, b2 = params["w2"], params["b2"]         # (cout, h_ch, 3, 3), (cout,)
    hch, cout = w1.shape[0], w2.shape[0]
    if "wsc" in params:                         # learnable 1x1 shortcut
        wsc, bsc = params["wsc"], params["bsc"]
    else:                                       # identity shortcut (in_ch == out_ch, no pool)
        wsc = jnp.eye(cout, cin, dtype=f32).reshape(cout, cin, 1, 1)
        bsc = jnp.zeros((cout,), f32)

    HW = H * W
    Ho, Wo = (H // 2, W // 2) if downsample else (H, W)
    HWo = Ho * Wo

    # --- group Nb samples per grid step so the output block is lane-dense ----
    # Pick the SMALLEST divisor of N with Nb*HWo >= 128: lane-dense out blocks while
    # keeping the grid as long as possible (pipeline depth; even length helps v7x's
    # two TensorCores).
    Nb = N
    for cand in range(1, N + 1):
        if N % cand == 0 and cand * HWo >= 128:
            Nb = cand
            break
    G = N // Nb
    L, Lo = Nb * HW, Nb * HWo

    # channel dims padded to sublane multiples of 8
    cin_p, hch_p, cout_p = (_round_up(c, 8) for c in (cin, hch, cout))

    def conv_w9(w, o, o_p, i, i_p):             # OIHW -> (9, o_p, i_p), tap-major
        w = jnp.transpose(w, (2, 3, 0, 1)).reshape(9, o, i)
        w = jnp.pad(w, ((0, 0), (0, o_p - o), (0, i_p - i)))
        return w.astype(dot_dtype)

    def col_b(b, o, o_p):
        return jnp.pad(b, (0, o_p - o)).reshape(o_p, 1).astype(f32)

    w1_m = conv_w9(w1, hch, hch_p, cin, cin_p)
    w2_m = conv_w9(w2, cout, cout_p, hch, hch_p)
    wsc_m = jnp.pad(wsc.reshape(cout, cin),
                    ((0, cout_p - cout), (0, cin_p - cin))).astype(dot_dtype)
    b1_c, b2_c, bsc_c = col_b(b1, hch, hch_p), col_b(b2, cout, cout_p), col_b(bsc, cout, cout_p)

    # input: NCHW -> (G, cin_p, Nb*HW): samples of a group concatenated along lanes,
    # already in dot_dtype (halves the per-step HBM->VMEM DMA for bf16).
    x_g = x_nchw.reshape(G, Nb, cin, HW).transpose(0, 2, 1, 3).reshape(G, cin, L)
    x_g = jnp.pad(x_g, ((0, 0), (0, cin_p - cin), (0, 0))).astype(dot_dtype)

    # 0/1 masks per tap (t = ky*3 + kx): they implement the conv zero padding AND kill
    # cross-sample bleed of the lane-axis rolls (mask depends only on within-sample
    # (row, col), so it tiles across the Nb samples).
    pos = jnp.arange(L, dtype=jnp.int32)
    p = pos % HW
    row, col = p // W, p % W
    ones = jnp.ones((L,), jnp.bool_)
    row_ok = [row >= 1, ones, row <= H - 2]
    col_ok = [col >= 1, ones, col <= W - 2]
    masks = jnp.stack([(row_ok[ky] & col_ok[kx]).astype(f32)
                       for ky in range(3) for kx in range(3)], axis=0)    # (9, L)

    full = lambda shape: pl.BlockSpec(shape, lambda g, _s=len(None and []) if False else None,
                                      _n=len(shape): (0,) * _n)
    # (simpler, explicit form below — keep a plain helper)
    def full(shape):
        n = len(shape)
        return pl.BlockSpec(shape, lambda g, n=n: (0,) * n)

    in_specs = [
        pl.BlockSpec((None, cin_p, L), lambda g: (g, 0, 0)),              # per-group x
        full((9, hch_p, cin_p)), full((hch_p, 1)),
        full((9, cout_p, hch_p)), full((cout_p, 1)),
        full((cout_p, cin_p)), full((cout_p, 1)),
        full((9, L)),
    ]
    inputs = [x_g, w1_m, b1_c, w2_m, b2_c, wsc_m, bsc_c, masks]

    if downsample:
        # constant 2x2 average-pool matrix for the grouped layout: (L, Lo), 0 / 0.25
        q = (row // 2) * Wo + (col // 2) + (pos // HW) * HWo
        pool = (q[:, None] == jnp.arange(Lo, dtype=jnp.int32)[None, :]).astype(dot_dtype)
        pool = pool * jnp.asarray(0.25, dot_dtype)
        in_specs.append(full((L, Lo)))
        inputs.append(pool)

    # VMEM budget: double-buffered per-step I/O + constants + live f32 temporaries,
    # with headroom, capped at v7x's 64 MiB physical VMEM.
    dsz = jnp.dtype(dot_dtype).itemsize
    osz = jnp.dtype(x_nchw.dtype).itemsize
    cmax = max(cin_p, hch_p, cout_p)
    const_bytes = (w1_m.size + w2_m.size + wsc_m.size) * dsz \
                  + (b1_c.size + b2_c.size + bsc_c.size + masks.size) * 4 \
                  + (inputs[-1].size * dsz if downsample else 0)
    io_bytes = 2 * (cin_p * L * dsz + cout_p * Lo * osz)
    tmp_bytes = 12 * cmax * L * 4
    vmem_limit = int(min(64 << 20, max(32 << 20, 2 * (const_bytes + io_bytes + tmp_bytes))))

    kernel = functools.partial(_fused_block_kernel, W=W, downsample=downsample)

    out = pl.pallas_call(
        kernel,
        out_shape=jax.ShapeDtypeStruct((G, cout_p, Lo), x_nchw.dtype),
        grid_spec=pltpu.PrefetchScalarGridSpec(
            num_scalar_prefetch=0,
            grid=(G,),
            in_specs=in_specs,
            out_specs=pl.BlockSpec((None, cout_p, Lo), lambda g: (g, 0, 0)),
        ),
        compiler_params=pltpu.CompilerParams(
            dimension_semantics=("parallel",),
            vmem_limit_bytes=vmem_limit,
        ),
    )(*inputs)

    out = out[:, :cout, :]                                        # drop channel padding
    out = out.reshape(G, cout, Nb, HWo).transpose(0, 2, 1, 3)     # ungroup samples
    return out.reshape(N, cout, Ho, Wo)


# ---------------------------------------------------------------------------
# Deterministic parameter init (mirrors the PyTorch _initialize / Conv2d defaults)
# ---------------------------------------------------------------------------

def _xavier_uniform(key, o, i, kh, kw, gain):
    fan_in, fan_out = i * kh * kw, o * kh * kw
    bound = gain * math.sqrt(6.0 / (fan_in + fan_out))
    return jax.random.uniform(key, (o, i, kh, kw), jnp.float32, -bound, bound)


def _bias_uniform(key, o, i, kh, kw):
    bound = 1.0 / math.sqrt(i * kh * kw)
    return jax.random.uniform(key, (o,), jnp.float32, -bound, bound)


def init_params(key, in_ch, out_ch, h_ch=None):
    # NOTE: mirrors the PyTorch module exactly — a user-supplied h_ch is replaced by
    # out_ch (that is literally what BlockNoSN.__init__ does); only h_ch=None -> in_ch.
    h_ch = in_ch if h_ch is None else out_ch
    k1, k2, k3, kb1, kb2, kb3 = jax.random.split(key, 6)
    return {
        "w1": _xavier_uniform(k1, h_ch, in_ch, 3, 3, math.sqrt(2.0)),
        "b1": _bias_uniform(kb1, h_ch, in_ch, 3, 3),
        "w2": _xavier_uniform(k2, out_ch, h_ch, 3, 3, math.sqrt(2.0)),
        "b2": _bias_uniform(kb2, out_ch, h_ch, 3, 3),
        "wsc": _xavier_uniform(k3, out_ch, in_ch, 1, 1, 1.0),
        "bsc": _bias_uniform(kb3, out_ch, in_ch, 1, 1),
    }


# ---------------------------------------------------------------------------
# Pure-JAX reference (for correctness check)
# ---------------------------------------------------------------------------

def reference_forward(x, params, *, downsample):
    def conv(v, w, b, pad):
        y = lax.conv_general_dilated(v, w, (1, 1), ((pad, pad), (pad, pad)),
                                     dimension_numbers=("NCHW", "OIHW", "NCHW"))
        return y + b.reshape(1, -1, 1, 1)

    h = conv(jnp.maximum(x, 0.0), params["w1"], params["b1"], 1)
    h = conv(jnp.maximum(h, 0.0), params["w2"], params["b2"], 1)
    sc = conv(x, params["wsc"], params["bsc"], 0)
    s = sc + h
    if downsample:
        N, C, H, W = s.shape
        s = s.reshape(N, C, H // 2, 2, W // 2, 2).mean(axis=(3, 5))
    return s


# ---------------------------------------------------------------------------

if __name__ == "__main__":
    in_ch, out_ch = 4, 8            # in_ch != out_ch -> learnable 1x1 shortcut
    downsample = True
    N, H, W = 2, 16, 16

    key = jax.random.PRNGKey(0)
    kx, kp = jax.random.split(key)
    x = jax.random.normal(kx, (N, in_ch, H, W), jnp.float32)
    params = init_params(kp, in_ch, out_ch)

    # f32-matmul path: checked tightly against the pure-JAX reference.
    out = block_no_sn_forward(x, params, downsample=downsample, dot_dtype=jnp.float32)
    out = jax.block_until_ready(out)
    assert out.shape == (N, out_ch, H // 2, W // 2), out.shape

    ref = reference_forward(x, params, downsample=downsample)
    if not jnp.allclose(out, ref, atol=5e-4, rtol=5e-4):
        raise AssertionError(
            f"f32 mismatch vs reference, max abs diff = {jnp.max(jnp.abs(out - ref))}")

    # bf16-matmul / f32-accumulate path (production default on v5e/v6e/v7x).
    out_bf16 = jax.block_until_ready(
        block_no_sn_forward(x, params, downsample=downsample, dot_dtype=jnp.bfloat16))
    if not jnp.allclose(out_bf16, out, atol=1e-1, rtol=1e-1):
        raise AssertionError(
            f"bf16 mismatch, max abs diff = {jnp.max(jnp.abs(out_bf16 - out))}")

    print("KERNEL_OK")
</pallas_src>

<mosaic_0001>
module attributes {stable_mosaic.version = 11 : i64} {
  func.func @_fused_block_kernel(%arg0: i32, %arg1: memref<1x8x512xf32, #tpu.memory_space<vmem>>, %arg2: memref<9x8x8xf32, #tpu.memory_space<vmem>>, %arg3: memref<8x1xf32, #tpu.memory_space<vmem>>, %arg4: memref<9x8x8xf32, #tpu.memory_space<vmem>>, %arg5: memref<8x1xf32, #tpu.memory_space<vmem>>, %arg6: memref<8x8xf32, #tpu.memory_space<vmem>>, %arg7: memref<8x1xf32, #tpu.memory_space<vmem>>, %arg8: memref<9x512xf32, #tpu.memory_space<vmem>>, %arg9: memref<512x128xf32, #tpu.memory_space<vmem>>, %arg10: memref<1x8x128xf32, #tpu.memory_space<vmem>>) attributes {dimension_semantics = [#tpu.dimension_semantics<parallel>], iteration_bounds = array<i64: 1>, scalar_prefetch = 0 : i64, scratch_operands = 0 : i64, tpu.core_type = #tpu.core_type<tc>, window_params = [{transform_indices = @transform_0, window_bounds = array<i64: 1, 8, 512>}, {pipeline_mode = #tpu.pipeline_mode<synchronous>, transform_indices = @transform_1, window_bounds = array<i64: 9, 8, 8>}, {pipeline_mode = #tpu.pipeline_mode<synchronous>, transform_indices = @transform_2, window_bounds = array<i64: 8, 1>}, {pipeline_mode = #tpu.pipeline_mode<synchronous>, transform_indices = @transform_3, window_bounds = array<i64: 9, 8, 8>}, {pipeline_mode = #tpu.pipeline_mode<synchronous>, transform_indices = @transform_4, window_bounds = array<i64: 8, 1>}, {pipeline_mode = #tpu.pipeline_mode<synchronous>, transform_indices = @transform_5, window_bounds = array<i64: 8, 8>}, {pipeline_mode = #tpu.pipeline_mode<synchronous>, transform_indices = @transform_6, window_bounds = array<i64: 8, 1>}, {pipeline_mode = #tpu.pipeline_mode<synchronous>, transform_indices = @transform_7, window_bounds = array<i64: 9, 512>}, {pipeline_mode = #tpu.pipeline_mode<synchronous>, transform_indices = @transform_8, window_bounds = array<i64: 512, 128>}, {transform_indices = @transform_9, window_bounds = array<i64: 1, 8, 128>}]} {
    %c0 = arith.constant 0 : index
    %c0_0 = arith.constant 0 : index
    %c0_1 = arith.constant 0 : index
    %0 = vector.load %arg1[%c0, %c0_0, %c0_1] : memref<1x8x512xf32, #tpu.memory_space<vmem>>, vector<1x8x512xf32>
    %1 = vector.shape_cast %0 : vector<1x8x512xf32> to vector<8x512xf32>
    %c0_2 = arith.constant 0 : index
    %c0_3 = arith.constant 0 : index
    %2 = vector.load %arg6[%c0_2, %c0_3] : memref<8x8xf32, #tpu.memory_space<vmem>>, vector<8x8xf32>
    %cst = arith.constant dense<0.000000e+00> : vector<8x512xf32>
    %3 = tpu.matmul %2, %1, %cst {dimension_numbers = #tpu.dot_dimension_numbers<[1], [0], [0], [1], [0, 0, 1, 1], [], []>} : vector<8x8xf32>, vector<8x512xf32>, vector<8x512xf32> -> vector<8x512xf32>
    %c0_4 = arith.constant 0 : index
    %c0_5 = arith.constant 0 : index
    %4 = vector.load %arg7[%c0_4, %c0_5] : memref<8x1xf32, #tpu.memory_space<vmem>>, vector<8x1xf32>
    %5 = vector.broadcast %4 : vector<8x1xf32> to vector<8x512xf32>
    %6 = arith.addf %3, %5 : vector<8x512xf32>
    %cst_6 = arith.constant 0.000000e+00 : f32
    %7 = vector.broadcast %cst_6 : f32 to vector<8x512xf32>
    %8 = arith.maximumf %1, %7 : vector<8x512xf32>
    %cst_7 = arith.constant 0.000000e+00 : f32
    %9 = vector.broadcast %cst_7 : f32 to vector<8x512xf32>
    %c17_i32 = arith.constant 17 : i32
    %10 = tpu.dynamic_rotate %8 by %c17_i32 dim 1 : vector<8x512xf32>, i32 -> vector<8x512xf32>
    %c0_8 = arith.constant 0 : index
    %c0_9 = arith.constant 0 : index
    %11 = vector.load %arg8[%c0_8, %c0_9] : memref<9x512xf32, #tpu.memory_space<vmem>>, vector<1x512xf32>
    %12 = vector.broadcast %11 : vector<1x512xf32> to vector<8x512xf32>
    %13 = arith.mulf %10, %12 : vector<8x512xf32>
    %c0_10 = arith.constant 0 : index
    %c0_11 = arith.constant 0 : index
    %c0_12 = arith.constant 0 : index
    %14 = vector.load %arg2[%c0_10, %c0_11, %c0_12] : memref<9x8x8xf32, #tpu.memory_space<vmem>>, vector<1x8x8xf32>
    %15 = vector.shape_cast %14 : vector<1x8x8xf32> to vector<8x8xf32>
    %cst_13 = arith.constant dense<0.000000e+00> : vector<8x512xf32>
    %16 = tpu.matmul %15, %13, %cst_13 {dimension_numbers = #tpu.dot_dimension_numbers<[1], [0], [0], [1], [0, 0, 1, 1], [], []>} : vector<8x8xf32>, vector<8x512xf32>, vector<8x512xf32> -> vector<8x512xf32>
    %17 = arith.addf %9, %16 : vector<8x512xf32>
    %c16_i32 = arith.constant 16 : i32
    %18 = tpu.dynamic_rotate %8 by %c16_i32 dim 1 : vector<8x512xf32>, i32 -> vector<8x512xf32>
    %c1 = arith.constant 1 : index
    %c0_14 = arith.constant 0 : index
    %19 = vector.load %arg8[%c1, %c0_14] : memref<9x512xf32, #tpu.memory_space<vmem>>, vector<1x512xf32>
    %20 = vector.broadcast %19 : vector<1x512xf32> to vector<8x512xf32>
    %21 = arith.mulf %18, %20 : vector<8x512xf32>
    %c1_15 = arith.constant 1 : index
    %c0_16 = arith.constant 0 : index
    %c0_17 = arith.constant 0 : index
    %22 = vector.load %arg2[%c1_15, %c0_16, %c0_17] : memref<9x8x8xf32, #tpu.memory_space<vmem>>, vector<1x8x8xf32>
    %23 = vector.shape_cast %22 : vector<1x8x8xf32> to vector<8x8xf32>
    %cst_18 = arith.constant dense<0.000000e+00> : vector<8x512xf32>
    %24 = tpu.matmul %23, %21, %cst_18 {dimension_numbers = #tpu.dot_dimension_numbers<[1], [0], [0], [1], [0, 0, 1, 1], [], []>} : vector<8x8xf32>, vector<8x512xf32>, vector<8x512xf32> -> vector<8x512xf32>
    %25 = arith.addf %17, %24 : vector<8x512xf32>
    %c15_i32 = arith.constant 15 : i32
    %26 = tpu.dynamic_rotate %8 by %c15_i32 dim 1 : vector<8x512xf32>, i32 -> vector<8x512xf32>
    %c2 = arith.constant 2 : index
    %c0_19 = arith.constant 0 : index
    %27 = vector.load %arg8[%c2, %c0_19] : memref<9x512xf32, #tpu.memory_space<vmem>>, vector<1x512xf32>
    %28 = vector.broadcast %27 : vector<1x512xf32> to vector<8x512xf32>
    %29 = arith.mulf %26, %28 : vector<8x512xf32>
    %c2_20 = arith.constant 2 : index
    %c0_21 = arith.constant 0 : index
    %c0_22 = arith.constant 0 : index
    %30 = vector.load %arg2[%c2_20, %c0_21, %c0_22] : memref<9x8x8xf32, #tpu.memory_space<vmem>>, vector<1x8x8xf32>
    %31 = vector.shape_cast %30 : vector<1x8x8xf32> to vector<8x8xf32>
    %cst_23 = arith.constant dense<0.000000e+00> : vector<8x512xf32>
    %32 = tpu.matmul %31, %29, %cst_23 {dimension_numbers = #tpu.dot_dimension_numbers<[1], [0], [0], [1], [0, 0, 1, 1], [], []>} : vector<8x8xf32>, vector<8x512xf32>, vector<8x512xf32> -> vector<8x512xf32>
    %33 = arith.addf %25, %32 : vector<8x512xf32>
    %c1_i32 = arith.constant 1 : i32
    %34 = tpu.dynamic_rotate %8 by %c1_i32 dim 1 : vector<8x512xf32>, i32 -> vector<8x512xf32>
    %c3 = arith.constant 3 : index
    %c0_24 = arith.constant 0 : index
    %35 = vector.load %arg8[%c3, %c0_24] : memref<9x512xf32, #tpu.memory_space<vmem>>, vector<1x512xf32>
    %36 = vector.broadcast %35 : vector<1x512xf32> to vector<8x512xf32>
    %37 = arith.mulf %34, %36 : vector<8x512xf32>
    %c3_25 = arith.constant 3 : index
    %c0_26 = arith.constant 0 : index
    %c0_27 = arith.constant 0 : index
    %38 = vector.load %arg2[%c3_25, %c0_26, %c0_27] : memref<9x8x8xf32, #tpu.memory_space<vmem>>, vector<1x8x8xf32>
    %39 = vector.shape_cast %38 : vector<1x8x8xf32> to vector<8x8xf32>
    %cst_28 = arith.constant dense<0.000000e+00> : vector<8x512xf32>
    %40 = tpu.matmul %39, %37, %cst_28 {dimension_numbers = #tpu.dot_dimension_numbers<[1], [0], [0], [1], [0, 0, 1, 1], [], []>} : vector<8x8xf32>, vector<8x512xf32>, vector<8x512xf32> -> vector<8x512xf32>
    %41 = arith.addf %33, %40 : vector<8x512xf32>
    %c4 = arith.constant 4 : index
    %c0_29 = arith.constant 0 : index
    %c0_30 = arith.constant 0 : index
    %42 = vector.load %arg2[%c4, %c0_29, %c0_30] : memref<9x8x8xf32, #tpu.memory_space<vmem>>, vector<1x8x8xf32>
    %43 = vector.shape_cast %42 : vector<1x8x8xf32> to vector<8x8xf32>
    %cst_31 = arith.constant dense<0.000000e+00> : vector<8x512xf32>
    %44 = tpu.matmul %43, %8, %cst_31 {dimension_numbers = #tpu.dot_dimension_numbers<[1], [0], [0], [1], [0, 0, 1, 1], [], []>} : vector<8x8xf32>, vector<8x512xf32>, vector<8x512xf32> -> vector<8x512xf32>
    %45 = arith.addf %41, %44 : vector<8x512xf32>
    %c511_i32 = arith.constant 511 : i32
    %46 = tpu.dynamic_rotate %8 by %c511_i32 dim 1 : vector<8x512xf32>, i32 -> vector<8x512xf32>
    %c5 = arith.constant 5 : index
    %c0_32 = arith.constant 0 : index
    %47 = vector.load %arg8[%c5, %c0_32] : memref<9x512xf32, #tpu.memory_space<vmem>>, vector<1x512xf32>
    %48 = vector.broadcast %47 : vector<1x512xf32> to vector<8x512xf32>
    %49 = arith.mulf %46, %48 : vector<8x512xf32>
    %c5_33 = arith.constant 5 : index
    %c0_34 = arith.constant 0 : index
    %c0_35 = arith.constant 0 : index
    %50 = vector.load %arg2[%c5_33, %c0_34, %c0_35] : memref<9x8x8xf32, #tpu.memory_space<vmem>>, vector<1x8x8xf32>
    %51 = vector.shape_cast %50 : vector<1x8x8xf32> to vector<8x8xf32>
    %cst_36 = arith.constant dense<0.000000e+00> : vector<8x512xf32>
    %52 = tpu.matmul %51, %49, %cst_36 {dimension_numbers = #tpu.dot_dimension_numbers<[1], [0], [0], [1], [0, 0, 1, 1], [], []>} : vector<8x8xf32>, vector<8x512xf32>, vector<8x512xf32> -> vector<8x512xf32>
    %53 = arith.addf %45, %52 : vector<8x512xf32>
    %c497_i32 = arith.constant 497 : i32
    %54 = tpu.dynamic_rotate %8 by %c497_i32 dim 1 : vector<8x512xf32>, i32 -> vector<8x512xf32>
    %c6 = arith.constant 6 : index
    %c0_37 = arith.constant 0 : index
    %55 = vector.load %arg8[%c6, %c0_37] : memref<9x512xf32, #tpu.memory_space<vmem>>, vector<1x512xf32>
    %56 = vector.broadcast %55 : vector<1x512xf32> to vector<8x512xf32>
    %57 = arith.mulf %54, %56 : vector<8x512xf32>
    %c6_38 = arith.constant 6 : index
    %c0_39 = arith.constant 0 : index
    %c0_40 = arith.constant 0 : index
    %58 = vector.load %arg2[%c6_38, %c0_39, %c0_40] : memref<9x8x8xf32, #tpu.memory_space<vmem>>, vector<1x8x8xf32>
    %59 = vector.shape_cast %58 : vector<1x8x8xf32> to vector<8x8xf32>
    %cst_41 = arith.constant dense<0.000000e+00> : vector<8x512xf32>
    %60 = tpu.matmul %59, %57, %cst_41 {dimension_numbers = #tpu.dot_dimension_numbers<[1], [0], [0], [1], [0, 0, 1, 1], [], []>} : vector<8x8xf32>, vector<8x512xf32>, vector<8x512xf32> -> vector<8x512xf32>
    %61 = arith.addf %53, %60 : vector<8x512xf32>
    %c496_i32 = arith.constant 496 : i32
    %62 = tpu.dynamic_rotate %8 by %c496_i32 dim 1 : vector<8x512xf32>, i32 -> vector<8x512xf32>
    %c7 = arith.constant 7 : index
    %c0_42 = arith.constant 0 : index
    %63 = vector.load %arg8[%c7, %c0_42] : memref<9x512xf32, #tpu.memory_space<vmem>>, vector<1x512xf32>
    %64 = vector.broadcast %63 : vector<1x512xf32> to vector<8x512xf32>
    %65 = arith.mulf %62, %64 : vector<8x512xf32>
    %c7_43 = arith.constant 7 : index
    %c0_44 = arith.constant 0 : index
    %c0_45 = arith.constant 0 : index
    %66 = vector.load %arg2[%c7_43, %c0_44, %c0_45] : memref<9x8x8xf32, #tpu.memory_space<vmem>>, vector<1x8x8xf32>
    %67 = vector.shape_cast %66 : vector<1x8x8xf32> to vector<8x8xf32>
    %cst_46 = arith.constant dense<0.000000e+00> : vector<8x512xf32>
    %68 = tpu.matmul %67, %65, %cst_46 {dimension_numbers = #tpu.dot_dimension_numbers<[1], [0], [0], [1], [0, 0, 1, 1], [], []>} : vector<8x8xf32>, vector<8x512xf32>, vector<8x512xf32> -> vector<8x512xf32>
    %69 = arith.addf %61, %68 : vector<8x512xf32>
    %c495_i32 = arith.constant 495 : i32
    %70 = tpu.dynamic_rotate %8 by %c495_i32 dim 1 : vector<8x512xf32>, i32 -> vector<8x512xf32>
    %c8 = arith.constant 8 : index
    %c0_47 = arith.constant 0 : index
    %71 = vector.load %arg8[%c8, %c0_47] : memref<9x512xf32, #tpu.memory_space<vmem>>, vector<1x512xf32>
    %72 = vector.broadcast %71 : vector<1x512xf32> to vector<8x512xf32>
    %73 = arith.mulf %70, %72 : vector<8x512xf32>
    %c8_48 = arith.constant 8 : index
    %c0_49 = arith.constant 0 : index
    %c0_50 = arith.constant 0 : index
    %74 = vector.load %arg2[%c8_48, %c0_49, %c0_50] : memref<9x8x8xf32, #tpu.memory_space<vmem>>, vector<1x8x8xf32>
    %75 = vector.shape_cast %74 : vector<1x8x8xf32> to vector<8x8xf32>
    %cst_51 = arith.constant dense<0.000000e+00> : vector<8x512xf32>
    %76 = tpu.matmul %75, %73, %cst_51 {dimension_numbers = #tpu.dot_dimension_numbers<[1], [0], [0], [1], [0, 0, 1, 1], [], []>} : vector<8x8xf32>, vector<8x512xf32>, vector<8x512xf32> -> vector<8x512xf32>
    %77 = arith.addf %69, %76 : vector<8x512xf32>
    %c0_52 = arith.constant 0 : index
    %c0_53 = arith.constant 0 : index
    %78 = vector.load %arg3[%c0_52, %c0_53] : memref<8x1xf32, #tpu.memory_space<vmem>>, vector<8x1xf32>
    %79 = vector.broadcast %78 : vector<8x1xf32> to vector<8x512xf32>
    %80 = arith.addf %77, %79 : vector<8x512xf32>
    %cst_54 = arith.constant 0.000000e+00 : f32
    %81 = vector.broadcast %cst_54 : f32 to vector<8x512xf32>
    %82 = arith.maximumf %80, %81 : vector<8x512xf32>
    %cst_55 = arith.constant 0.000000e+00 : f32
    %83 = vector.broadcast %cst_55 : f32 to vector<8x512xf32>
    %c17_i32_56 = arith.constant 17 : i32
    %84 = tpu.dynamic_rotate %82 by %c17_i32_56 dim 1 : vector<8x512xf32>, i32 -> vector<8x512xf32>
    %c0_57 = arith.constant 0 : index
    %c0_58 = arith.constant 0 : index
    %85 = vector.load %arg8[%c0_57, %c0_58] : memref<9x512xf32, #tpu.memory_space<vmem>>, vector<1x512xf32>
    %86 = vector.broadcast %85 : vector<1x512xf32> to vector<8x512xf32>
    %87 = arith.mulf %84, %86 : vector<8x512xf32>
    %c0_59 = arith.constant 0 : index
    %c0_60 = arith.constant 0 : index
    %c0_61 = arith.constant 0 : index
    %88 = vector.load %arg4[%c0_59, %c0_60, %c0_61] : memref<9x8x8xf32, #tpu.memory_space<vmem>>, vector<1x8x8xf32>
    %89 = vector.shape_cast %88 : vector<1x8x8xf32> to vector<8x8xf32>
    %cst_62 = arith.constant dense<0.000000e+00> : vector<8x512xf32>
    %90 = tpu.matmul %89, %87, %cst_62 {dimension_numbers = #tpu.dot_dimension_numbers<[1], [0], [0], [1], [0, 0, 1, 1], [], []>} : vector<8x8xf32>, vector<8x512xf32>, vector<8x512xf32> -> vector<8x512xf32>
    %91 = arith.addf %83, %90 : vector<8x512xf32>
    %c16_i32_63 = arith.constant 16 : i32
    %92 = tpu.dynamic_rotate %82 by %c16_i32_63 dim 1 : vector<8x512xf32>, i32 -> vector<8x512xf32>
    %c1_64 = arith.constant 1 : index
    %c0_65 = arith.constant 0 : index
    %93 = vector.load %arg8[%c1_64, %c0_65] : memref<9x512xf32, #tpu.memory_space<vmem>>, vector<1x512xf32>
    %94 = vector.broadcast %93 : vector<1x512xf32> to vector<8x512xf32>
    %95 = arith.mulf %92, %94 : vector<8x512xf32>
    %c1_66 = arith.constant 1 : index
    %c0_67 = arith.constant 0 : index
    %c0_68 = arith.constant 0 : index
    %96 = vector.load %arg4[%c1_66, %c0_67, %c0_68] : memref<9x8x8xf32, #tpu.memory_space<vmem>>, vector<1x8x8xf32>
    %97 = vector.shape_cast %96 : vector<1x8x8xf32> to vector<8x8xf32>
    %cst_69 = arith.constant dense<0.000000e+00> : vector<8x512xf32>
    %98 = tpu.matmul %97, %95, %cst_69 {dimension_numbers = #tpu.dot_dimension_numbers<[1], [0], [0], [1], [0, 0, 1, 1], [], []>} : vector<8x8xf32>, vector<8x512xf32>, vector<8x512xf32> -> vector<8x512xf32>
    %99 = arith.addf %91, %98 : vector<8x512xf32>
    %c15_i32_70 = arith.constant 15 : i32
    %100 = tpu.dynamic_rotate %82 by %c15_i32_70 dim 1 : vector<8x512xf32>, i32 -> vector<8x512xf32>
    %c2_71 = arith.constant 2 : index
    %c0_72 = arith.constant 0 : index
    %101 = vector.load %arg8[%c2_71, %c0_72] : memref<9x512xf32, #tpu.memory_space<vmem>>, vector<1x512xf32>
    %102 = vector.broadcast %101 : vector<1x512xf32> to vector<8x512xf32>
    %103 = arith.mulf %100, %102 : vector<8x512xf32>
    %c2_73 = arith.constant 2 : index
    %c0_74 = arith.constant 0 : index
    %c0_75 = arith.constant 0 : index
    %104 = vector.load %arg4[%c2_73, %c0_74, %c0_75] : memref<9x8x8xf32, #tpu.memory_space<vmem>>, vector<1x8x8xf32>
    %105 = vector.shape_cast %104 : vector<1x8x8xf32> to vector<8x8xf32>
    %cst_76 = arith.constant dense<0.000000e+00> : vector<8x512xf32>
    %106 = tpu.matmul %105, %103, %cst_76 {dimension_numbers = #tpu.dot_dimension_numbers<[1], [0], [0], [1], [0, 0, 1, 1], [], []>} : vector<8x8xf32>, vector<8x512xf32>, vector<8x512xf32> -> vector<8x512xf32>
    %107 = arith.addf %99, %106 : vector<8x512xf32>
    %c1_i32_77 = arith.constant 1 : i32
    %108 = tpu.dynamic_rotate %82 by %c1_i32_77 dim 1 : vector<8x512xf32>, i32 -> vector<8x512xf32>
    %c3_78 = arith.constant 3 : index
    %c0_79 = arith.constant 0 : index
    %109 = vector.load %arg8[%c3_78, %c0_79] : memref<9x512xf32, #tpu.memory_space<vmem>>, vector<1x512xf32>
    %110 = vector.broadcast %109 : vector<1x512xf32> to vector<8x512xf32>
    %111 = arith.mulf %108, %110 : vector<8x512xf32>
    %c3_80 = arith.constant 3 : index
    %c0_81 = arith.constant 0 : index
    %c0_82 = arith.constant 0 : index
    %112 = vector.load %arg4[%c3_80, %c0_81, %c0_82] : memref<9x8x8xf32, #tpu.memory_space<vmem>>, vector<1x8x8xf32>
    %113 = vector.shape_cast %112 : vector<1x8x8xf32> to vector<8x8xf32>
    %cst_83 = arith.constant dense<0.000000e+00> : vector<8x512xf32>
    %114 = tpu.matmul %113, %111, %cst_83 {dimension_numbers = #tpu.dot_dimension_numbers<[1], [0], [0], [1], [0, 0, 1, 1], [], []>} : vector<8x8xf32>, vector<8x512xf32>, vector<8x512xf32> -> vector<8x512xf32>
    %115 = arith.addf %107, %114 : vector<8x512xf32>
    %c4_84 = arith.constant 4 : index
    %c0_85 = arith.constant 0 : index
    %c0_86 = arith.constant 0 : index
    %116 = vector.load %arg4[%c4_84, %c0_85, %c0_86] : memref<9x8x8xf32, #tpu.memory_space<vmem>>, vector<1x8x8xf32>
    %117 = vector.shape_cast %116 : vector<1x8x8xf32> to vector<8x8xf32>
    %cst_87 = arith.constant dense<0.000000e+00> : vector<8x512xf32>
    %118 = tpu.matmul %117, %82, %cst_87 {dimension_numbers = #tpu.dot_dimension_numbers<[1], [0], [0], [1], [0, 0, 1, 1], [], []>} : vector<8x8xf32>, vector<8x512xf32>, vector<8x512xf32> -> vector<8x512xf32>
    %119 = arith.addf %115, %118 : vector<8x512xf32>
    %c511_i32_88 = arith.constant 511 : i32
    %120 = tpu.dynamic_rotate %82 by %c511_i32_88 dim 1 : vector<8x512xf32>, i32 -> vector<8x512xf32>
    %c5_89 = arith.constant 5 : index
    %c0_90 = arith.constant 0 : index
    %121 = vector.load %arg8[%c5_89, %c0_90] : memref<9x512xf32, #tpu.memory_space<vmem>>, vector<1x512xf32>
    %122 = vector.broadcast %121 : vector<1x512xf32> to vector<8x512xf32>
    %123 = arith.mulf %120, %122 : vector<8x512xf32>
    %c5_91 = arith.constant 5 : index
    %c0_92 = arith.constant 0 : index
    %c0_93 = arith.constant 0 : index
    %124 = vector.load %arg4[%c5_91, %c0_92, %c0_93] : memref<9x8x8xf32, #tpu.memory_space<vmem>>, vector<1x8x8xf32>
    %125 = vector.shape_cast %124 : vector<1x8x8xf32> to vector<8x8xf32>
    %cst_94 = arith.constant dense<0.000000e+00> : vector<8x512xf32>
    %126 = tpu.matmul %125, %123, %cst_94 {dimension_numbers = #tpu.dot_dimension_numbers<[1], [0], [0], [1], [0, 0, 1, 1], [], []>} : vector<8x8xf32>, vector<8x512xf32>, vector<8x512xf32> -> vector<8x512xf32>
    %127 = arith.addf %119, %126 : vector<8x512xf32>
    %c497_i32_95 = arith.constant 497 : i32
    %128 = tpu.dynamic_rotate %82 by %c497_i32_95 dim 1 : vector<8x512xf32>, i32 -> vector<8x512xf32>
    %c6_96 = arith.constant 6 : index
    %c0_97 = arith.constant 0 : index
    %129 = vector.load %arg8[%c6_96, %c0_97] : memref<9x512xf32, #tpu.memory_space<vmem>>, vector<1x512xf32>
    %130 = vector.broadcast %129 : vector<1x512xf32> to vector<8x512xf32>
    %131 = arith.mulf %128, %130 : vector<8x512xf32>
    %c6_98 = arith.constant 6 : index
    %c0_99 = arith.constant 0 : index
    %c0_100 = arith.constant 0 : index
    %132 = vector.load %arg4[%c6_98, %c0_99, %c0_100] : memref<9x8x8xf32, #tpu.memory_space<vmem>>, vector<1x8x8xf32>
    %133 = vector.shape_cast %132 : vector<1x8x8xf32> to vector<8x8xf32>
    %cst_101 = arith.constant dense<0.000000e+00> : vector<8x512xf32>
    %134 = tpu.matmul %133, %131, %cst_101 {dimension_numbers = #tpu.dot_dimension_numbers<[1], [0], [0], [1], [0, 0, 1, 1], [], []>} : vector<8x8xf32>, vector<8x512xf32>, vector<8x512xf32> -> vector<8x512xf32>
    %135 = arith.addf %127, %134 : vector<8x512xf32>
    %c496_i32_102 = arith.constant 496 : i32
    %136 = tpu.dynamic_rotate %82 by %c496_i32_102 dim 1 : vector<8x512xf32>, i32 -> vector<8x512xf32>
    %c7_103 = arith.constant 7 : index
    %c0_104 = arith.constant 0 : index
    %137 = vector.load %arg8[%c7_103, %c0_104] : memref<9x512xf32, #tpu.memory_space<vmem>>, vector<1x512xf32>
    %138 = vector.broadcast %137 : vector<1x512xf32> to vector<8x512xf32>
    %139 = arith.mulf %136, %138 : vector<8x512xf32>
    %c7_105 = arith.constant 7 : index
    %c0_106 = arith.constant 0 : index
    %c0_107 = arith.constant 0 : index
    %140 = vector.load %arg4[%c7_105, %c0_106, %c0_107] : memref<9x8x8xf32, #tpu.memory_space<vmem>>, vector<1x8x8xf32>
    %141 = vector.shape_cast %140 : vector<1x8x8xf32> to vector<8x8xf32>
    %cst_108 = arith.constant dense<0.000000e+00> : vector<8x512xf32>
    %142 = tpu.matmul %141, %139, %cst_108 {dimension_numbers = #tpu.dot_dimension_numbers<[1], [0], [0], [1], [0, 0, 1, 1], [], []>} : vector<8x8xf32>, vector<8x512xf32>, vector<8x512xf32> -> vector<8x512xf32>
    %143 = arith.addf %135, %142 : vector<8x512xf32>
    %c495_i32_109 = arith.constant 495 : i32
    %144 = tpu.dynamic_rotate %82 by %c495_i32_109 dim 1 : vector<8x512xf32>, i32 -> vector<8x512xf32>
    %c8_110 = arith.constant 8 : index
    %c0_111 = arith.constant 0 : index
    %145 = vector.load %arg8[%c8_110, %c0_111] : memref<9x512xf32, #tpu.memory_space<vmem>>, vector<1x512xf32>
    %146 = vector.broadcast %145 : vector<1x512xf32> to vector<8x512xf32>
    %147 = arith.mulf %144, %146 : vector<8x512xf32>
    %c8_112 = arith.constant 8 : index
    %c0_113 = arith.constant 0 : index
    %c0_114 = arith.constant 0 : index
    %148 = vector.load %arg4[%c8_112, %c0_113, %c0_114] : memref<9x8x8xf32, #tpu.memory_space<vmem>>, vector<1x8x8xf32>
    %149 = vector.shape_cast %148 : vector<1x8x8xf32> to vector<8x8xf32>
    %cst_115 = arith.constant dense<0.000000e+00> : vector<8x512xf32>
    %150 = tpu.matmul %149, %147, %cst_115 {dimension_numbers = #tpu.dot_dimension_numbers<[1], [0], [0], [1], [0, 0, 1, 1], [], []>} : vector<8x8xf32>, vector<8x512xf32>, vector<8x512xf32> -> vector<8x512xf32>
    %151 = arith.addf %143, %150 : vector<8x512xf32>
    %c0_116 = arith.constant 0 : index
    %c0_117 = arith.constant 0 : index
    %152 = vector.load %arg5[%c0_116, %c0_117] : memref<8x1xf32, #tpu.memory_space<vmem>>, vector<8x1xf32>
    %153 = vector.broadcast %152 : vector<8x1xf32> to vector<8x512xf32>
    %154 = arith.addf %151, %153 : vector<8x512xf32>
    %155 = arith.addf %6, %154 : vector<8x512xf32>
    %c0_118 = arith.constant 0 : index
    %c0_119 = arith.constant 0 : index
    %156 = vector.load %arg9[%c0_118, %c0_119] : memref<512x128xf32, #tpu.memory_space<vmem>>, vector<512x128xf32>
    %cst_120 = arith.constant dense<0.000000e+00> : vector<8x128xf32>
    %157 = tpu.matmul %155, %156, %cst_120 {dimension_numbers = #tpu.dot_dimension_numbers<[1], [0], [0], [1], [0, 0, 1, 1], [], []>} : vector<8x512xf32>, vector<512x128xf32>, vector<8x128xf32> -> vector<8x128xf32>
    %c0_121 = arith.constant 0 : index
    %c0_122 = arith.constant 0 : index
    %c0_123 = arith.constant 0 : index
    %158 = vector.load %arg10[%c0_121, %c0_122, %c0_123] : memref<1x8x128xf32, #tpu.memory_space<vmem>>, vector<1x8x128xf32>
    %159 = vector.shape_cast %158 : vector<1x8x128xf32> to vector<8x128xf32>
    %160 = vector.shape_cast %157 : vector<8x128xf32> to vector<1x8x128xf32>
    tpu.vector_store %arg10[%c0_121, %c0_122, %c0_123], %160 {strides = array<i32>} : memref<1x8x128xf32, #tpu.memory_space<vmem>>, vector<1x8x128xf32>,
    return
  }
  func.func @transform_0(%arg0: i32) -> (i32, i32, i32) {
    %c0_i32 = arith.constant 0 : i32
    %c0_i32_0 = arith.constant 0 : i32
    %c0_i32_1 = arith.constant 0 : i32
    return %arg0, %c0_i32, %c0_i32_0 : i32, i32, i32
  }
  func.func @transform_1(%arg0: i32) -> (i32, i32, i32) {
    %c0_i32 = arith.constant 0 : i32
    %c0_i32_0 = arith.constant 0 : i32
    %c0_i32_1 = arith.constant 0 : i32
    %c0_i32_2 = arith.constant 0 : i32
    return %c0_i32, %c0_i32_0, %c0_i32_1 : i32, i32, i32
  }
  func.func @transform_2(%arg0: i32) -> (i32, i32) {
    %c0_i32 = arith.constant 0 : i32
    %c0_i32_0 = arith.constant 0 : i32
    %c0_i32_1 = arith.constant 0 : i32
    return %c0_i32, %c0_i32_0 : i32, i32
  }
  func.func @transform_3(%arg0: i32) -> (i32, i32, i32) {
    %c0_i32 = arith.constant 0 : i32
    %c0_i32_0 = arith.constant 0 : i32
    %c0_i32_1 = arith.constant 0 : i32
    %c0_i32_2 = arith.constant 0 : i32
    return %c0_i32, %c0_i32_0, %c0_i32_1 : i32, i32, i32
  }
  func.func @transform_4(%arg0: i32) -> (i32, i32) {
    %c0_i32 = arith.constant 0 : i32
    %c0_i32_0 = arith.constant 0 : i32
    %c0_i32_1 = arith.constant 0 : i32
    return %c0_i32, %c0_i32_0 : i32, i32
  }
  func.func @transform_5(%arg0: i32) -> (i32, i32) {
    %c0_i32 = arith.constant 0 : i32
    %c0_i32_0 = arith.constant 0 : i32
    %c0_i32_1 = arith.constant 0 : i32
    return %c0_i32, %c0_i32_0 : i32, i32
  }
  func.func @transform_6(%arg0: i32) -> (i32, i32) {
    %c0_i32 = arith.constant 0 : i32
    %c0_i32_0 = arith.constant 0 : i32
    %c0_i32_1 = arith.constant 0 : i32
    return %c0_i32, %c0_i32_0 : i32, i32
  }
  func.func @transform_7(%arg0: i32) -> (i32, i32) {
    %c0_i32 = arith.constant 0 : i32
    %c0_i32_0 = arith.constant 0 : i32
    %c0_i32_1 = arith.constant 0 : i32
    return %c0_i32, %c0_i32_0 : i32, i32
  }
  func.func @transform_8(%arg0: i32) -> (i32, i32) {
    %c0_i32 = arith.constant 0 : i32
    %c0_i32_0 = arith.constant 0 : i32
    %c0_i32_1 = arith.constant 0 : i32
    return %c0_i32, %c0_i32_0 : i32, i32
  }
  func.func @transform_9(%arg0: i32) -> (i32, i32, i32) {
    %c0_i32 = arith.constant 0 : i32
    %c0_i32_0 = arith.constant 0 : i32
    %c0_i32_1 = arith.constant 0 : i32
    return %arg0, %c0_i32, %c0_i32_0 : i32, i32, i32
  }
}

</mosaic_0001>

<llo_original>
// kernel: block_no_sn_forward.1
$region0: #{block_no_sn_forward.1}
  #allocation0 [shape = 'u32[]', space=smem, size = 0x4, offset = 0x4, fixed_abs, tag = 'smem constant byte address 0x4 - core index']
  #allocation1 [shape = 'u32[144,128]{1,0:T(1,128)}', space=vmem, size = 0x12000, scoped, tag = 'internal scratch']
  %s0 = inlined_call_operand.vmem [shape: f32[1,8,512], index: 0, kind: input, shape index: {}]
  %s1 = inlined_call_operand.vmem [shape: f32[9,8,8], index: 1, kind: input, shape index: {}]
  %s2 = inlined_call_operand.vmem [shape: f32[8,1], index: 2, kind: input, shape index: {}]
  %s3 = inlined_call_operand.vmem [shape: f32[9,8,8], index: 3, kind: input, shape index: {}]
  %s4 = inlined_call_operand.vmem [shape: f32[8,1], index: 4, kind: input, shape index: {}]
  %s5 = inlined_call_operand.vmem [shape: f32[8,8], index: 5, kind: input, shape index: {}]
  %s6 = inlined_call_operand.vmem [shape: f32[8,1], index: 6, kind: input, shape index: {}]
  %s7 = inlined_call_operand.vmem [shape: f32[9,512], index: 7, kind: input, shape index: {}]
  %s8 = inlined_call_operand.vmem [shape: f32[512,128], index: 8, kind: input, shape index: {}]
  %s9 = inlined_call_operand.vmem [shape: f32[1,8,128], index: 9, kind: output, shape index: {}]
  %s10 = sld [smem:[#allocation0]]
  $region46: #{block_no_sn_forward.1} parent=0
    _
  %s12 = ssub.s32 1, %s10
  %s13 = scalar_select 0, %s12, %s10
  // Predicated region
  $region2: #{block_no_sn_forward.1} parent=0 // pred_check
    _
  $region3: #{block_no_sn_forward.1} parent=0 // pred_check_branch
    %15 = sbr.rel (0) target = $region5
  $region4: #{block_no_sn_forward.1} parent=0 // pred_region
    _
  $region5: #{block_no_sn_forward.1} parent=0 // pred_fallthru
    _
  // Predicated region
  $region6: #{block_no_sn_forward.1} parent=0 // pred_check
    _
  $region7: #{block_no_sn_forward.1} parent=0 // pred_check_branch
    %17 = sbr.rel (0) target = $region9
  $region8: #{block_no_sn_forward.1} parent=0 // pred_region
    _
  $region9: #{block_no_sn_forward.1} parent=0 // pred_fallthru
    _
  // Predicated region
  $region10: #{block_no_sn_forward.1} parent=0 // pred_check
    _
  $region11: #{block_no_sn_forward.1} parent=0 // pred_check_branch
    %19 = sbr.rel (0) target = $region13
  $region12: #{block_no_sn_forward.1} parent=0 // pred_region
    _
  $region13: #{block_no_sn_forward.1} parent=0 // pred_fallthru
    _
  // Predicated region
  $region14: #{block_no_sn_forward.1} parent=0 // pred_check
    _
  $region15: #{block_no_sn_forward.1} parent=0 // pred_check_branch
    %21 = sbr.rel (0) target = $region17
  $region16: #{block_no_sn_forward.1} parent=0 // pred_region
    _
  $region17: #{block_no_sn_forward.1} parent=0 // pred_fallthru
    _
  // Predicated region
  $region18: #{block_no_sn_forward.1} parent=0 // pred_check
    _
  $region19: #{block_no_sn_forward.1} parent=0 // pred_check_branch
    %23 = sbr.rel (0) target = $region21
  $region20: #{block_no_sn_forward.1} parent=0 // pred_region
    _
  $region21: #{block_no_sn_forward.1} parent=0 // pred_fallthru
    _
  // Predicated region
  $region22: #{block_no_sn_forward.1} parent=0 // pred_check
    _
  $region23: #{block_no_sn_forward.1} parent=0 // pred_check_branch
    %25 = sbr.rel (0) target = $region25
  $region24: #{block_no_sn_forward.1} parent=0 // pred_region
    _
  $region25: #{block_no_sn_forward.1} parent=0 // pred_fallthru
    _
  // Predicated region
  $region26: #{block_no_sn_forward.1} parent=0 // pred_check
    _
  $region27: #{block_no_sn_forward.1} parent=0 // pred_check_branch
    %27 = sbr.rel (0) target = $region29
  $region28: #{block_no_sn_forward.1} parent=0 // pred_region
    _
  $region29: #{block_no_sn_forward.1} parent=0 // pred_fallthru
    _
  // Predicated region
  $region30: #{block_no_sn_forward.1} parent=0 // pred_check
    _
  $region31: #{block_no_sn_forward.1} parent=0 // pred_check_branch
    %29 = sbr.rel (0) target = $region33
  $region32: #{block_no_sn_forward.1} parent=0 // pred_region
    _
  $region33: #{block_no_sn_forward.1} parent=0 // pred_fallthru
    _
  // Predicated region
  $region34: #{block_no_sn_forward.1} parent=0 // pred_check
    _
  $region35: #{block_no_sn_forward.1} parent=0 // pred_check_branch
    %31 = sbr.rel (0) target = $region37
  $region36: #{block_no_sn_forward.1} parent=0 // pred_region
    _
  $region37: #{block_no_sn_forward.1} parent=0 // pred_fallthru
    _
  %v32 = vld [vmem:[%s0] sm:$0xff]
  %v33 = vld [vmem:[%s0 + $0x8] sm:$0xff]
  %v34 = vld [vmem:[%s0 + $0x10] sm:$0xff]
  %v35 = vld [vmem:[%s0 + $0x18] sm:$0xff]
  %v36 = vld [vmem:[%s5] sm:$0xff]
  %v37 = vld [vmem:[%s6] sm:$0xff]
  %39 = vset.pattern.permute.xlu0 0
  %40 = vperm.xlu0 %39, %v37
  %v41 = vpop.permute.xlu0 %40
  %vm43 = vcmask 64512
  %v45 = vsel %vm43, %v36, 0
  %47 = vmatprep.subr.mxu0 %v33
  %48 = vmatpush1.msra.mxu0 %v32
  %49 = vmatprep.subr.mxu0 0.0
  %50 = vmatpush1.msra.mxu0 0.0
  %51 = vmatprep.subr.mxu0 0.0
  %52 = vmatpush1.msra.mxu0 0.0
  %53 = vmatprep.subr.mxu0 0.0
  %54 = vmatpush1.msra.mxu0 0.0
  %55 = vmatprep.subr.mxu0 0.0
  %56 = vmatpush1.msra.mxu0 0.0
  %57 = vmatprep.subr.mxu0 0.0
  %58 = vmatpush1.msra.mxu0 0.0
  %59 = vmatprep.subr.mxu0 0.0
  %60 = vmatpush1.msra.mxu0 0.0
  %61 = vmatprep.subr.mxu0 0.0
  %62 = vmatpush1.msra.mxu0 0.0
  %63 = vmatprep.subr.mxu0 0.0
  %64 = vmatpush1.msra.mxu0 0.0
  %65 = vmatprep.subr.mxu0 0.0
  %66 = vmatpush1.msra.mxu0 0.0
  %67 = vmatprep.subr.mxu0 0.0
  %68 = vmatpush1.msra.mxu0 0.0
  %69 = vmatprep.subr.mxu0 0.0
  %70 = vmatpush1.msra.mxu0 0.0
  %71 = vmatprep.subr.mxu0 0.0
  %72 = vmatpush1.msra.mxu0 0.0
  %73 = vmatprep.subr.mxu0 0.0
  %74 = vmatpush1.msra.mxu0 0.0
  %75 = vmatprep.subr.mxu0 0.0
  %76 = vmatpush1.msra.mxu0 0.0
  %77 = vmatprep.subr.mxu0 0.0
  %78 = vmatpush1.msra.mxu0 0.0
  %79 = vmatprep.subr.mxu0 0.0
  %80 = vmatpush1.msra.mxu0 0.0
  %81 = vmatprep.subr.mxu0 0.0
  %82 = vmatpush1.msra.mxu0 0.0
  %83 = vmatprep.subr.mxu0 0.0
  %84 = vmatpush1.msra.mxu0 0.0
  %85 = vmatprep.subr.mxu0 0.0
  %86 = vmatpush1.msra.mxu0 0.0
  %87 = vmatprep.subr.mxu0 0.0
  %88 = vmatpush1.msra.mxu0 0.0
  %89 = vmatprep.subr.mxu0 0.0
  %90 = vmatpush1.msra.mxu0 0.0
  %91 = vmatprep.subr.mxu0 0.0
  %92 = vmatpush1.msra.mxu0 0.0
  %93 = vmatprep.subr.mxu0 0.0
  %94 = vmatpush1.msra.mxu0 0.0
  %95 = vmatprep.subr.mxu0 0.0
  %96 = vmatpush1.msra.mxu0 0.0
  %97 = vmatprep.subr.mxu0 0.0
  %98 = vmatpush1.msra.mxu0 0.0
  %99 = vmatprep.subr.mxu0 0.0
  %100 = vmatpush1.msra.mxu0 0.0
  %101 = vmatprep.subr.mxu0 0.0
  %102 = vmatpush1.msra.mxu0 0.0
  %103 = vmatprep.subr.mxu0 0.0
  %104 = vmatpush1.msra.mxu0 0.0
  %105 = vmatprep.subr.mxu0 0.0
  %106 = vmatpush1.msra.mxu0 0.0
  %107 = vmatprep.subr.mxu0 0.0
  %108 = vmatpush1.msra.mxu0 0.0
  %109 = vmatprep.subr.mxu0 0.0
  %110 = vmatpush1.msra.mxu0 0.0
  %111 = vmatprep.mubr.f32.mxu0 0.0
  %112 = vmatmul.mubr.f32.gmra.mrb[0].mxu0 %v45
  %v113 = vpop.f32.mrb[0].mxu0
  %v114 = vadd.f32 %v41, %v113
  %v115 = vpop.f32.mrb[0].mxu0
  %v116 = vadd.f32 %v41, %v115
  %117 = vdwg.mxu0
  %118 = vmatprep.subr.mxu0 %v35
  %119 = vmatpush1.msra.mxu0 %v34
  %120 = vmatprep.subr.mxu0 0.0
  %121 = vmatpush1.msra.mxu0 0.0
  %122 = vmatprep.subr.mxu0 0.0
  %123 = vmatpush1.msra.mxu0 0.0
  %124 = vmatprep.subr.mxu0 0.0
  %125 = vmatpush1.msra.mxu0 0.0
  %126 = vmatprep.subr.mxu0 0.0
  %127 = vmatpush1.msra.mxu0 0.0
  %128 = vmatprep.subr.mxu0 0.0
  %129 = vmatpush1.msra.mxu0 0.0
  %130 = vmatprep.subr.mxu0 0.0
  %131 = vmatpush1.msra.mxu0 0.0
  %132 = vmatprep.subr.mxu0 0.0
  %133 = vmatpush1.msra.mxu0 0.0
  %134 = vmatprep.subr.mxu0 0.0
  %135 = vmatpush1.msra.mxu0 0.0
  %136 = vmatprep.subr.mxu0 0.0
  %137 = vmatpush1.msra.mxu0 0.0
  %138 = vmatprep.subr.mxu0 0.0
  %139 = vmatpush1.msra.mxu0 0.0
  %140 = vmatprep.subr.mxu0 0.0
  %141 = vmatpush1.msra.mxu0 0.0
  %142 = vmatprep.subr.mxu0 0.0
  %143 = vmatpush1.msra.mxu0 0.0
  %144 = vmatprep.subr.mxu0 0.0
  %145 = vmatpush1.msra.mxu0 0.0
  %146 = vmatprep.subr.mxu0 0.0
  %147 = vmatpush1.msra.mxu0 0.0
  %148 = vmatprep.subr.mxu0 0.0
  %149 = vmatpush1.msra.mxu0 0.0
  %150 = vmatprep.subr.mxu0 0.0
  %151 = vmatpush1.msra.mxu0 0.0
  %152 = vmatprep.subr.mxu0 0.0
  %153 = vmatpush1.msra.mxu0 0.0
  %154 = vmatprep.subr.mxu0 0.0
  %155 = vmatpush1.msra.mxu0 0.0
  %156 = vmatprep.subr.mxu0 0.0
  %157 = vmatpush1.msra.mxu0 0.0
  %158 = vmatprep.subr.mxu0 0.0
  %159 = vmatpush1.msra.mxu0 0.0
  %160 = vmatprep.subr.mxu0 0.0
  %161 = vmatpush1.msra.mxu0 0.0
  %162 = vmatprep.subr.mxu0 0.0
  %163 = vmatpush1.msra.mxu0 0.0
  %164 = vmatprep.subr.mxu0 0.0
  %165 = vmatpush1.msra.mxu0 0.0
  %166 = vmatprep.subr.mxu0 0.0
  %167 = vmatpush1.msra.mxu0 0.0
  %168 = vmatprep.subr.mxu0 0.0
  %169 = vmatpush1.msra.mxu0 0.0
  %170 = vmatprep.subr.mxu0 0.0
  %171 = vmatpush1.msra.mxu0 0.0
  %172 = vmatprep.subr.mxu0 0.0
  %173 = vmatpush1.msra.mxu0 0.0
  %174 = vmatprep.subr.mxu0 0.0
  %175 = vmatpush1.msra.mxu0 0.0
  %176 = vmatprep.subr.mxu0 0.0
  %177 = vmatpush1.msra.mxu0 0.0
  %178 = vmatprep.subr.mxu0 0.0
  %179 = vmatpush1.msra.mxu0 0.0
  %180 = vmatprep.subr.mxu0 0.0
  %181 = vmatpush1.msra.mxu0 0.0
  %182 = vmatprep.mubr.f32.mxu0 0.0
  %183 = vmatmul.mubr.f32.gmra.mrb[0].mxu0 %v45
  %v184 = vpop.f32.mrb[0].mxu0
  %v185 = vadd.f32 %v41, %v184
  %v186 = vpop.f32.mrb[0].mxu0
  %v187 = vadd.f32 %v41, %v186
  %188 = vdwg.mxu0
  %v189 = vmax.f32 %v32, 0.0
  %v190 = vmax.f32 %v33, 0.0
  %v191 = vmax.f32 %v34, 0.0
  %v192 = vmax.f32 %v35, 0.0
  %193 = vrot.lane.b32.xlu0 %v189, 17
  %v194 = vpop.permute.xlu0 %193
  %195 = vrot.lane.b32.xlu0 %v190, 17
  %v196 = vpop.permute.xlu0 %195
  %197 = vrot.lane.b32.xlu0 %v191, 17
  %v198 = vpop.permute.xlu0 %197
  %199 = vrot.lane.b32.xlu0 %v192, 17
  %v200 = vpop.permute.xlu0 %199
  %v201 = vlaneseq
  %v202 = vand.u32 %v201, 127
  %vm203 = vcmp.lt.s32.totalorder %v202, 17
  %v204 = vsel %vm203, %v198, %v200
  %v205 = vsel %vm203, %v196, %v198
  %v206 = vsel %vm203, %v194, %v196
  %v207 = vsel %vm203, %v200, %v194
  %v208 = vld [vmem:[%s7] ss:$8 sm:$0xf]
  %v210 = vlaneseq
  %v211 = vshrl.u32 %v210, 7
  %v212 = vsub.s32 0, %v211
  %v213 = vrot.slane %v208, %v212
  %v214 = vlaneseq
  %v215 = vshrl.u32 %v214, 7
  %v216 = vsub.s32 1, %v215
  %v217 = vrot.slane %v208, %v216
  %v218 = vlaneseq
  %v219 = vshrl.u32 %v218, 7
  %v220 = vsub.s32 2, %v219
  %v221 = vrot.slane %v208, %v220
  %v222 = vlaneseq
  %v223 = vshrl.u32 %v222, 7
  %v224 = vsub.s32 3, %v223
  %v225 = vrot.slane %v208, %v224
  %v230 = vmul.f32 %v207, %v213
  %v231 = vmul.f32 %v206, %v217
  %v232 = vmul.f32 %v205, %v221
  %v233 = vmul.f32 %v204, %v225
  %v234 = vld [vmem:[%s1] sm:$0xff]
  %235 = vrot.lane.b32.xlu0 %v189, 16
  %v236 = vpop.permute.xlu0 %235
  %237 = vrot.lane.b32.xlu0 %v190, 16
  %v238 = vpop.permute.xlu0 %237
  %239 = vrot.lane.b32.xlu0 %v191, 16
  %v240 = vpop.permute.xlu0 %239
  %241 = vrot.lane.b32.xlu0 %v192, 16
  %v242 = vpop.permute.xlu0 %241
  %vm243 = vcmp.lt.s32.totalorder %v202, 16
  %v244 = vsel %vm243, %v240, %v242
  %v245 = vsel %vm243, %v238, %v240
  %v246 = vsel %vm243, %v236, %v238
  %v247 = vsel %vm243, %v242, %v236
  %s248 = scalar_lea.vmem %s7, 1
  %v249 = vld [vmem:[%s248] ss:$8 sm:$0xf]
  %v251 = vlaneseq
  %v252 = vshrl.u32 %v251, 7
  %v253 = vsub.s32 0, %v252
  %v254 = vrot.slane %v249, %v253
  %v255 = vlaneseq
  %v256 = vshrl.u32 %v255, 7
  %v257 = vsub.s32 1, %v256
  %v258 = vrot.slane %v249, %v257
  %v259 = vlaneseq
  %v260 = vshrl.u32 %v259, 7
  %v261 = vsub.s32 2, %v260
  %v262 = vrot.slane %v249, %v261
  %v263 = vlaneseq
  %v264 = vshrl.u32 %v263, 7
  %v265 = vsub.s32 3, %v264
  %v266 = vrot.slane %v249, %v265
  %v271 = vmul.f32 %v247, %v254
  %v272 = vmul.f32 %v246, %v258
  %v273 = vmul.f32 %v245, %v262
  %v274 = vmul.f32 %v244, %v266
  %s275 = scalar_lea.vmem %s1, 8
  %v276 = vld [vmem:[%s275] sm:$0xff]
  %v278 = vsel %vm43, %v276, 0
  %280 = vmatprep.subr.mxu0 %v272
  %281 = vmatpush1.msra.mxu0 %v271
  %282 = vmatprep.subr.mxu0 0.0
  %283 = vmatpush1.msra.mxu0 0.0
  %284 = vmatprep.subr.mxu0 0.0
  %285 = vmatpush1.msra.mxu0 0.0
  %286 = vmatprep.subr.mxu0 0.0
  %287 = vmatpush1.msra.mxu0 0.0
  %288 = vmatprep.subr.mxu0 0.0
  %289 = vmatpush1.msra.mxu0 0.0
  %290 = vmatprep.subr.mxu0 0.0
  %291 = vmatpush1.msra.mxu0 0.0
  %292 = vmatprep.subr.mxu0 0.0
  %293 = vmatpush1.msra.mxu0 0.0
  %294 = vmatprep.subr.mxu0 0.0
  %295 = vmatpush1.msra.mxu0 0.0
  %296 = vmatprep.subr.mxu0 0.0
  %297 = vmatpush1.msra.mxu0 0.0
  %298 = vmatprep.subr.mxu0 0.0
  %299 = vmatpush1.msra.mxu0 0.0
  %300 = vmatprep.subr.mxu0 0.0
  %301 = vmatpush1.msra.mxu0 0.0
  %302 = vmatprep.subr.mxu0 0.0
  %303 = vmatpush1.msra.mxu0 0.0
  %304 = vmatprep.subr.mxu0 0.0
  %305 = vmatpush1.msra.mxu0 0.0
  %306 = vmatprep.subr.mxu0 0.0
  %307 = vmatpush1.msra.mxu0 0.0
  %308 = vmatprep.subr.mxu0 0.0
  %309 = vmatpush1.msra.mxu0 0.0
  %310 = vmatprep.subr.mxu0 0.0
  %311 = vmatpush1.msra.mxu0 0.0
  %312 = vmatprep.subr.mxu0 0.0
  %313 = vmatpush1.msra.mxu0 0.0
  %314 = vmatprep.subr.mxu0 0.0
  %315 = vmatpush1.msra.mxu0 0.0
  %316 = vmatprep.subr.mxu0 0.0
  %317 = vmatpush1.msra.mxu0 0.0
  %318 = vmatprep.subr.mxu0 0.0
  %319 = vmatpush1.msra.mxu0 0.0
  %320 = vmatprep.subr.mxu0 0.0
  %321 = vmatpush1.msra.mxu0 0.0
  %322 = vmatprep.subr.mxu0 0.0
  %323 = vmatpush1.msra.mxu0 0.0
  %324 = vmatprep.subr.mxu0 0.0
  %325 = vmatpush1.msra.mxu0 0.0
  %326 = vmatprep.subr.mxu0 0.0
  %327 = vmatpush1.msra.mxu0 0.0
  %328 = vmatprep.subr.mxu0 0.0
  %329 = vmatpush1.msra.mxu0 0.0
  %330 = vmatprep.subr.mxu0 0.0
  %331 = vmatpush1.msra.mxu0 0.0
  %332 = vmatprep.subr.mxu0 0.0
  %333 = vmatpush1.msra.mxu0 0.0
  %334 = vmatprep.subr.mxu0 0.0
  %335 = vmatpush1.msra.mxu0 0.0
  %336 = vmatprep.subr.mxu0 0.0
  %337 = vmatpush1.msra.mxu0 0.0
  %338 = vmatprep.subr.mxu0 0.0
  %339 = vmatpush1.msra.mxu0 0.0
  %340 = vmatprep.subr.mxu0 0.0
  %341 = vmatpush1.msra.mxu0 0.0
  %342 = vmatprep.subr.mxu0 0.0
  %343 = vmatpush1.msra.mxu0 0.0
  %344 = vmatprep.mubr.f32.mxu0 0.0
  %345 = vmatmul.mubr.f32.gmra.mrb[0].mxu0 %v278
  %v346 = vpop.f32.mrb[0].mxu0
  %v347 = vadd.f32 0.0, %v346
  %v348 = vpop.f32.mrb[0].mxu0
  %v349 = vadd.f32 0.0, %v348
  %350 = vdwg.mxu0
  %351 = vmatprep.subr.mxu0 %v274
  %352 = vmatpush1.msra.mxu0 %v273
  %353 = vmatprep.subr.mxu0 0.0
  %354 = vmatpush1.msra.mxu0 0.0
  %355 = vmatprep.subr.mxu0 0.0
  %356 = vmatpush1.msra.mxu0 0.0
  %357 = vmatprep.subr.mxu0 0.0
  %358 = vmatpush1.msra.mxu0 0.0
  %359 = vmatprep.subr.mxu0 0.0
  %360 = vmatpush1.msra.mxu0 0.0
  %361 = vmatprep.subr.mxu0 0.0
  %362 = vmatpush1.msra.mxu0 0.0
  %363 = vmatprep.subr.mxu0 0.0
  %364 = vmatpush1.msra.mxu0 0.0
  %365 = vmatprep.subr.mxu0 0.0
  %366 = vmatpush1.msra.mxu0 0.0
  %367 = vmatprep.subr.mxu0 0.0
  %368 = vmatpush1.msra.mxu0 0.0
  %369 = vmatprep.subr.mxu0 0.0
  %370 = vmatpush1.msra.mxu0 0.0
  %371 = vmatprep.subr.mxu0 0.0
  %372 = vmatpush1.msra.mxu0 0.0
  %373 = vmatprep.subr.mxu0 0.0
  %374 = vmatpush1.msra.mxu0 0.0
  %375 = vmatprep.subr.mxu0 0.0
  %376 = vmatpush1.msra.mxu0 0.0
  %377 = vmatprep.subr.mxu0 0.0
  %378 = vmatpush1.msra.mxu0 0.0
  %379 = vmatprep.subr.mxu0 0.0
  %380 = vmatpush1.msra.mxu0 0.0
  %381 = vmatprep.subr.mxu0 0.0
  %382 = vmatpush1.msra.mxu0 0.0
  %383 = vmatprep.subr.mxu0 0.0
  %384 = vmatpush1.msra.mxu0 0.0
  %385 = vmatprep.subr.mxu0 0.0
  %386 = vmatpush1.msra.mxu0 0.0
  %387 = vmatprep.subr.mxu0 0.0
  %388 = vmatpush1.msra.mxu0 0.0
  %389 = vmatprep.subr.mxu0 0.0
  %390 = vmatpush1.msra.mxu0 0.0
  %391 = vmatprep.subr.mxu0 0.0
  %392 = vmatpush1.msra.mxu0 0.0
  %393 = vmatprep.subr.mxu0 0.0
  %394 = vmatpush1.msra.mxu0 0.0
  %395 = vmatprep.subr.mxu0 0.0
  %396 = vmatpush1.msra.mxu0 0.0
  %397 = vmatprep.subr.mxu0 0.0
  %398 = vmatpush1.msra.mxu0 0.0
  %399 = vmatprep.subr.mxu0 0.0
  %400 = vmatpush1.msra.mxu0 0.0
  %401 = vmatprep.subr.mxu0 0.0
  %402 = vmatpush1.msra.mxu0 0.0
  %403 = vmatprep.subr.mxu0 0.0
  %404 = vmatpush1.msra.mxu0 0.0
  %405 = vmatprep.subr.mxu0 0.0
  %406 = vmatpush1.msra.mxu0 0.0
  %407 = vmatprep.subr.mxu0 0.0
  %408 = vmatpush1.msra.mxu0 0.0
  %409 = vmatprep.subr.mxu0 0.0
  %410 = vmatpush1.msra.mxu0 0.0
  %411 = vmatprep.subr.mxu0 0.0
  %412 = vmatpush1.msra.mxu0 0.0
  %413 = vmatprep.subr.mxu0 0.0
  %414 = vmatpush1.msra.mxu0 0.0
  %415 = vmatprep.mubr.f32.mxu0 0.0
  %416 = vmatmul.mubr.f32.gmra.mrb[0].mxu0 %v278
  %v417 = vpop.f32.mrb[0].mxu0
  %v418 = vadd.f32 0.0, %v417
  %v419 = vpop.f32.mrb[0].mxu0
  %v420 = vadd.f32 0.0, %v419
  %421 = vdwg.mxu0
  %v423 = vsel %vm43, %v234, 0
  %425 = vmatprep.subr.mxu0 %v231
  %426 = vmatpush1.msra.mxu0 %v230
  %427 = vmatprep.subr.mxu0 0.0
  %428 = vmatpush1.msra.mxu0 0.0
  %429 = vmatprep.subr.mxu0 0.0
  %430 = vmatpush1.msra.mxu0 0.0
  %431 = vmatprep.subr.mxu0 0.0
  %432 = vmatpush1.msra.mxu0 0.0
  %433 = vmatprep.subr.mxu0 0.0
  %434 = vmatpush1.msra.mxu0 0.0
  %435 = vmatprep.subr.mxu0 0.0
  %436 = vmatpush1.msra.mxu0 0.0
  %437 = vmatprep.subr.mxu0 0.0
  %438 = vmatpush1.msra.mxu0 0.0
  %439 = vmatprep.subr.mxu0 0.0
  %440 = vmatpush1.msra.mxu0 0.0
  %441 = vmatprep.subr.mxu0 0.0
  %442 = vmatpush1.msra.mxu0 0.0
  %443 = vmatprep.subr.mxu0 0.0
  %444 = vmatpush1.msra.mxu0 0.0
  %445 = vmatprep.subr.mxu0 0.0
  %446 = vmatpush1.msra.mxu0 0.0
  %447 = vmatprep.subr.mxu0 0.0
  %448 = vmatpush1.msra.mxu0 0.0
  %449 = vmatprep.subr.mxu0 0.0
  %450 = vmatpush1.msra.mxu0 0.0
  %451 = vmatprep.subr.mxu0 0.0
  %452 = vmatpush1.msra.mxu0 0.0
  %453 = vmatprep.subr.mxu0 0.0
  %454 = vmatpush1.msra.mxu0 0.0
  %455 = vmatprep.subr.mxu0 0.0
  %456 = vmatpush1.msra.mxu0 0.0
  %457 = vmatprep.subr.mxu0 0.0
  %458 = vmatpush1.msra.mxu0 0.0
  %459 = vmatprep.subr.mxu0 0.0
  %460 = vmatpush1.msra.mxu0 0.0
  %461 = vmatprep.subr.mxu0 0.0
  %462 = vmatpush1.msra.mxu0 0.0
  %463 = vmatprep.subr.mxu0 0.0
  %464 = vmatpush1.msra.mxu0 0.0
  %465 = vmatprep.subr.mxu0 0.0
  %466 = vmatpush1.msra.mxu0 0.0
  %467 = vmatprep.subr.mxu0 0.0
  %468 = vmatpush1.msra.mxu0 0.0
  %469 = vmatprep.subr.mxu0 0.0
  %470 = vmatpush1.msra.mxu0 0.0
  %471 = vmatprep.subr.mxu0 0.0
  %472 = vmatpush1.msra.mxu0 0.0
  %473 = vmatprep.subr.mxu0 0.0
  %474 = vmatpush1.msra.mxu0 0.0
  %475 = vmatprep.subr.mxu0 0.0
  %476 = vmatpush1.msra.mxu0 0.0
  %477 = vmatprep.subr.mxu0 0.0
  %478 = vmatpush1.msra.mxu0 0.0
  %479 = vmatprep.subr.mxu0 0.0
  %480 = vmatpush1.msra.mxu0 0.0
  %481 = vmatprep.subr.mxu0 0.0
  %482 = vmatpush1.msra.mxu0 0.0
  %483 = vmatprep.subr.mxu0 0.0
  %484 = vmatpush1.msra.mxu0 0.0
  %485 = vmatprep.subr.mxu0 0.0
  %486 = vmatpush1.msra.mxu0 0.0
  %487 = vmatprep.subr.mxu0 0.0
  %488 = vmatpush1.msra.mxu0 0.0
  %489 = vmatprep.mubr.f32.mxu0 0.0
  %490 = vmatmul.mubr.f32.gmra.mrb[0].mxu0 %v423
  %v491 = vpop.f32.mrb[0].mxu0
  %v492 = vadd.f32 %v347, %v491
  %v493 = vpop.f32.mrb[0].mxu0
  %v494 = vadd.f32 %v349, %v493
  %495 = vdwg.mxu0
  %496 = vmatprep.subr.mxu0 %v233
  %497 = vmatpush1.msra.mxu0 %v232
  %498 = vmatprep.subr.mxu0 0.0
  %499 = vmatpush1.msra.mxu0 0.0
  %500 = vmatprep.subr.mxu0 0.0
  %501 = vmatpush1.msra.mxu0 0.0
  %502 = vmatprep.subr.mxu0 0.0
  %503 = vmatpush1.msra.mxu0 0.0
  %504 = vmatprep.subr.mxu0 0.0
  %505 = vmatpush1.msra.mxu0 0.0
  %506 = vmatprep.subr.mxu0 0.0
  %507 = vmatpush1.msra.mxu0 0.0
  %508 = vmatprep.subr.mxu0 0.0
  %509 = vmatpush1.msra.mxu0 0.0
  %510 = vmatprep.subr.mxu0 0.0
  %511 = vmatpush1.msra.mxu0 0.0
  %512 = vmatprep.subr.mxu0 0.0
  %513 = vmatpush1.msra.mxu0 0.0
  %514 = vmatprep.subr.mxu0 0.0
  %515 = vmatpush1.msra.mxu0 0.0
  %516 = vmatprep.subr.mxu0 0.0
  %517 = vmatpush1.msra.mxu0 0.0
  %518 = vmatprep.subr.mxu0 0.0
  %519 = vmatpush1.msra.mxu0 0.0
  %520 = vmatprep.subr.mxu0 0.0
  %521 = vmatpush1.msra.mxu0 0.0
  %522 = vmatprep.subr.mxu0 0.0
  %523 = vmatpush1.msra.mxu0 0.0
  %524 = vmatprep.subr.mxu0 0.0
  %525 = vmatpush1.msra.mxu0 0.0
  %526 = vmatprep.subr.mxu0 0.0
  %527 = vmatpush1.msra.mxu0 0.0
  %528 = vmatprep.subr.mxu0 0.0
  %529 = vmatpush1.msra.mxu0 0.0
  %530 = vmatprep.subr.mxu0 0.0
  %531 = vmatpush1.msra.mxu0 0.0
  %532 = vmatprep.subr.mxu0 0.0
  %533 = vmatpush1.msra.mxu0 0.0
  %534 = vmatprep.subr.mxu0 0.0
  %535 = vmatpush1.msra.mxu0 0.0
  %536 = vmatprep.subr.mxu0 0.0
  %537 = vmatpush1.msra.mxu0 0.0
  %538 = vmatprep.subr.mxu0 0.0
  %539 = vmatpush1.msra.mxu0 0.0
  %540 = vmatprep.subr.mxu0 0.0
  %541 = vmatpush1.msra.mxu0 0.0
  %542 = vmatprep.subr.mxu0 0.0
  %543 = vmatpush1.msra.mxu0 0.0
  %544 = vmatprep.subr.mxu0 0.0
  %545 = vmatpush1.msra.mxu0 0.0
  %546 = vmatprep.subr.mxu0 0.0
  %547 = vmatpush1.msra.mxu0 0.0
  %548 = vmatprep.subr.mxu0 0.0
  %549 = vmatpush1.msra.mxu0 0.0
  %550 = vmatprep.subr.mxu0 0.0
  %551 = vmatpush1.msra.mxu0 0.0
  %552 = vmatprep.subr.mxu0 0.0
  %553 = vmatpush1.msra.mxu0 0.0
  %554 = vmatprep.subr.mxu0 0.0
  %555 = vmatpush1.msra.mxu0 0.0
  %556 = vmatprep.subr.mxu0 0.0
  %557 = vmatpush1.msra.mxu0 0.0
  %558 = vmatprep.subr.mxu0 0.0
  %559 = vmatpush1.msra.mxu0 0.0
  %560 = vmatprep.mubr.f32.mxu0 0.0
  %561 = vmatmul.mubr.f32.gmra.mrb[0].mxu0 %v423
  %v562 = vpop.f32.mrb[0].mxu0
  %v563 = vadd.f32 %v418, %v562
  %v564 = vpop.f32.mrb[0].mxu0
  %v565 = vadd.f32 %v420, %v564
  %566 = vdwg.mxu0
  %567 = vrot.lane.b32.xlu0 %v189, 15
  %v568 = vpop.permute.xlu0 %567
  %569 = vrot.lane.b32.xlu0 %v190, 15
  %v570 = vpop.permute.xlu0 %569
  %571 = vrot.lane.b32.xlu0 %v191, 15
  %v572 = vpop.permute.xlu0 %571
  %573 = vrot.lane.b32.xlu0 %v192, 15
  %v574 = vpop.permute.xlu0 %573
  %vm575 = vcmp.lt.s32.totalorder %v202, 15
  %v576 = vsel %vm575, %v572, %v574
  %v577 = vsel %vm575, %v570, %v572
  %v578 = vsel %vm575, %v568, %v570
  %v579 = vsel %vm575, %v574, %v568
  %s580 = scalar_lea.vmem %s7, 2
  %v581 = vld [vmem:[%s580] ss:$8 sm:$0xf]
  %v583 = vlaneseq
  %v584 = vshrl.u32 %v583, 7
  %v585 = vsub.s32 0, %v584
  %v586 = vrot.slane %v581, %v585
  %v587 = vlaneseq
  %v588 = vshrl.u32 %v587, 7
  %v589 = vsub.s32 1, %v588
  %v590 = vrot.slane %v581, %v589
  %v591 = vlaneseq
  %v592 = vshrl.u32 %v591, 7
  %v593 = vsub.s32 2, %v592
  %v594 = vrot.slane %v581, %v593
  %v595 = vlaneseq
  %v596 = vshrl.u32 %v595, 7
  %v597 = vsub.s32 3, %v596
  %v598 = vrot.slane %v581, %v597
  %v603 = vmul.f32 %v579, %v586
  %v604 = vmul.f32 %v578, %v590
  %v605 = vmul.f32 %v577, %v594
  %v606 = vmul.f32 %v576, %v598
  %s607 = scalar_lea.vmem %s1, 16
  %v608 = vld [vmem:[%s607] sm:$0xff]
  %v610 = vsel %vm43, %v608, 0
  %612 = vmatprep.subr.mxu0 %v604
  %613 = vmatpush1.msra.mxu0 %v603
  %614 = vmatprep.subr.mxu0 0.0
  %615 = vmatpush1.msra.mxu0 0.0
  %616 = vmatprep.subr.mxu0 0.0
  %617 = vmatpush1.msra.mxu0 0.0
  %618 = vmatprep.subr.mxu0 0.0
  %619 = vmatpush1.msra.mxu0 0.0
  %620 = vmatprep.subr.mxu0 0.0
  %621 = vmatpush1.msra.mxu0 0.0
  %622 = vmatprep.subr.mxu0 0.0
  %623 = vmatpush1.msra.mxu0 0.0
  %624 = vmatprep.subr.mxu0 0.0
  %625 = vmatpush1.msra.mxu0 0.0
  %626 = vmatprep.subr.mxu0 0.0
  %627 = vmatpush1.msra.mxu0 0.0
  %628 = vmatprep.subr.mxu0 0.0
  %629 = vmatpush1.msra.mxu0 0.0
  %630 = vmatprep.subr.mxu0 0.0
  %631 = vmatpush1.msra.mxu0 0.0
  %632 = vmatprep.subr.mxu0 0.0
  %633 = vmatpush1.msra.mxu0 0.0
  %634 = vmatprep.subr.mxu0 0.0
  %635 = vmatpush1.msra.mxu0 0.0
  %636 = vmatprep.subr.mxu0 0.0
  %637 = vmatpush1.msra.mxu0 0.0
  %638 = vmatprep.subr.mxu0 0.0
  %639 = vmatpush1.msra.mxu0 0.0
  %640 = vmatprep.subr.mxu0 0.0
  %641 = vmatpush1.msra.mxu0 0.0
  %642 = vmatprep.subr.mxu0 0.0
  %643 = vmatpush1.msra.mxu0 0.0
  %644 = vmatprep.subr.mxu0 0.0
  %645 = vmatpush1.msra.mxu0 0.0
  %646 = vmatprep.subr.mxu0 0.0
  %647 = vmatpush1.msra.mxu0 0.0
  %648 = vmatprep.subr.mxu0 0.0
  %649 = vmatpush1.msra.mxu0 0.0
  %650 = vmatprep.subr.mxu0 0.0
  %651 = vmatpush1.msra.mxu0 0.0
  %652 = vmatprep.subr.mxu0 0.0
  %653 = vmatpush1.msra.mxu0 0.0
  %654 = vmatprep.subr.mxu0 0.0
  %655 = vmatpush1.msra.mxu0 0.0
  %656 = vmatprep.subr.mxu0 0.0
  %657 = vmatpush1.msra.mxu0 0.0
  %658 = vmatprep.subr.mxu0 0.0
  %659 = vmatpush1.msra.mxu0 0.0
  %660 = vmatprep.subr.mxu0 0.0
  %661 = vmatpush1.msra.mxu0 0.0
  %662 = vmatprep.subr.mxu0 0.0
  %663 = vmatpush1.msra.mxu0 0.0
  %664 = vmatprep.subr.mxu0 0.0
  %665 = vmatpush1.msra.mxu0 0.0
  %666 = vmatprep.subr.mxu0 0.0
  %667 = vmatpush1.msra.mxu0 0.0
  %668 = vmatprep.subr.mxu0 0.0
  %669 = vmatpush1.msra.mxu0 0.0
  %670 = vmatprep.subr.mxu0 0.0
  %671 = vmatpush1.msra.mxu0 0.0
  %672 = vmatprep.subr.mxu0 0.0
  %673 = vmatpush1.msra.mxu0 0.0
  %674 = vmatprep.subr.mxu0 0.0
  %675 = vmatpush1.msra.mxu0 0.0
  %676 = vmatprep.mubr.f32.mxu0 0.0
  %677 = vmatmul.mubr.f32.gmra.mrb[0].mxu0 %v610
  %v678 = vpop.f32.mrb[0].mxu0
  %v679 = vadd.f32 0.0, %v678
  %v680 = vpop.f32.mrb[0].mxu0
  %v681 = vadd.f32 0.0, %v680
  %682 = vdwg.mxu0
  %683 = vmatprep.subr.mxu0 %v606
  %684 = vmatpush1.msra.mxu0 %v605
  %685 = vmatprep.subr.mxu0 0.0
  %686 = vmatpush1.msra.mxu0 0.0
  %687 = vmatprep.subr.mxu0 0.0
  %688 = vmatpush1.msra.mxu0 0.0
  %689 = vmatprep.subr.mxu0 0.0
  %690 = vmatpush1.msra.mxu0 0.0
  %691 = vmatprep.subr.mxu0 0.0
  %692 = vmatpush1.msra.mxu0 0.0
  %693 = vmatprep.subr.mxu0 0.0
  %694 = vmatpush1.msra.mxu0 0.0
  %695 = vmatprep.subr.mxu0 0.0
  %696 = vmatpush1.msra.mxu0 0.0
  %697 = vmatprep.subr.mxu0 0.0
  %698 = vmatpush1.msra.mxu0 0.0
  %699 = vmatprep.subr.mxu0 0.0
  %700 = vmatpush1.msra.mxu0 0.0
  %701 = vmatprep.subr.mxu0 0.0
  %702 = vmatpush1.msra.mxu0 0.0
  %703 = vmatprep.subr.mxu0 0.0
  %704 = vmatpush1.msra.mxu0 0.0
  %705 = vmatprep.subr.mxu0 0.0
  %706 = vmatpush1.msra.mxu0 0.0
  %707 = vmatprep.subr.mxu0 0.0
  %708 = vmatpush1.msra.mxu0 0.0
  %709 = vmatprep.subr.mxu0 0.0
  %710 = vmatpush1.msra.mxu0 0.0
  %711 = vmatprep.subr.mxu0 0.0
  %712 = vmatpush1.msra.mxu0 0.0
  %713 = vmatprep.subr.mxu0 0.0
  %714 = vmatpush1.msra.mxu0 0.0
  %715 = vmatprep.subr.mxu0 0.0
  %716 = vmatpush1.msra.mxu0 0.0
  %717 = vmatprep.subr.mxu0 0.0
  %718 = vmatpush1.msra.mxu0 0.0
  %719 = vmatprep.subr.mxu0 0.0
  %720 = vmatpush1.msra.mxu0 0.0
  %721 = vmatprep.subr.mxu0 0.0
  %722 = vmatpush1.msra.mxu0 0.0
  %723 = vmatprep.subr.mxu0 0.0
  %724 = vmatpush1.msra.mxu0 0.0
  %725 = vmatprep.subr.mxu0 0.0
  %726 = vmatpush1.msra.mxu0 0.0
  %727 = vmatprep.subr.mxu0 0.0
  %728 = vmatpush1.msra.mxu0 0.0
  %729 = vmatprep.subr.mxu0 0.0
  %730 = vmatpush1.msra.mxu0 0.0
  %731 = vmatprep.subr.mxu0 0.0
  %732 = vmatpush1.msra.mxu0 0.0
  %733 = vmatprep.subr.mxu0 0.0
  %734 = vmatpush1.msra.mxu0 0.0
  %735 = vmatprep.subr.mxu0 0.0
  %736 = vmatpush1.msra.mxu0 0.0
  %737 = vmatprep.subr.mxu0 0.0
  %738 = vmatpush1.msra.mxu0 0.0
  %739 = vmatprep.subr.mxu0 0.0
  %740 = vmatpush1.msra.mxu0 0.0
  %741 = vmatprep.subr.mxu0 0.0
  %742 = vmatpush1.msra.mxu0 0.0
  %743 = vmatprep.subr.mxu0 0.0
  %744 = vmatpush1.msra.mxu0 0.0
  %745 = vmatprep.subr.mxu0 0.0
  %746 = vmatpush1.msra.mxu0 0.0
  %747 = vmatprep.mubr.f32.mxu0 0.0
  %748 = vmatmul.mubr.f32.gmra.mrb[0].mxu0 %v610
  %v749 = vpop.f32.mrb[0].mxu0
  %v750 = vadd.f32 0.0, %v749
  %v751 = vpop.f32.mrb[0].mxu0
  %v752 = vadd.f32 0.0, %v751
  %753 = vdwg.mxu0
  %v754 = vadd.f32 %v492, %v679
  %v755 = vadd.f32 %v494, %v681
  %v756 = vadd.f32 %v563, %v750
  %v757 = vadd.f32 %v565, %v752
  %758 = vrot.lane.b32.xlu0 %v189, 1
  %v759 = vpop.permute.xlu0 %758
  %760 = vrot.lane.b32.xlu0 %v190, 1
  %v761 = vpop.permute.xlu0 %760
  %762 = vrot.lane.b32.xlu0 %v191, 1
  %v763 = vpop.permute.xlu0 %762
  %764 = vrot.lane.b32.xlu0 %v192, 1
  %v765 = vpop.permute.xlu0 %764
  %vm766 = vcmp.lt.s32.totalorder %v202, 1
  %v767 = vsel %vm766, %v763, %v765
  %v768 = vsel %vm766, %v761, %v763
  %v769 = vsel %vm766, %v759, %v761
  %v770 = vsel %vm766, %v765, %v759
  %s771 = scalar_lea.vmem %s7, 3
  %v772 = vld [vmem:[%s771] ss:$8 sm:$0xf]
  %v774 = vlaneseq
  %v775 = vshrl.u32 %v774, 7
  %v776 = vsub.s32 0, %v775
  %v777 = vrot.slane %v772, %v776
  %v778 = vlaneseq
  %v779 = vshrl.u32 %v778, 7
  %v780 = vsub.s32 1, %v779
  %v781 = vrot.slane %v772, %v780
  %v782 = vlaneseq
  %v783 = vshrl.u32 %v782, 7
  %v784 = vsub.s32 2, %v783
  %v785 = vrot.slane %v772, %v784
  %v786 = vlaneseq
  %v787 = vshrl.u32 %v786, 7
  %v788 = vsub.s32 3, %v787
  %v789 = vrot.slane %v772, %v788
  %v794 = vmul.f32 %v770, %v777
  %v795 = vmul.f32 %v769, %v781
  %v796 = vmul.f32 %v768, %v785
  %v797 = vmul.f32 %v767, %v789
  %s798 = scalar_lea.vmem %s1, 24
  %v799 = vld [vmem:[%s798] sm:$0xff]
  %v801 = vsel %vm43, %v799, 0
  %803 = vmatprep.subr.mxu0 %v795
  %804 = vmatpush1.msra.mxu0 %v794
  %805 = vmatprep.subr.mxu0 0.0
  %806 = vmatpush1.msra.mxu0 0.0
  %807 = vmatprep.subr.mxu0 0.0
  %808 = vmatpush1.msra.mxu0 0.0
  %809 = vmatprep.subr.mxu0 0.0
  %810 = vmatpush1.msra.mxu0 0.0
  %811 = vmatprep.subr.mxu0 0.0
  %812 = vmatpush1.msra.mxu0 0.0
  %813 = vmatprep.subr.mxu0 0.0
  %814 = vmatpush1.msra.mxu0 0.0
  %815 = vmatprep.subr.mxu0 0.0
  %816 = vmatpush1.msra.mxu0 0.0
  %817 = vmatprep.subr.mxu0 0.0
  %818 = vmatpush1.msra.mxu0 0.0
  %819 = vmatprep.subr.mxu0 0.0
  %820 = vmatpush1.msra.mxu0 0.0
  %821 = vmatprep.subr.mxu0 0.0
  %822 = vmatpush1.msra.mxu0 0.0
  %823 = vmatprep.subr.mxu0 0.0
  %824 = vmatpush1.msra.mxu0 0.0
  %825 = vmatprep.subr.mxu0 0.0
  %826 = vmatpush1.msra.mxu0 0.0
  %827 = vmatprep.subr.mxu0 0.0
  %828 = vmatpush1.msra.mxu0 0.0
  %829 = vmatprep.subr.mxu0 0.0
  %830 = vmatpush1.msra.mxu0 0.0
  %831 = vmatprep.subr.mxu0 0.0
  %832 = vmatpush1.msra.mxu0 0.0
  %833 = vmatprep.subr.mxu0 0.0
  %834 = vmatpush1.msra.mxu0 0.0
  %835 = vmatprep.subr.mxu0 0.0
  %836 = vmatpush1.msra.mxu0 0.0
  %837 = vmatprep.subr.mxu0 0.0
  %838 = vmatpush1.msra.mxu0 0.0
  %839 = vmatprep.subr.mxu0 0.0
  %840 = vmatpush1.msra.mxu0 0.0
  %841 = vmatprep.subr.mxu0 0.0
  %842 = vmatpush1.msra.mxu0 0.0
  %843 = vmatprep.subr.mxu0 0.0
  %844 = vmatpush1.msra.mxu0 0.0
  %845 = vmatprep.subr.mxu0 0.0
  %846 = vmatpush1.msra.mxu0 0.0
  %847 = vmatprep.subr.mxu0 0.0
  %848 = vmatpush1.msra.mxu0 0.0
  %849 = vmatprep.subr.mxu0 0.0
  %850 = vmatpush1.msra.mxu0 0.0
  %851 = vmatprep.subr.mxu0 0.0
  %852 = vmatpush1.msra.mxu0 0.0
  %853 = vmatprep.subr.mxu0 0.0
  %854 = vmatpush1.msra.mxu0 0.0
  %855 = vmatprep.subr.mxu0 0.0
  %856 = vmatpush1.msra.mxu0 0.0
  %857 = vmatprep.subr.mxu0 0.0
  %858 = vmatpush1.msra.mxu0 0.0
  %859 = vmatprep.subr.mxu0 0.0
  %860 = vmatpush1.msra.mxu0 0.0
  %861 = vmatprep.subr.mxu0 0.0
  %862 = vmatpush1.msra.mxu0 0.0
  %863 = vmatprep.subr.mxu0 0.0
  %864 = vmatpush1.msra.mxu0 0.0
  %865 = vmatprep.subr.mxu0 0.0
  %866 = vmatpush1.msra.mxu0 0.0
  %867 = vmatprep.mubr.f32.mxu0 0.0
  %868 = vmatmul.mubr.f32.gmra.mrb[0].mxu0 %v801
  %v869 = vpop.f32.mrb[0].mxu0
  %v870 = vadd.f32 0.0, %v869
  %v871 = vpop.f32.mrb[0].mxu0
  %v872 = vadd.f32 0.0, %v871
  %873 = vdwg.mxu0
  %874 = vmatprep.subr.mxu0 %v797
  %875 = vmatpush1.msra.mxu0 %v796
  %876 = vmatprep.subr.mxu0 0.0
  %877 = vmatpush1.msra.mxu0 0.0
  %878 = vmatprep.subr.mxu0 0.0
  %879 = vmatpush1.msra.mxu0 0.0
  %880 = vmatprep.subr.mxu0 0.0
  %881 = vmatpush1.msra.mxu0 0.0
  %882 = vmatprep.subr.mxu0 0.0
  %883 = vmatpush1.msra.mxu0 0.0
  %884 = vmatprep.subr.mxu0 0.0
  %885 = vmatpush1.msra.mxu0 0.0
  %886 = vmatprep.subr.mxu0 0.0
  %887 = vmatpush1.msra.mxu0 0.0
  %888 = vmatprep.subr.mxu0 0.0
  %889 = vmatpush1.msra.mxu0 0.0
  %890 = vmatprep.subr.mxu0 0.0
  %891 = vmatpush1.msra.mxu0 0.0
  %892 = vmatprep.subr.mxu0 0.0
  %893 = vmatpush1.msra.mxu0 0.0
  %894 = vmatprep.subr.mxu0 0.0
  %895 = vmatpush1.msra.mxu0 0.0
  %896 = vmatprep.subr.mxu0 0.0
  %897 = vmatpush1.msra.mxu0 0.0
  %898 = vmatprep.subr.mxu0 0.0
  %899 = vmatpush1.msra.mxu0 0.0
  %900 = vmatprep.subr.mxu0 0.0
  %901 = vmatpush1.msra.mxu0 0.0
  %902 = vmatprep.subr.mxu0 0.0
  %903 = vmatpush1.msra.mxu0 0.0
  %904 = vmatprep.subr.mxu0 0.0
  %905 = vmatpush1.msra.mxu0 0.0
  %906 = vmatprep.subr.mxu0 0.0
  %907 = vmatpush1.msra.mxu0 0.0
  %908 = vmatprep.subr.mxu0 0.0
  %909 = vmatpush1.msra.mxu0 0.0
  %910 = vmatprep.subr.mxu0 0.0
  %911 = vmatpush1.msra.mxu0 0.0
  %912 = vmatprep.subr.mxu0 0.0
  %913 = vmatpush1.msra.mxu0 0.0
  %914 = vmatprep.subr.mxu0 0.0
  %915 = vmatpush1.msra.mxu0 0.0
  %916 = vmatprep.subr.mxu0 0.0
  %917 = vmatpush1.msra.mxu0 0.0
  %918 = vmatprep.subr.mxu0 0.0
  %919 = vmatpush1.msra.mxu0 0.0
  %920 = vmatprep.subr.mxu0 0.0
  %921 = vmatpush1.msra.mxu0 0.0
  %922 = vmatprep.subr.mxu0 0.0
  %923 = vmatpush1.msra.mxu0 0.0
  %924 = vmatprep.subr.mxu0 0.0
  %925 = vmatpush1.msra.mxu0 0.0
  %926 = vmatprep.subr.mxu0 0.0
  %927 = vmatpush1.msra.mxu0 0.0
  %928 = vmatprep.subr.mxu0 0.0
  %929 = vmatpush1.msra.mxu0 0.0
  %930 = vmatprep.subr.mxu0 0.0
  %931 = vmatpush1.msra.mxu0 0.0
  %932 = vmatprep.subr.mxu0 0.0
  %933 = vmatpush1.msra.mxu0 0.0
  %934 = vmatprep.subr.mxu0 0.0
  %935 = vmatpush1.msra.mxu0 0.0
  %936 = vmatprep.subr.mxu0 0.0
  %937 = vmatpush1.msra.mxu0 0.0
  %938 = vmatprep.mubr.f32.mxu0 0.0
  %939 = vmatmul.mubr.f32.gmra.mrb[0].mxu0 %v801
  %v940 = vpop.f32.mrb[0].mxu0
  %v941 = vadd.f32 0.0, %v940
  %v942 = vpop.f32.mrb[0].mxu0
  %v943 = vadd.f32 0.0, %v942
  %944 = vdwg.mxu0
  %v945 = vadd.f32 %v754, %v870
  %v946 = vadd.f32 %v755, %v872
  %v947 = vadd.f32 %v756, %v941
  %v948 = vadd.f32 %v757, %v943
  %s949 = scalar_lea.vmem %s1, 32
  %v950 = vld [vmem:[%s949] sm:$0xff]
  %v952 = vsel %vm43, %v950, 0
  %954 = vmatprep.subr.mxu0 %v190
  %955 = vmatpush1.msra.mxu0 %v189
  %956 = vmatprep.subr.mxu0 0.0
  %957 = vmatpush1.msra.mxu0 0.0
  %958 = vmatprep.subr.mxu0 0.0
  %959 = vmatpush1.msra.mxu0 0.0
  %960 = vmatprep.subr.mxu0 0.0
  %961 = vmatpush1.msra.mxu0 0.0
  %962 = vmatprep.subr.mxu0 0.0
  %963 = vmatpush1.msra.mxu0 0.0
  %964 = vmatprep.subr.mxu0 0.0
  %965 = vmatpush1.msra.mxu0 0.0
  %966 = vmatprep.subr.mxu0 0.0
  %967 = vmatpush1.msra.mxu0 0.0
  %968 = vmatprep.subr.mxu0 0.0
  %969 = vmatpush1.msra.mxu0 0.0
  %970 = vmatprep.subr.mxu0 0.0
  %971 = vmatpush1.msra.mxu0 0.0
  %972 = vmatprep.subr.mxu0 0.0
  %973 = vmatpush1.msra.mxu0 0.0
  %974 = vmatprep.subr.mxu0 0.0
  %975 = vmatpush1.msra.mxu0 0.0
  %976 = vmatprep.subr.mxu0 0.0
  %977 = vmatpush1.msra.mxu0 0.0
  %978 = vmatprep.subr.mxu0 0.0
  %979 = vmatpush1.msra.mxu0 0.0
  %980 = vmatprep.subr.mxu0 0.0
  %981 = vmatpush1.msra.mxu0 0.0
  %982 = vmatprep.subr.mxu0 0.0
  %983 = vmatpush1.msra.mxu0 0.0
  %984 = vmatprep.subr.mxu0 0.0
  %985 = vmatpush1.msra.mxu0 0.0
  %986 = vmatprep.subr.mxu0 0.0
  %987 = vmatpush1.msra.mxu0 0.0
  %988 = vmatprep.subr.mxu0 0.0
  %989 = vmatpush1.msra.mxu0 0.0
  %990 = vmatprep.subr.mxu0 0.0
  %991 = vmatpush1.msra.mxu0 0.0
  %992 = vmatprep.subr.mxu0 0.0
  %993 = vmatpush1.msra.mxu0 0.0
  %994 = vmatprep.subr.mxu0 0.0
  %995 = vmatpush1.msra.mxu0 0.0
  %996 = vmatprep.subr.mxu0 0.0
  %997 = vmatpush1.msra.mxu0 0.0
  %998 = vmatprep.subr.mxu0 0.0
  %999 = vmatpush1.msra.mxu0 0.0
  %1000 = vmatprep.subr.mxu0 0.0
  %1001 = vmatpush1.msra.mxu0 0.0
  %1002 = vmatprep.subr.mxu0 0.0
  %1003 = vmatpush1.msra.mxu0 0.0
  %1004 = vmatprep.subr.mxu0 0.0
  %1005 = vmatpush1.msra.mxu0 0.0
  %1006 = vmatprep.subr.mxu0 0.0
  %1007 = vmatpush1.msra.mxu0 0.0
  %1008 = vmatprep.subr.mxu0 0.0
  %1009 = vmatpush1.msra.mxu0 0.0
  %1010 = vmatprep.subr.mxu0 0.0
  %1011 = vmatpush1.msra.mxu0 0.0
  %1012 = vmatprep.subr.mxu0 0.0
  %1013 = vmatpush1.msra.mxu0 0.0
  %1014 = vmatprep.subr.mxu0 0.0
  %1015 = vmatpush1.msra.mxu0 0.0
  %1016 = vmatprep.subr.mxu0 0.0
  %1017 = vmatpush1.msra.mxu0 0.0
  %1018 = vmatprep.mubr.f32.mxu0 0.0
  %1019 = vmatmul.mubr.f32.gmra.mrb[0].mxu0 %v952
  %v1020 = vpop.f32.mrb[0].mxu0
  %v1021 = vadd.f32 0.0, %v1020
  %v1022 = vpop.f32.mrb[0].mxu0
  %v1023 = vadd.f32 0.0, %v1022
  %1024 = vdwg.mxu0
  %1025 = vmatprep.subr.mxu0 %v192
  %1026 = vmatpush1.msra.mxu0 %v191
  %1027 = vmatprep.subr.mxu0 0.0
  %1028 = vmatpush1.msra.mxu0 0.0
  %1029 = vmatprep.subr.mxu0 0.0
  %1030 = vmatpush1.msra.mxu0 0.0
  %1031 = vmatprep.subr.mxu0 0.0
  %1032 = vmatpush1.msra.mxu0 0.0
  %1033 = vmatprep.subr.mxu0 0.0
  %1034 = vmatpush1.msra.mxu0 0.0
  %1035 = vmatprep.subr.mxu0 0.0
  %1036 = vmatpush1.msra.mxu0 0.0
  %1037 = vmatprep.subr.mxu0 0.0
  %1038 = vmatpush1.msra.mxu0 0.0
  %1039 = vmatprep.subr.mxu0 0.0
  %1040 = vmatpush1.msra.mxu0 0.0
  %1041 = vmatprep.subr.mxu0 0.0
  %1042 = vmatpush1.msra.mxu0 0.0
  %1043 = vmatprep.subr.mxu0 0.0
  %1044 = vmatpush1.msra.mxu0 0.0
  %1045 = vmatprep.subr.mxu0 0.0
  %1046 = vmatpush1.msra.mxu0 0.0
  %1047 = vmatprep.subr.mxu0 0.0
  %1048 = vmatpush1.msra.mxu0 0.0
  %1049 = vmatprep.subr.mxu0 0.0
  %1050 = vmatpush1.msra.mxu0 0.0
  %1051 = vmatprep.subr.mxu0 0.0
  %1052 = vmatpush1.msra.mxu0 0.0
  %1053 = vmatprep.subr.mxu0 0.0
  %1054 = vmatpush1.msra.mxu0 0.0
  %1055 = vmatprep.subr.mxu0 0.0
  %1056 = vmatpush1.msra.mxu0 0.0
  %1057 = vmatprep.subr.mxu0 0.0
  %1058 = vmatpush1.msra.mxu0 0.0
  %1059 = vmatprep.subr.mxu0 0.0
  %1060 = vmatpush1.msra.mxu0 0.0
  %1061 = vmatprep.subr.mxu0 0.0
  %1062 = vmatpush1.msra.mxu0 0.0
  %1063 = vmatprep.subr.mxu0 0.0
  %1064 = vmatpush1.msra.mxu0 0.0
  %1065 = vmatprep.subr.mxu0 0.0
  %1066 = vmatpush1.msra.mxu0 0.0
  %1067 = vmatprep.subr.mxu0 0.0
  %1068 = vmatpush1.msra.mxu0 0.0
  %1069 = vmatprep.subr.mxu0 0.0
  %1070 = vmatpush1.msra.mxu0 0.0
  %1071 = vmatprep.subr.mxu0 0.0
  %1072 = vmatpush1.msra.mxu0 0.0
  %1073 = vmatprep.subr.mxu0 0.0
  %1074 = vmatpush1.msra.mxu0 0.0
  %1075 = vmatprep.subr.mxu0 0.0
  %1076 = vmatpush1.msra.mxu0 0.0
  %1077 = vmatprep.subr.mxu0 0.0
  %1078 = vmatpush1.msra.mxu0 0.0
  %1079 = vmatprep.subr.mxu0 0.0
  %1080 = vmatpush1.msra.mxu0 0.0
  %1081 = vmatprep.subr.mxu0 0.0
  %1082 = vmatpush1.msra.mxu0 0.0
  %1083 = vmatprep.subr.mxu0 0.0
  %1084 = vmatpush1.msra.mxu0 0.0
  %1085 = vmatprep.subr.mxu0 0.0
  %1086 = vmatpush1.msra.mxu0 0.0
  %1087 = vmatprep.subr.mxu0 0.0
  %1088 = vmatpush1.msra.mxu0 0.0
  %1089 = vmatprep.mubr.f32.mxu0 0.0
  %1090 = vmatmul.mubr.f32.gmra.mrb[0].mxu0 %v952
  %v1091 = vpop.f32.mrb[0].mxu0
  %v1092 = vadd.f32 0.0, %v1091
  %v1093 = vpop.f32.mrb[0].mxu0
  %v1094 = vadd.f32 0.0, %v1093
  %1095 = vdwg.mxu0
  %v1096 = vadd.f32 %v945, %v1021
  %v1097 = vadd.f32 %v946, %v1023
  %v1098 = vadd.f32 %v947, %v1092
  %v1099 = vadd.f32 %v948, %v1094
  %1100 = vrot.lane.b32.xlu0 %v189, 127
  %v1101 = vpop.permute.xlu0 %1100
  %1102 = vrot.lane.b32.xlu0 %v190, 127
  %v1103 = vpop.permute.xlu0 %1102
  %1104 = vrot.lane.b32.xlu0 %v191, 127
  %v1105 = vpop.permute.xlu0 %1104
  %1106 = vrot.lane.b32.xlu0 %v192, 127
  %v1107 = vpop.permute.xlu0 %1106
  %vm1108 = vcmp.lt.s32.totalorder %v202, 127
  %v1109 = vsel %vm1108, %v1105, %v1107
  %v1110 = vsel %vm1108, %v1103, %v1105
  %v1111 = vsel %vm1108, %v1101, %v1103
  %v1112 = vsel %vm1108, %v1107, %v1101
  %s1113 = scalar_lea.vmem %s7, 5
  %v1114 = vld [vmem:[%s1113] ss:$8 sm:$0xf]
  %v1116 = vlaneseq
  %v1117 = vshrl.u32 %v1116, 7
  %v1118 = vsub.s32 0, %v1117
  %v1119 = vrot.slane %v1114, %v1118
  %v1120 = vlaneseq
  %v1121 = vshrl.u32 %v1120, 7
  %v1122 = vsub.s32 1, %v1121
  %v1123 = vrot.slane %v1114, %v1122
  %v1124 = vlaneseq
  %v1125 = vshrl.u32 %v1124, 7
  %v1126 = vsub.s32 2, %v1125
  %v1127 = vrot.slane %v1114, %v1126
  %v1128 = vlaneseq
  %v1129 = vshrl.u32 %v1128, 7
  %v1130 = vsub.s32 3, %v1129
  %v1131 = vrot.slane %v1114, %v1130
  %v1136 = vmul.f32 %v1111, %v1119
  %v1137 = vmul.f32 %v1110, %v1123
  %v1138 = vmul.f32 %v1109, %v1127
  %v1139 = vmul.f32 %v1112, %v1131
  %s1140 = scalar_lea.vmem %s1, 40
  %v1141 = vld [vmem:[%s1140] sm:$0xff]
  %v1143 = vsel %vm43, %v1141, 0
  %1145 = vmatprep.subr.mxu0 %v1137
  %1146 = vmatpush1.msra.mxu0 %v1136
  %1147 = vmatprep.subr.mxu0 0.0
  %1148 = vmatpush1.msra.mxu0 0.0
  %1149 = vmatprep.subr.mxu0 0.0
  %1150 = vmatpush1.msra.mxu0 0.0
  %1151 = vmatprep.subr.mxu0 0.0
  %1152 = vmatpush1.msra.mxu0 0.0
  %1153 = vmatprep.subr.mxu0 0.0
  %1154 = vmatpush1.msra.mxu0 0.0
  %1155 = vmatprep.subr.mxu0 0.0
  %1156 = vmatpush1.msra.mxu0 0.0
  %1157 = vmatprep.subr.mxu0 0.0
  %1158 = vmatpush1.msra.mxu0 0.0
  %1159 = vmatprep.subr.mxu0 0.0
  %1160 = vmatpush1.msra.mxu0 0.0
  %1161 = vmatprep.subr.mxu0 0.0
  %1162 = vmatpush1.msra.mxu0 0.0
  %1163 = vmatprep.subr.mxu0 0.0
  %1164 = vmatpush1.msra.mxu0 0.0
  %1165 = vmatprep.subr.mxu0 0.0
  %1166 = vmatpush1.msra.mxu0 0.0
  %1167 = vmatprep.subr.mxu0 0.0
  %1168 = vmatpush1.msra.mxu0 0.0
  %1169 = vmatprep.subr.mxu0 0.0
  %1170 = vmatpush1.msra.mxu0 0.0
  %1171 = vmatprep.subr.mxu0 0.0
  %1172 = vmatpush1.msra.mxu0 0.0
  %1173 = vmatprep.subr.mxu0 0.0
  %1174 = vmatpush1.msra.mxu0 0.0
  %1175 = vmatprep.subr.mxu0 0.0
  %1176 = vmatpush1.msra.mxu0 0.0
  %1177 = vmatprep.subr.mxu0 0.0
  %1178 = vmatpush1.msra.mxu0 0.0
  %1179 = vmatprep.subr.mxu0 0.0
  %1180 = vmatpush1.msra.mxu0 0.0
  %1181 = vmatprep.subr.mxu0 0.0
  %1182 = vmatpush1.msra.mxu0 0.0
  %1183 = vmatprep.subr.mxu0 0.0
  %1184 = vmatpush1.msra.mxu0 0.0
  %1185 = vmatprep.subr.mxu0 0.0
  %1186 = vmatpush1.msra.mxu0 0.0
  %1187 = vmatprep.subr.mxu0 0.0
  %1188 = vmatpush1.msra.mxu0 0.0
  %1189 = vmatprep.subr.mxu0 0.0
  %1190 = vmatpush1.msra.mxu0 0.0
  %1191 = vmatprep.subr.mxu0 0.0
  %1192 = vmatpush1.msra.mxu0 0.0
  %1193 = vmatprep.subr.mxu0 0.0
  %1194 = vmatpush1.msra.mxu0 0.0
  %1195 = vmatprep.subr.mxu0 0.0
  %1196 = vmatpush1.msra.mxu0 0.0
  %1197 = vmatprep.subr.mxu0 0.0
  %1198 = vmatpush1.msra.mxu0 0.0
  %1199 = vmatprep.subr.mxu0 0.0
  %1200 = vmatpush1.msra.mxu0 0.0
  %1201 = vmatprep.subr.mxu0 0.0
  %1202 = vmatpush1.msra.mxu0 0.0
  %1203 = vmatprep.subr.mxu0 0.0
  %1204 = vmatpush1.msra.mxu0 0.0
  %1205 = vmatprep.subr.mxu0 0.0
  %1206 = vmatpush1.msra.mxu0 0.0
  %1207 = vmatprep.subr.mxu0 0.0
  %1208 = vmatpush1.msra.mxu0 0.0
  %1209 = vmatprep.mubr.f32.mxu0 0.0
  %1210 = vmatmul.mubr.f32.gmra.mrb[0].mxu0 %v1143
  %v1211 = vpop.f32.mrb[0].mxu0
  %v1212 = vadd.f32 0.0, %v1211
  %v1213 = vpop.f32.mrb[0].mxu0
  %v1214 = vadd.f32 0.0, %v1213
  %1215 = vdwg.mxu0
  %1216 = vmatprep.subr.mxu0 %v1139
  %1217 = vmatpush1.msra.mxu0 %v1138
  %1218 = vmatprep.subr.mxu0 0.0
  %1219 = vmatpush1.msra.mxu0 0.0
  %1220 = vmatprep.subr.mxu0 0.0
  %1221 = vmatpush1.msra.mxu0 0.0
  %1222 = vmatprep.subr.mxu0 0.0
  %1223 = vmatpush1.msra.mxu0 0.0
  %1224 = vmatprep.subr.mxu0 0.0
  %1225 = vmatpush1.msra.mxu0 0.0
  %1226 = vmatprep.subr.mxu0 0.0
  %1227 = vmatpush1.msra.mxu0 0.0
  %1228 = vmatprep.subr.mxu0 0.0
  %1229 = vmatpush1.msra.mxu0 0.0
  %1230 = vmatprep.subr.mxu0 0.0
  %1231 = vmatpush1.msra.mxu0 0.0
  %1232 = vmatprep.subr.mxu0 0.0
  %1233 = vmatpush1.msra.mxu0 0.0
  %1234 = vmatprep.subr.mxu0 0.0
  %1235 = vmatpush1.msra.mxu0 0.0
  %1236 = vmatprep.subr.mxu0 0.0
  %1237 = vmatpush1.msra.mxu0 0.0
  %1238 = vmatprep.subr.mxu0 0.0
  %1239 = vmatpush1.msra.mxu0 0.0
  %1240 = vmatprep.subr.mxu0 0.0
  %1241 = vmatpush1.msra.mxu0 0.0
  %1242 = vmatprep.subr.mxu0 0.0
  %1243 = vmatpush1.msra.mxu0 0.0
  %1244 = vmatprep.subr.mxu0 0.0
  %1245 = vmatpush1.msra.mxu0 0.0
  %1246 = vmatprep.subr.mxu0 0.0
  %1247 = vmatpush1.msra.mxu0 0.0
  %1248 = vmatprep.subr.mxu0 0.0
  %1249 = vmatpush1.msra.mxu0 0.0
  %1250 = vmatprep.subr.mxu0 0.0
  %1251 = vmatpush1.msra.mxu0 0.0
  %1252 = vmatprep.subr.mxu0 0.0
  %1253 = vmatpush1.msra.mxu0 0.0
  %1254 = vmatprep.subr.mxu0 0.0
  %1255 = vmatpush1.msra.mxu0 0.0
  %1256 = vmatprep.subr.mxu0 0.0
  %1257 = vmatpush1.msra.mxu0 0.0
  %1258 = vmatprep.subr.mxu0 0.0
  %1259 = vmatpush1.msra.mxu0 0.0
  %1260 = vmatprep.subr.mxu0 0.0
  %1261 = vmatpush1.msra.mxu0 0.0
  %1262 = vmatprep.subr.mxu0 0.0
  %1263 = vmatpush1.msra.mxu0 0.0
  %1264 = vmatprep.subr.mxu0 0.0
  %1265 = vmatpush1.msra.mxu0 0.0
  %1266 = vmatprep.subr.mxu0 0.0
  %1267 = vmatpush1.msra.mxu0 0.0
  %1268 = vmatprep.subr.mxu0 0.0
  %1269 = vmatpush1.msra.mxu0 0.0
  %1270 = vmatprep.subr.mxu0 0.0
  %1271 = vmatpush1.msra.mxu0 0.0
  %1272 = vmatprep.subr.mxu0 0.0
  %1273 = vmatpush1.msra.mxu0 0.0
  %1274 = vmatprep.subr.mxu0 0.0
  %1275 = vmatpush1.msra.mxu0 0.0
  %1276 = vmatprep.subr.mxu0 0.0
  %1277 = vmatpush1.msra.mxu0 0.0
  %1278 = vmatprep.subr.mxu0 0.0
  %1279 = vmatpush1.msra.mxu0 0.0
  %1280 = vmatprep.mubr.f32.mxu0 0.0
  %1281 = vmatmul.mubr.f32.gmra.mrb[0].mxu0 %v1143
  %v1282 = vpop.f32.mrb[0].mxu0
  %v1283 = vadd.f32 0.0, %v1282
  %v1284 = vpop.f32.mrb[0].mxu0
  %v1285 = vadd.f32 0.0, %v1284
  %1286 = vdwg.mxu0
  %v1287 = vadd.f32 %v1096, %v1212
  %v1288 = vadd.f32 %v1097, %v1214
  %v1289 = vadd.f32 %v1098, %v1283
  %v1290 = vadd.f32 %v1099, %v1285
  %1291 = vrot.lane.b32.xlu0 %v189, 113
  %v1292 = vpop.permute.xlu0 %1291
  %1293 = vrot.lane.b32.xlu0 %v190, 113
  %v1294 = vpop.permute.xlu0 %1293
  %1295 = vrot.lane.b32.xlu0 %v191, 113
  %v1296 = vpop.permute.xlu0 %1295
  %1297 = vrot.lane.b32.xlu0 %v192, 113
  %v1298 = vpop.permute.xlu0 %1297
  %vm1299 = vcmp.lt.s32.totalorder %v202, 113
  %v1300 = vsel %vm1299, %v1296, %v1298
  %v1301 = vsel %vm1299, %v1294, %v1296
  %v1302 = vsel %vm1299, %v1292, %v1294
  %v1303 = vsel %vm1299, %v1298, %v1292
  %s1304 = scalar_lea.vmem %s7, 6
  %v1305 = vld [vmem:[%s1304] ss:$8 sm:$0xf]
  %v1307 = vlaneseq
  %v1308 = vshrl.u32 %v1307, 7
  %v1309 = vsub.s32 0, %v1308
  %v1310 = vrot.slane %v1305, %v1309
  %v1311 = vlaneseq
  %v1312 = vshrl.u32 %v1311, 7
  %v1313 = vsub.s32 1, %v1312
  %v1314 = vrot.slane %v1305, %v1313
  %v1315 = vlaneseq
  %v1316 = vshrl.u32 %v1315, 7
  %v1317 = vsub.s32 2, %v1316
  %v1318 = vrot.slane %v1305, %v1317
  %v1319 = vlaneseq
  %v1320 = vshrl.u32 %v1319, 7
  %v1321 = vsub.s32 3, %v1320
  %v1322 = vrot.slane %v1305, %v1321
  %v1327 = vmul.f32 %v1302, %v1310
  %v1328 = vmul.f32 %v1301, %v1314
  %v1329 = vmul.f32 %v1300, %v1318
  %v1330 = vmul.f32 %v1303, %v1322
  %s1331 = scalar_lea.vmem %s1, 48
  %v1332 = vld [vmem:[%s1331] sm:$0xff]
  %v1334 = vsel %vm43, %v1332, 0
  %1336 = vmatprep.subr.mxu0 %v1328
  %1337 = vmatpush1.msra.mxu0 %v1327
  %1338 = vmatprep.subr.mxu0 0.0
  %1339 = vmatpush1.msra.mxu0 0.0
  %1340 = vmatprep.subr.mxu0 0.0
  %1341 = vmatpush1.msra.mxu0 0.0
  %1342 = vmatprep.subr.mxu0 0.0
  %1343 = vmatpush1.msra.mxu0 0.0
  %1344 = vmatprep.subr.mxu0 0.0
  %1345 = vmatpush1.msra.mxu0 0.0
  %1346 = vmatprep.subr.mxu0 0.0
  %1347 = vmatpush1.msra.mxu0 0.0
  %1348 = vmatprep.subr.mxu0 0.0
  %1349 = vmatpush1.msra.mxu0 0.0
  %1350 = vmatprep.subr.mxu0 0.0
  %1351 = vmatpush1.msra.mxu0 0.0
  %1352 = vmatprep.subr.mxu0 0.0
  %1353 = vmatpush1.msra.mxu0 0.0
  %1354 = vmatprep.subr.mxu0 0.0
  %1355 = vmatpush1.msra.mxu0 0.0
  %1356 = vmatprep.subr.mxu0 0.0
  %1357 = vmatpush1.msra.mxu0 0.0
  %1358 = vmatprep.subr.mxu0 0.0
  %1359 = vmatpush1.msra.mxu0 0.0
  %1360 = vmatprep.subr.mxu0 0.0
  %1361 = vmatpush1.msra.mxu0 0.0
  %1362 = vmatprep.subr.mxu0 0.0
  %1363 = vmatpush1.msra.mxu0 0.0
  %1364 = vmatprep.subr.mxu0 0.0
  %1365 = vmatpush1.msra.mxu0 0.0
  %1366 = vmatprep.subr.mxu0 0.0
  %1367 = vmatpush1.msra.mxu0 0.0
  %1368 = vmatprep.subr.mxu0 0.0
  %1369 = vmatpush1.msra.mxu0 0.0
  %1370 = vmatprep.subr.mxu0 0.0
  %1371 = vmatpush1.msra.mxu0 0.0
  %1372 = vmatprep.subr.mxu0 0.0
  %1373 = vmatpush1.msra.mxu0 0.0
  %1374 = vmatprep.subr.mxu0 0.0
  %1375 = vmatpush1.msra.mxu0 0.0
  %1376 = vmatprep.subr.mxu0 0.0
  %1377 = vmatpush1.msra.mxu0 0.0
  %1378 = vmatprep.subr.mxu0 0.0
  %1379 = vmatpush1.msra.mxu0 0.0
  %1380 = vmatprep.subr.mxu0 0.0
  %1381 = vmatpush1.msra.mxu0 0.0
  %1382 = vmatprep.subr.mxu0 0.0
  %1383 = vmatpush1.msra.mxu0 0.0
  %1384 = vmatprep.subr.mxu0 0.0
  %1385 = vmatpush1.msra.mxu0 0.0
  %1386 = vmatprep.subr.mxu0 0.0
  %1387 = vmatpush1.msra.mxu0 0.0
  %1388 = vmatprep.subr.mxu0 0.0
  %1389 = vmatpush1.msra.mxu0 0.0
  %1390 = vmatprep.subr.mxu0 0.0
  %1391 = vmatpush1.msra.mxu0 0.0
  %1392 = vmatprep.subr.mxu0 0.0
  %1393 = vmatpush1.msra.mxu0 0.0
  %1394 = vmatprep.subr.mxu0 0.0
  %1395 = vmatpush1.msra.mxu0 0.0
  %1396 = vmatprep.subr.mxu0 0.0
  %1397 = vmatpush1.msra.mxu0 0.0
  %1398 = vmatprep.subr.mxu0 0.0
  %1399 = vmatpush1.msra.mxu0 0.0
  %1400 = vmatprep.mubr.f32.mxu0 0.0
  %1401 = vmatmul.mubr.f32.gmra.mrb[0].mxu0 %v1334
  %v1402 = vpop.f32.mrb[0].mxu0
  %v1403 = vadd.f32 0.0, %v1402
  %v1404 = vpop.f32.mrb[0].mxu0
  %v1405 = vadd.f32 0.0, %v1404
  %1406 = vdwg.mxu0
  %1407 = vmatprep.subr.mxu0 %v1330
  %1408 = vmatpush1.msra.mxu0 %v1329
  %1409 = vmatprep.subr.mxu0 0.0
  %1410 = vmatpush1.msra.mxu0 0.0
  %1411 = vmatprep.subr.mxu0 0.0
  %1412 = vmatpush1.msra.mxu0 0.0
  %1413 = vmatprep.subr.mxu0 0.0
  %1414 = vmatpush1.msra.mxu0 0.0
  %1415 = vmatprep.subr.mxu0 0.0
  %1416 = vmatpush1.msra.mxu0 0.0
  %1417 = vmatprep.subr.mxu0 0.0
  %1418 = vmatpush1.msra.mxu0 0.0
  %1419 = vmatprep.subr.mxu0 0.0
  %1420 = vmatpush1.msra.mxu0 0.0
  %1421 = vmatprep.subr.mxu0 0.0
  %1422 = vmatpush1.msra.mxu0 0.0
  %1423 = vmatprep.subr.mxu0 0.0
  %1424 = vmatpush1.msra.mxu0 0.0
  %1425 = vmatprep.subr.mxu0 0.0
  %1426 = vmatpush1.msra.mxu0 0.0
  %1427 = vmatprep.subr.mxu0 0.0
  %1428 = vmatpush1.msra.mxu0 0.0
  %1429 = vmatprep.subr.mxu0 0.0
  %1430 = vmatpush1.msra.mxu0 0.0
  %1431 = vmatprep.subr.mxu0 0.0
  %1432 = vmatpush1.msra.mxu0 0.0
  %1433 = vmatprep.subr.mxu0 0.0
  %1434 = vmatpush1.msra.mxu0 0.0
  %1435 = vmatprep.subr.mxu0 0.0
  %1436 = vmatpush1.msra.mxu0 0.0
  %1437 = vmatprep.subr.mxu0 0.0
  %1438 = vmatpush1.msra.mxu0 0.0
  %1439 = vmatprep.subr.mxu0 0.0
  %1440 = vmatpush1.msra.mxu0 0.0
  %1441 = vmatprep.subr.mxu0 0.0
  %1442 = vmatpush1.msra.mxu0 0.0
  %1443 = vmatprep.subr.mxu0 0.0
  %1444 = vmatpush1.msra.mxu0 0.0
  %1445 = vmatprep.subr.mxu0 0.0
  %1446 = vmatpush1.msra.mxu0 0.0
  %1447 = vmatprep.subr.mxu0 0.0
  %1448 = vmatpush1.msra.mxu0 0.0
  %1449 = vmatprep.subr.mxu0 0.0
  %1450 = vmatpush1.msra.mxu0 0.0
  %1451 = vmatprep.subr.mxu0 0.0
  %1452 = vmatpush1.msra.mxu0 0.0
  %1453 = vmatprep.subr.mxu0 0.0
  %1454 = vmatpush1.msra.mxu0 0.0
  %1455 = vmatprep.subr.mxu0 0.0
  %1456 = vmatpush1.msra.mxu0 0.0
  %1457 = vmatprep.subr.mxu0 0.0
  %1458 = vmatpush1.msra.mxu0 0.0
  %1459 = vmatprep.subr.mxu0 0.0
  %1460 = vmatpush1.msra.mxu0 0.0
  %1461 = vmatprep.subr.mxu0 0.0
  %1462 = vmatpush1.msra.mxu0 0.0
  %1463 = vmatprep.subr.mxu0 0.0
  %1464 = vmatpush1.msra.mxu0 0.0
  %1465 = vmatprep.subr.mxu0 0.0
  %1466 = vmatpush1.msra.mxu0 0.0
  %1467 = vmatprep.subr.mxu0 0.0
  %1468 = vmatpush1.msra.mxu0 0.0
  %1469 = vmatprep.subr.mxu0 0.0
  %1470 = vmatpush1.msra.mxu0 0.0
  %1471 = vmatprep.mubr.f32.mxu0 0.0
  %1472 = vmatmul.mubr.f32.gmra.mrb[0].mxu0 %v1334
  %v1473 = vpop.f32.mrb[0].mxu0
  %v1474 = vadd.f32 0.0, %v1473
  %v1475 = vpop.f32.mrb[0].mxu0
  %v1476 = vadd.f32 0.0, %v1475
  %1477 = vdwg.mxu0
  %v1478 = vadd.f32 %v1287, %v1403
  %v1479 = vadd.f32 %v1288, %v1405
  %v1480 = vadd.f32 %v1289, %v1474
  %v1481 = vadd.f32 %v1290, %v1476
  %1482 = vrot.lane.b32.xlu0 %v189, 112
  %v1483 = vpop.permute.xlu0 %1482
  %1484 = vrot.lane.b32.xlu0 %v190, 112
  %v1485 = vpop.permute.xlu0 %1484
  %1486 = vrot.lane.b32.xlu0 %v191, 112
  %v1487 = vpop.permute.xlu0 %1486
  %1488 = vrot.lane.b32.xlu0 %v192, 112
  %v1489 = vpop.permute.xlu0 %1488
  %vm1490 = vcmp.lt.s32.totalorder %v202, 112
  %v1491 = vsel %vm1490, %v1487, %v1489
  %v1492 = vsel %vm1490, %v1485, %v1487
  %v1493 = vsel %vm1490, %v1483, %v1485
  %v1494 = vsel %vm1490, %v1489, %v1483
  %s1495 = scalar_lea.vmem %s7, 7
  %v1496 = vld [vmem:[%s1495] ss:$8 sm:$0xf]
  %v1498 = vlaneseq
  %v1499 = vshrl.u32 %v1498, 7
  %v1500 = vsub.s32 0, %v1499
  %v1501 = vrot.slane %v1496, %v1500
  %v1502 = vlaneseq
  %v1503 = vshrl.u32 %v1502, 7
  %v1504 = vsub.s32 1, %v1503
  %v1505 = vrot.slane %v1496, %v1504
  %v1506 = vlaneseq
  %v1507 = vshrl.u32 %v1506, 7
  %v1508 = vsub.s32 2, %v1507
  %v1509 = vrot.slane %v1496, %v1508
  %v1510 = vlaneseq
  %v1511 = vshrl.u32 %v1510, 7
  %v1512 = vsub.s32 3, %v1511
  %v1513 = vrot.slane %v1496, %v1512
  %v1518 = vmul.f32 %v1493, %v1501
  %v1519 = vmul.f32 %v1492, %v1505
  %v1520 = vmul.f32 %v1491, %v1509
  %v1521 = vmul.f32 %v1494, %v1513
  %s1522 = scalar_lea.vmem %s1, 56
  %v1523 = vld [vmem:[%s1522] sm:$0xff]
  %v1525 = vsel %vm43, %v1523, 0
  %1527 = vmatprep.subr.mxu0 %v1519
  %1528 = vmatpush1.msra.mxu0 %v1518
  %1529 = vmatprep.subr.mxu0 0.0
  %1530 = vmatpush1.msra.mxu0 0.0
  %1531 = vmatprep.subr.mxu0 0.0
  %1532 = vmatpush1.msra.mxu0 0.0
  %1533 = vmatprep.subr.mxu0 0.0
  %1534 = vmatpush1.msra.mxu0 0.0
  %1535 = vmatprep.subr.mxu0 0.0
  %1536 = vmatpush1.msra.mxu0 0.0
  %1537 = vmatprep.subr.mxu0 0.0
  %1538 = vmatpush1.msra.mxu0 0.0
  %1539 = vmatprep.subr.mxu0 0.0
  %1540 = vmatpush1.msra.mxu0 0.0
  %1541 = vmatprep.subr.mxu0 0.0
  %1542 = vmatpush1.msra.mxu0 0.0
  %1543 = vmatprep.subr.mxu0 0.0
  %1544 = vmatpush1.msra.mxu0 0.0
  %1545 = vmatprep.subr.mxu0 0.0
  %1546 = vmatpush1.msra.mxu0 0.0
  %1547 = vmatprep.subr.mxu0 0.0
  %1548 = vmatpush1.msra.mxu0 0.0
  %1549 = vmatprep.subr.mxu0 0.0
  %1550 = vmatpush1.msra.mxu0 0.0
  %1551 = vmatprep.subr.mxu0 0.0
  %1552 = vmatpush1.msra.mxu0 0.0
  %1553 = vmatprep.subr.mxu0 0.0
  %1554 = vmatpush1.msra.mxu0 0.0
  %1555 = vmatprep.subr.mxu0 0.0
  %1556 = vmatpush1.msra.mxu0 0.0
  %1557 = vmatprep.subr.mxu0 0.0
  %1558 = vmatpush1.msra.mxu0 0.0
  %1559 = vmatprep.subr.mxu0 0.0
  %1560 = vmatpush1.msra.mxu0 0.0
  %1561 = vmatprep.subr.mxu0 0.0
  %1562 = vmatpush1.msra.mxu0 0.0
  %1563 = vmatprep.subr.mxu0 0.0
  %1564 = vmatpush1.msra.mxu0 0.0
  %1565 = vmatprep.subr.mxu0 0.0
  %1566 = vmatpush1.msra.mxu0 0.0
  %1567 = vmatprep.subr.mxu0 0.0
  %1568 = vmatpush1.msra.mxu0 0.0
  %1569 = vmatprep.subr.mxu0 0.0
  %1570 = vmatpush1.msra.mxu0 0.0
  %1571 = vmatprep.subr.mxu0 0.0
  %1572 = vmatpush1.msra.mxu0 0.0
  %1573 = vmatprep.subr.mxu0 0.0
  %1574 = vmatpush1.msra.mxu0 0.0
  %1575 = vmatprep.subr.mxu0 0.0
  %1576 = vmatpush1.msra.mxu0 0.0
  %1577 = vmatprep.subr.mxu0 0.0
  %1578 = vmatpush1.msra.mxu0 0.0
  %1579 = vmatprep.subr.mxu0 0.0
  %1580 = vmatpush1.msra.mxu0 0.0
  %1581 = vmatprep.subr.mxu0 0.0
  %1582 = vmatpush1.msra.mxu0 0.0
  %1583 = vmatprep.subr.mxu0 0.0
  %1584 = vmatpush1.msra.mxu0 0.0
  %1585 = vmatprep.subr.mxu0 0.0
  %1586 = vmatpush1.msra.mxu0 0.0
  %1587 = vmatprep.subr.mxu0 0.0
  %1588 = vmatpush1.msra.mxu0 0.0
  %1589 = vmatprep.subr.mxu0 0.0
  %1590 = vmatpush1.msra.mxu0 0.0
  %1591 = vmatprep.mubr.f32.mxu0 0.0
  %1592 = vmatmul.mubr.f32.gmra.mrb[0].mxu0 %v1525
  %v1593 = vpop.f32.mrb[0].mxu0
  %v1594 = vadd.f32 0.0, %v1593
  %v1595 = vpop.f32.mrb[0].mxu0
  %v1596 = vadd.f32 0.0, %v1595
  %1597 = vdwg.mxu0
  %1598 = vmatprep.subr.mxu0 %v1521
  %1599 = vmatpush1.msra.mxu0 %v1520
  %1600 = vmatprep.subr.mxu0 0.0
  %1601 = vmatpush1.msra.mxu0 0.0
  %1602 = vmatprep.subr.mxu0 0.0
  %1603 = vmatpush1.msra.mxu0 0.0
  %1604 = vmatprep.subr.mxu0 0.0
  %1605 = vmatpush1.msra.mxu0 0.0
  %1606 = vmatprep.subr.mxu0 0.0
  %1607 = vmatpush1.msra.mxu0 0.0
  %1608 = vmatprep.subr.mxu0 0.0
  %1609 = vmatpush1.msra.mxu0 0.0
  %1610 = vmatprep.subr.mxu0 0.0
  %1611 = vmatpush1.msra.mxu0 0.0
  %1612 = vmatprep.subr.mxu0 0.0
  %1613 = vmatpush1.msra.mxu0 0.0
  %1614 = vmatprep.subr.mxu0 0.0
  %1615 = vmatpush1.msra.mxu0 0.0
  %1616 = vmatprep.subr.mxu0 0.0
  %1617 = vmatpush1.msra.mxu0 0.0
  %1618 = vmatprep.subr.mxu0 0.0
  %1619 = vmatpush1.msra.mxu0 0.0
  %1620 = vmatprep.subr.mxu0 0.0
  %1621 = vmatpush1.msra.mxu0 0.0
  %1622 = vmatprep.subr.mxu0 0.0
  %1623 = vmatpush1.msra.mxu0 0.0
  %1624 = vmatprep.subr.mxu0 0.0
  %1625 = vmatpush1.msra.mxu0 0.0
  %1626 = vmatprep.subr.mxu0 0.0
  %1627 = vmatpush1.msra.mxu0 0.0
  %1628 = vmatprep.subr.mxu0 0.0
  %1629 = vmatpush1.msra.mxu0 0.0
  %1630 = vmatprep.subr.mxu0 0.0
  %1631 = vmatpush1.msra.mxu0 0.0
  %1632 = vmatprep.subr.mxu0 0.0
  %1633 = vmatpush1.msra.mxu0 0.0
  %1634 = vmatprep.subr.mxu0 0.0
  %1635 = vmatpush1.msra.mxu0 0.0
  %1636 = vmatprep.subr.mxu0 0.0
  %1637 = vmatpush1.msra.mxu0 0.0
  %1638 = vmatprep.subr.mxu0 0.0
  %1639 = vmatpush1.msra.mxu0 0.0
  %1640 = vmatprep.subr.mxu0 0.0
  %1641 = vmatpush1.msra.mxu0 0.0
  %1642 = vmatprep.subr.mxu0 0.0
  %1643 = vmatpush1.msra.mxu0 0.0
  %1644 = vmatprep.subr.mxu0 0.0
  %1645 = vmatpush1.msra.mxu0 0.0
  %1646 = vmatprep.subr.mxu0 0.0
  %1647 = vmatpush1.msra.mxu0 0.0
  %1648 = vmatprep.subr.mxu0 0.0
  %1649 = vmatpush1.msra.mxu0 0.0
  %1650 = vmatprep.subr.mxu0 0.0
  %1651 = vmatpush1.msra.mxu0 0.0
  %1652 = vmatprep.subr.mxu0 0.0
  %1653 = vmatpush1.msra.mxu0 0.0
  %1654 = vmatprep.subr.mxu0 0.0
  %1655 = vmatpush1.msra.mxu0 0.0
  %1656 = vmatprep.subr.mxu0 0.0
  %1657 = vmatpush1.msra.mxu0 0.0
  %1658 = vmatprep.subr.mxu0 0.0
  %1659 = vmatpush1.msra.mxu0 0.0
  %1660 = vmatprep.subr.mxu0 0.0
  %1661 = vmatpush1.msra.mxu0 0.0
  %1662 = vmatprep.mubr.f32.mxu0 0.0
  %1663 = vmatmul.mubr.f32.gmra.mrb[0].mxu0 %v1525
  %v1664 = vpop.f32.mrb[0].mxu0
  %v1665 = vadd.f32 0.0, %v1664
  %v1666 = vpop.f32.mrb[0].mxu0
  %v1667 = vadd.f32 0.0, %v1666
  %1668 = vdwg.mxu0
  %v1669 = vadd.f32 %v1478, %v1594
  %v1670 = vadd.f32 %v1479, %v1596
  %v1671 = vadd.f32 %v1480, %v1665
  %v1672 = vadd.f32 %v1481, %v1667
  %1673 = vrot.lane.b32.xlu0 %v189, 111
  %v1674 = vpop.permute.xlu0 %1673
  %1675 = vrot.lane.b32.xlu0 %v190, 111
  %v1676 = vpop.permute.xlu0 %1675
  %1677 = vrot.lane.b32.xlu0 %v191, 111
  %v1678 = vpop.permute.xlu0 %1677
  %1679 = vrot.lane.b32.xlu0 %v192, 111
  %v1680 = vpop.permute.xlu0 %1679
  %vm1681 = vcmp.lt.s32.totalorder %v202, 111
  %v1682 = vsel %vm1681, %v1678, %v1680
  %v1683 = vsel %vm1681, %v1676, %v1678
  %v1684 = vsel %vm1681, %v1674, %v1676
  %v1685 = vsel %vm1681, %v1680, %v1674
  %s1686 = scalar_lea.vmem %s7, 32
  %v1687 = vld [vmem:[%s1686] ss:$8 sm:$0xf]
  %v1689 = vlaneseq
  %v1690 = vshrl.u32 %v1689, 7
  %v1691 = vsub.s32 0, %v1690
  %v1692 = vrot.slane %v1687, %v1691
  %v1693 = vlaneseq
  %v1694 = vshrl.u32 %v1693, 7
  %v1695 = vsub.s32 1, %v1694
  %v1696 = vrot.slane %v1687, %v1695
  %v1697 = vlaneseq
  %v1698 = vshrl.u32 %v1697, 7
  %v1699 = vsub.s32 2, %v1698
  %v1700 = vrot.slane %v1687, %v1699
  %v1701 = vlaneseq
  %v1702 = vshrl.u32 %v1701, 7
  %v1703 = vsub.s32 3, %v1702
  %v1704 = vrot.slane %v1687, %v1703
  %v1709 = vmul.f32 %v1684, %v1692
  %v1710 = vmul.f32 %v1683, %v1696
  %v1711 = vmul.f32 %v1682, %v1700
  %v1712 = vmul.f32 %v1685, %v1704
  %s1713 = scalar_lea.vmem %s1, 64
  %v1714 = vld [vmem:[%s1713] sm:$0xff]
  %v1716 = vsel %vm43, %v1714, 0
  %1718 = vmatprep.subr.mxu0 %v1710
  %1719 = vmatpush1.msra.mxu0 %v1709
  %1720 = vmatprep.subr.mxu0 0.0
  %1721 = vmatpush1.msra.mxu0 0.0
  %1722 = vmatprep.subr.mxu0 0.0
  %1723 = vmatpush1.msra.mxu0 0.0
  %1724 = vmatprep.subr.mxu0 0.0
  %1725 = vmatpush1.msra.mxu0 0.0
  %1726 = vmatprep.subr.mxu0 0.0
  %1727 = vmatpush1.msra.mxu0 0.0
  %1728 = vmatprep.subr.mxu0 0.0
  %1729 = vmatpush1.msra.mxu0 0.0
  %1730 = vmatprep.subr.mxu0 0.0
  %1731 = vmatpush1.msra.mxu0 0.0
  %1732 = vmatprep.subr.mxu0 0.0
  %1733 = vmatpush1.msra.mxu0 0.0
  %1734 = vmatprep.subr.mxu0 0.0
  %1735 = vmatpush1.msra.mxu0 0.0
  %1736 = vmatprep.subr.mxu0 0.0
  %1737 = vmatpush1.msra.mxu0 0.0
  %1738 = vmatprep.subr.mxu0 0.0
  %1739 = vmatpush1.msra.mxu0 0.0
  %1740 = vmatprep.subr.mxu0 0.0
  %1741 = vmatpush1.msra.mxu0 0.0
  %1742 = vmatprep.subr.mxu0 0.0
  %1743 = vmatpush1.msra.mxu0 0.0
  %1744 = vmatprep.subr.mxu0 0.0
  %1745 = vmatpush1.msra.mxu0 0.0
  %1746 = vmatprep.subr.mxu0 0.0
  %1747 = vmatpush1.msra.mxu0 0.0
  %1748 = vmatprep.subr.mxu0 0.0
  %1749 = vmatpush1.msra.mxu0 0.0
  %1750 = vmatprep.subr.mxu0 0.0
  %1751 = vmatpush1.msra.mxu0 0.0
  %1752 = vmatprep.subr.mxu0 0.0
  %1753 = vmatpush1.msra.mxu0 0.0
  %1754 = vmatprep.subr.mxu0 0.0
  %1755 = vmatpush1.msra.mxu0 0.0
  %1756 = vmatprep.subr.mxu0 0.0
  %1757 = vmatpush1.msra.mxu0 0.0
  %1758 = vmatprep.subr.mxu0 0.0
  %1759 = vmatpush1.msra.mxu0 0.0
  %1760 = vmatprep.subr.mxu0 0.0
  %1761 = vmatpush1.msra.mxu0 0.0
  %1762 = vmatprep.subr.mxu0 0.0
  %1763 = vmatpush1.msra.mxu0 0.0
  %1764 = vmatprep.subr.mxu0 0.0
  %1765 = vmatpush1.msra.mxu0 0.0
  %1766 = vmatprep.subr.mxu0 0.0
  %1767 = vmatpush1.msra.mxu0 0.0
  %1768 = vmatprep.subr.mxu0 0.0
  %1769 = vmatpush1.msra.mxu0 0.0
  %1770 = vmatprep.subr.mxu0 0.0
  %1771 = vmatpush1.msra.mxu0 0.0
  %1772 = vmatprep.subr.mxu0 0.0
  %1773 = vmatpush1.msra.mxu0 0.0
  %1774 = vmatprep.subr.mxu0 0.0
  %1775 = vmatpush1.msra.mxu0 0.0
  %1776 = vmatprep.subr.mxu0 0.0
  %1777 = vmatpush1.msra.mxu0 0.0
  %1778 = vmatprep.subr.mxu0 0.0
  %1779 = vmatpush1.msra.mxu0 0.0
  %1780 = vmatprep.subr.mxu0 0.0
  %1781 = vmatpush1.msra.mxu0 0.0
  %1782 = vmatprep.mubr.f32.mxu0 0.0
  %1783 = vmatmul.mubr.f32.gmra.mrb[0].mxu0 %v1716
  %v1784 = vpop.f32.mrb[0].mxu0
  %v1785 = vadd.f32 0.0, %v1784
  %v1786 = vpop.f32.mrb[0].mxu0
  %v1787 = vadd.f32 0.0, %v1786
  %1788 = vdwg.mxu0
  %1789 = vmatprep.subr.mxu0 %v1712
  %1790 = vmatpush1.msra.mxu0 %v1711
  %1791 = vmatprep.subr.mxu0 0.0
  %1792 = vmatpush1.msra.mxu0 0.0
  %1793 = vmatprep.subr.mxu0 0.0
  %1794 = vmatpush1.msra.mxu0 0.0
  %1795 = vmatprep.subr.mxu0 0.0
  %1796 = vmatpush1.msra.mxu0 0.0
  %1797 = vmatprep.subr.mxu0 0.0
  %1798 = vmatpush1.msra.mxu0 0.0
  %1799 = vmatprep.subr.mxu0 0.0
  %1800 = vmatpush1.msra.mxu0 0.0
  %1801 = vmatprep.subr.mxu0 0.0
  %1802 = vmatpush1.msra.mxu0 0.0
  %1803 = vmatprep.subr.mxu0 0.0
  %1804 = vmatpush1.msra.mxu0 0.0
  %1805 = vmatprep.subr.mxu0 0.0
  %1806 = vmatpush1.msra.mxu0 0.0
  %1807 = vmatprep.subr.mxu0 0.0
  %1808 = vmatpush1.msra.mxu0 0.0
  %1809 = vmatprep.subr.mxu0 0.0
  %1810 = vmatpush1.msra.mxu0 0.0
  %1811 = vmatprep.subr.mxu0 0.0
  %1812 = vmatpush1.msra.mxu0 0.0
  %1813 = vmatprep.subr.mxu0 0.0
  %1814 = vmatpush1.msra.mxu0 0.0
  %1815 = vmatprep.subr.mxu0 0.0
  %1816 = vmatpush1.msra.mxu0 0.0
  %1817 = vmatprep.subr.mxu0 0.0
  %1818 = vmatpush1.msra.mxu0 0.0
  %1819 = vmatprep.subr.mxu0 0.0
  %1820 = vmatpush1.msra.mxu0 0.0
  %1821 = vmatprep.subr.mxu0 0.0
  %1822 = vmatpush1.msra.mxu0 0.0
  %1823 = vmatprep.subr.mxu0 0.0
  %1824 = vmatpush1.msra.mxu0 0.0
  %1825 = vmatprep.subr.mxu0 0.0
  %1826 = vmatpush1.msra.mxu0 0.0
  %1827 = vmatprep.subr.mxu0 0.0
  %1828 = vmatpush1.msra.mxu0 0.0
  %1829 = vmatprep.subr.mxu0 0.0
  %1830 = vmatpush1.msra.mxu0 0.0
  %1831 = vmatprep.subr.mxu0 0.0
  %1832 = vmatpush1.msra.mxu0 0.0
  %1833 = vmatprep.subr.mxu0 0.0
  %1834 = vmatpush1.msra.mxu0 0.0
  %1835 = vmatprep.subr.mxu0 0.0
  %1836 = vmatpush1.msra.mxu0 0.0
  %1837 = vmatprep.subr.mxu0 0.0
  %1838 = vmatpush1.msra.mxu0 0.0
  %1839 = vmatprep.subr.mxu0 0.0
  %1840 = vmatpush1.msra.mxu0 0.0
  %1841 = vmatprep.subr.mxu0 0.0
  %1842 = vmatpush1.msra.mxu0 0.0
  %1843 = vmatprep.subr.mxu0 0.0
  %1844 = vmatpush1.msra.mxu0 0.0
  %1845 = vmatprep.subr.mxu0 0.0
  %1846 = vmatpush1.msra.mxu0 0.0
  %1847 = vmatprep.subr.mxu0 0.0
  %1848 = vmatpush1.msra.mxu0 0.0
  %1849 = vmatprep.subr.mxu0 0.0
  %1850 = vmatpush1.msra.mxu0 0.0
  %1851 = vmatprep.subr.mxu0 0.0
  %1852 = vmatpush1.msra.mxu0 0.0
  %1853 = vmatprep.mubr.f32.mxu0 0.0
  %1854 = vmatmul.mubr.f32.gmra.mrb[0].mxu0 %v1716
  %v1855 = vpop.f32.mrb[0].mxu0
  %v1856 = vadd.f32 0.0, %v1855
  %v1857 = vpop.f32.mrb[0].mxu0
  %v1858 = vadd.f32 0.0, %v1857
  %1859 = vdwg.mxu0
  %v1860 = vadd.f32 %v1669, %v1785
  %v1861 = vadd.f32 %v1670, %v1787
  %v1862 = vadd.f32 %v1671, %v1856
  %v1863 = vadd.f32 %v1672, %v1858
  %v1864 = vld [vmem:[%s2] sm:$0xff]
  %1866 = vset.pattern.permute.xlu0 0
  %1867 = vperm.xlu0 %1866, %v1864
  %v1868 = vpop.permute.xlu0 %1867
  %v1870 = vadd.f32 %v1860, %v1868
  %v1871 = vadd.f32 %v1861, %v1868
  %v1872 = vadd.f32 %v1862, %v1868
  %v1873 = vadd.f32 %v1863, %v1868
  %v1874 = vmax.f32 %v1870, 0.0
  %v1875 = vmax.f32 %v1871, 0.0
  %v1876 = vmax.f32 %v1872, 0.0
  %v1877 = vmax.f32 %v1873, 0.0
  %1878 = vrot.lane.b32.xlu0 %v1874, 17
  %v1879 = vpop.permute.xlu0 %1878
  %1880 = vrot.lane.b32.xlu0 %v1875, 17
  %v1881 = vpop.permute.xlu0 %1880
  %1882 = vrot.lane.b32.xlu0 %v1876, 17
  %v1883 = vpop.permute.xlu0 %1882
  %1884 = vrot.lane.b32.xlu0 %v1877, 17
  %v1885 = vpop.permute.xlu0 %1884
  %v1886 = vsel %vm203, %v1883, %v1885
  %v1887 = vsel %vm203, %v1881, %v1883
  %v1888 = vsel %vm203, %v1879, %v1881
  %v1889 = vsel %vm203, %v1885, %v1879
  %v1890 = vmul.f32 %v1889, %v213
  %v1891 = vmul.f32 %v1888, %v217
  %v1892 = vmul.f32 %v1887, %v221
  %v1893 = vmul.f32 %v1886, %v225
  %v1894 = vld [vmem:[%s3] sm:$0xff]
  %1895 = vrot.lane.b32.xlu0 %v1874, 16
  %v1896 = vpop.permute.xlu0 %1895
  %1897 = vrot.lane.b32.xlu0 %v1875, 16
  %v1898 = vpop.permute.xlu0 %1897
  %1899 = vrot.lane.b32.xlu0 %v1876, 16
  %v1900 = vpop.permute.xlu0 %1899
  %1901 = vrot.lane.b32.xlu0 %v1877, 16
  %v1902 = vpop.permute.xlu0 %1901
  %v1903 = vsel %vm243, %v1900, %v1902
  %v1904 = vsel %vm243, %v1898, %v1900
  %v1905 = vsel %vm243, %v1896, %v1898
  %v1906 = vsel %vm243, %v1902, %v1896
  %v1907 = vmul.f32 %v1906, %v254
  %v1908 = vmul.f32 %v1905, %v258
  %v1909 = vmul.f32 %v1904, %v262
  %v1910 = vmul.f32 %v1903, %v266
  %s1911 = scalar_lea.vmem %s3, 8
  %v1912 = vld [vmem:[%s1911] sm:$0xff]
  %v1914 = vsel %vm43, %v1912, 0
  %1916 = vmatprep.subr.mxu0 %v1908
  %1917 = vmatpush1.msra.mxu0 %v1907
  %1918 = vmatprep.subr.mxu0 0.0
  %1919 = vmatpush1.msra.mxu0 0.0
  %1920 = vmatprep.subr.mxu0 0.0
  %1921 = vmatpush1.msra.mxu0 0.0
  %1922 = vmatprep.subr.mxu0 0.0
  %1923 = vmatpush1.msra.mxu0 0.0
  %1924 = vmatprep.subr.mxu0 0.0
  %1925 = vmatpush1.msra.mxu0 0.0
  %1926 = vmatprep.subr.mxu0 0.0
  %1927 = vmatpush1.msra.mxu0 0.0
  %1928 = vmatprep.subr.mxu0 0.0
  %1929 = vmatpush1.msra.mxu0 0.0
  %1930 = vmatprep.subr.mxu0 0.0
  %1931 = vmatpush1.msra.mxu0 0.0
  %1932 = vmatprep.subr.mxu0 0.0
  %1933 = vmatpush1.msra.mxu0 0.0
  %1934 = vmatprep.subr.mxu0 0.0
  %1935 = vmatpush1.msra.mxu0 0.0
  %1936 = vmatprep.subr.mxu0 0.0
  %1937 = vmatpush1.msra.mxu0 0.0
  %1938 = vmatprep.subr.mxu0 0.0
  %1939 = vmatpush1.msra.mxu0 0.0
  %1940 = vmatprep.subr.mxu0 0.0
  %1941 = vmatpush1.msra.mxu0 0.0
  %1942 = vmatprep.subr.mxu0 0.0
  %1943 = vmatpush1.msra.mxu0 0.0
  %1944 = vmatprep.subr.mxu0 0.0
  %1945 = vmatpush1.msra.mxu0 0.0
  %1946 = vmatprep.subr.mxu0 0.0
  %1947 = vmatpush1.msra.mxu0 0.0
  %1948 = vmatprep.subr.mxu0 0.0
  %1949 = vmatpush1.msra.mxu0 0.0
  %1950 = vmatprep.subr.mxu0 0.0
  %1951 = vmatpush1.msra.mxu0 0.0
  %1952 = vmatprep.subr.mxu0 0.0
  %1953 = vmatpush1.msra.mxu0 0.0
  %1954 = vmatprep.subr.mxu0 0.0
  %1955 = vmatpush1.msra.mxu0 0.0
  %1956 = vmatprep.subr.mxu0 0.0
  %1957 = vmatpush1.msra.mxu0 0.0
  %1958 = vmatprep.subr.mxu0 0.0
  %1959 = vmatpush1.msra.mxu0 0.0
  %1960 = vmatprep.subr.mxu0 0.0
  %1961 = vmatpush1.msra.mxu0 0.0
  %1962 = vmatprep.subr.mxu0 0.0
  %1963 = vmatpush1.msra.mxu0 0.0
  %1964 = vmatprep.subr.mxu0 0.0
  %1965 = vmatpush1.msra.mxu0 0.0
  %1966 = vmatprep.subr.mxu0 0.0
  %1967 = vmatpush1.msra.mxu0 0.0
  %1968 = vmatprep.subr.mxu0 0.0
  %1969 = vmatpush1.msra.mxu0 0.0
  %1970 = vmatprep.subr.mxu0 0.0
  %1971 = vmatpush1.msra.mxu0 0.0
  %1972 = vmatprep.subr.mxu0 0.0
  %1973 = vmatpush1.msra.mxu0 0.0
  %1974 = vmatprep.subr.mxu0 0.0
  %1975 = vmatpush1.msra.mxu0 0.0
  %1976 = vmatprep.subr.mxu0 0.0
  %1977 = vmatpush1.msra.mxu0 0.0
  %1978 = vmatprep.subr.mxu0 0.0
  %1979 = vmatpush1.msra.mxu0 0.0
  %1980 = vmatprep.mubr.f32.mxu0 0.0
  %1981 = vmatmul.mubr.f32.gmra.mrb[0].mxu0 %v1914
  %v1982 = vpop.f32.mrb[0].mxu0
  %v1983 = vadd.f32 0.0, %v1982
  %v1984 = vpop.f32.mrb[0].mxu0
  %v1985 = vadd.f32 0.0, %v1984
  %1986 = vdwg.mxu0
  %1987 = vmatprep.subr.mxu0 %v1910
  %1988 = vmatpush1.msra.mxu0 %v1909
  %1989 = vmatprep.subr.mxu0 0.0
  %1990 = vmatpush1.msra.mxu0 0.0
  %1991 = vmatprep.subr.mxu0 0.0
  %1992 = vmatpush1.msra.mxu0 0.0
  %1993 = vmatprep.subr.mxu0 0.0
  %1994 = vmatpush1.msra.mxu0 0.0
  %1995 = vmatprep.subr.mxu0 0.0
  %1996 = vmatpush1.msra.mxu0 0.0
  %1997 = vmatprep.subr.mxu0 0.0
  %1998 = vmatpush1.msra.mxu0 0.0
  %1999 = vmatprep.subr.mxu0 0.0
  %2000 = vmatpush1.msra.mxu0 0.0
  %2001 = vmatprep.subr.mxu0 0.0
  %2002 = vmatpush1.msra.mxu0 0.0
  %2003 = vmatprep.subr.mxu0 0.0
  %2004 = vmatpush1.msra.mxu0 0.0
  %2005 = vmatprep.subr.mxu0 0.0
  %2006 = vmatpush1.msra.mxu0 0.0
  %2007 = vmatprep.subr.mxu0 0.0
  %2008 = vmatpush1.msra.mxu0 0.0
  %2009 = vmatprep.subr.mxu0 0.0
  %2010 = vmatpush1.msra.mxu0 0.0
  %2011 = vmatprep.subr.mxu0 0.0
  %2012 = vmatpush1.msra.mxu0 0.0
  %2013 = vmatprep.subr.mxu0 0.0
  %2014 = vmatpush1.msra.mxu0 0.0
  %2015 = vmatprep.subr.mxu0 0.0
  %2016 = vmatpush1.msra.mxu0 0.0
  %2017 = vmatprep.subr.mxu0 0.0
  %2018 = vmatpush1.msra.mxu0 0.0
  %2019 = vmatprep.subr.mxu0 0.0
  %2020 = vmatpush1.msra.mxu0 0.0
  %2021 = vmatprep.subr.mxu0 0.0
  %2022 = vmatpush1.msra.mxu0 0.0
  %2023 = vmatprep.subr.mxu0 0.0
  %2024 = vmatpush1.msra.mxu0 0.0
  %2025 = vmatprep.subr.mxu0 0.0
  %2026 = vmatpush1.msra.mxu0 0.0
  %2027 = vmatprep.subr.mxu0 0.0
  %2028 = vmatpush1.msra.mxu0 0.0
  %2029 = vmatprep.subr.mxu0 0.0
  %2030 = vmatpush1.msra.mxu0 0.0
  %2031 = vmatprep.subr.mxu0 0.0
  %2032 = vmatpush1.msra.mxu0 0.0
  %2033 = vmatprep.subr.mxu0 0.0
  %2034 = vmatpush1.msra.mxu0 0.0
  %2035 = vmatprep.subr.mxu0 0.0
  %2036 = vmatpush1.msra.mxu0 0.0
  %2037 = vmatprep.subr.mxu0 0.0
  %2038 = vmatpush1.msra.mxu0 0.0
  %2039 = vmatprep.subr.mxu0 0.0
  %2040 = vmatpush1.msra.mxu0 0.0
  %2041 = vmatprep.subr.mxu0 0.0
  %2042 = vmatpush1.msra.mxu0 0.0
  %2043 = vmatprep.subr.mxu0 0.0
  %2044 = vmatpush1.msra.mxu0 0.0
  %2045 = vmatprep.subr.mxu0 0.0
  %2046 = vmatpush1.msra.mxu0 0.0
  %2047 = vmatprep.subr.mxu0 0.0
  %2048 = vmatpush1.msra.mxu0 0.0
  %2049 = vmatprep.subr.mxu0 0.0
  %2050 = vmatpush1.msra.mxu0 0.0
  %2051 = vmatprep.mubr.f32.mxu0 0.0
  %2052 = vmatmul.mubr.f32.gmra.mrb[0].mxu0 %v1914
  %v2053 = vpop.f32.mrb[0].mxu0
  %v2054 = vadd.f32 0.0, %v2053
  %v2055 = vpop.f32.mrb[0].mxu0
  %v2056 = vadd.f32 0.0, %v2055
  %2057 = vdwg.mxu0
  %v2059 = vsel %vm43, %v1894, 0
  %2061 = vmatprep.subr.mxu0 %v1891
  %2062 = vmatpush1.msra.mxu0 %v1890
  %2063 = vmatprep.subr.mxu0 0.0
  %2064 = vmatpush1.msra.mxu0 0.0
  %2065 = vmatprep.subr.mxu0 0.0
  %2066 = vmatpush1.msra.mxu0 0.0
  %2067 = vmatprep.subr.mxu0 0.0
  %2068 = vmatpush1.msra.mxu0 0.0
  %2069 = vmatprep.subr.mxu0 0.0
  %2070 = vmatpush1.msra.mxu0 0.0
  %2071 = vmatprep.subr.mxu0 0.0
  %2072 = vmatpush1.msra.mxu0 0.0
  %2073 = vmatprep.subr.mxu0 0.0
  %2074 = vmatpush1.msra.mxu0 0.0
  %2075 = vmatprep.subr.mxu0 0.0
  %2076 = vmatpush1.msra.mxu0 0.0
  %2077 = vmatprep.subr.mxu0 0.0
  %2078 = vmatpush1.msra.mxu0 0.0
  %2079 = vmatprep.subr.mxu0 0.0
  %2080 = vmatpush1.msra.mxu0 0.0
  %2081 = vmatprep.subr.mxu0 0.0
  %2082 = vmatpush1.msra.mxu0 0.0
  %2083 = vmatprep.subr.mxu0 0.0
  %2084 = vmatpush1.msra.mxu0 0.0
  %2085 = vmatprep.subr.mxu0 0.0
  %2086 = vmatpush1.msra.mxu0 0.0
  %2087 = vmatprep.subr.mxu0 0.0
  %2088 = vmatpush1.msra.mxu0 0.0
  %2089 = vmatprep.subr.mxu0 0.0
  %2090 = vmatpush1.msra.mxu0 0.0
  %2091 = vmatprep.subr.mxu0 0.0
  %2092 = vmatpush1.msra.mxu0 0.0
  %2093 = vmatprep.subr.mxu0 0.0
  %2094 = vmatpush1.msra.mxu0 0.0
  %2095 = vmatprep.subr.mxu0 0.0
  %2096 = vmatpush1.msra.mxu0 0.0
  %2097 = vmatprep.subr.mxu0 0.0
  %2098 = vmatpush1.msra.mxu0 0.0
  %2099 = vmatprep.subr.mxu0 0.0
  %2100 = vmatpush1.msra.mxu0 0.0
  %2101 = vmatprep.subr.mxu0 0.0
  %2102 = vmatpush1.msra.mxu0 0.0
  %2103 = vmatprep.subr.mxu0 0.0
  %2104 = vmatpush1.msra.mxu0 0.0
  %2105 = vmatprep.subr.mxu0 0.0
  %2106 = vmatpush1.msra.mxu0 0.0
  %2107 = vmatprep.subr.mxu0 0.0
  %2108 = vmatpush1.msra.mxu0 0.0
  %2109 = vmatprep.subr.mxu0 0.0
  %2110 = vmatpush1.msra.mxu0 0.0
  %2111 = vmatprep.subr.mxu0 0.0
  %2112 = vmatpush1.msra.mxu0 0.0
  %2113 = vmatprep.subr.mxu0 0.0
  %2114 = vmatpush1.msra.mxu0 0.0
  %2115 = vmatprep.subr.mxu0 0.0
  %2116 = vmatpush1.msra.mxu0 0.0
  %2117 = vmatprep.subr.mxu0 0.0
  %2118 = vmatpush1.msra.mxu0 0.0
  %2119 = vmatprep.subr.mxu0 0.0
  %2120 = vmatpush1.msra.mxu0 0.0
  %2121 = vmatprep.subr.mxu0 0.0
  %2122 = vmatpush1.msra.mxu0 0.0
  %2123 = vmatprep.subr.mxu0 0.0
  %2124 = vmatpush1.msra.mxu0 0.0
  %2125 = vmatprep.mubr.f32.mxu0 0.0
  %2126 = vmatmul.mubr.f32.gmra.mrb[0].mxu0 %v2059
  %v2127 = vpop.f32.mrb[0].mxu0
  %v2128 = vadd.f32 %v1983, %v2127
  %v2129 = vpop.f32.mrb[0].mxu0
  %v2130 = vadd.f32 %v1985, %v2129
  %2131 = vdwg.mxu0
  %2132 = vmatprep.subr.mxu0 %v1893
  %2133 = vmatpush1.msra.mxu0 %v1892
  %2134 = vmatprep.subr.mxu0 0.0
  %2135 = vmatpush1.msra.mxu0 0.0
  %2136 = vmatprep.subr.mxu0 0.0
  %2137 = vmatpush1.msra.mxu0 0.0
  %2138 = vmatprep.subr.mxu0 0.0
  %2139 = vmatpush1.msra.mxu0 0.0
  %2140 = vmatprep.subr.mxu0 0.0
  %2141 = vmatpush1.msra.mxu0 0.0
  %2142 = vmatprep.subr.mxu0 0.0
  %2143 = vmatpush1.msra.mxu0 0.0
  %2144 = vmatprep.subr.mxu0 0.0
  %2145 = vmatpush1.msra.mxu0 0.0
  %2146 = vmatprep.subr.mxu0 0.0
  %2147 = vmatpush1.msra.mxu0 0.0
  %2148 = vmatprep.subr.mxu0 0.0
  %2149 = vmatpush1.msra.mxu0 0.0
  %2150 = vmatprep.subr.mxu0 0.0
  %2151 = vmatpush1.msra.mxu0 0.0
  %2152 = vmatprep.subr.mxu0 0.0
  %2153 = vmatpush1.msra.mxu0 0.0
  %2154 = vmatprep.subr.mxu0 0.0
  %2155 = vmatpush1.msra.mxu0 0.0
  %2156 = vmatprep.subr.mxu0 0.0
  %2157 = vmatpush1.msra.mxu0 0.0
  %2158 = vmatprep.subr.mxu0 0.0
  %2159 = vmatpush1.msra.mxu0 0.0
  %2160 = vmatprep.subr.mxu0 0.0
  %2161 = vmatpush1.msra.mxu0 0.0
  %2162 = vmatprep.subr.mxu0 0.0
  %2163 = vmatpush1.msra.mxu0 0.0
  %2164 = vmatprep.subr.mxu0 0.0
  %2165 = vmatpush1.msra.mxu0 0.0
  %2166 = vmatprep.subr.mxu0 0.0
  %2167 = vmatpush1.msra.mxu0 0.0
  %2168 = vmatprep.subr.mxu0 0.0
  %2169 = vmatpush1.msra.mxu0 0.0
  %2170 = vmatprep.subr.mxu0 0.0
  %2171 = vmatpush1.msra.mxu0 0.0
  %2172 = vmatprep.subr.mxu0 0.0
  %2173 = vmatpush1.msra.mxu0 0.0
  %2174 = vmatprep.subr.mxu0 0.0
  %2175 = vmatpush1.msra.mxu0 0.0
  %2176 = vmatprep.subr.mxu0 0.0
  %2177 = vmatpush1.msra.mxu0 0.0
  %2178 = vmatprep.subr.mxu0 0.0
  %2179 = vmatpush1.msra.mxu0 0.0
  %2180 = vmatprep.subr.mxu0 0.0
  %2181 = vmatpush1.msra.mxu0 0.0
  %2182 = vmatprep.subr.mxu0 0.0
  %2183 = vmatpush1.msra.mxu0 0.0
  %2184 = vmatprep.subr.mxu0 0.0
  %2185 = vmatpush1.msra.mxu0 0.0
  %2186 = vmatprep.subr.mxu0 0.0
  %2187 = vmatpush1.msra.mxu0 0.0
  %2188 = vmatprep.subr.mxu0 0.0
  %2189 = vmatpush1.msra.mxu0 0.0
  %2190 = vmatprep.subr.mxu0 0.0
  %2191 = vmatpush1.msra.mxu0 0.0
  %2192 = vmatprep.subr.mxu0 0.0
  %2193 = vmatpush1.msra.mxu0 0.0
  %2194 = vmatprep.subr.mxu0 0.0
  %2195 = vmatpush1.msra.mxu0 0.0
  %2196 = vmatprep.mubr.f32.mxu0 0.0
  %2197 = vmatmul.mubr.f32.gmra.mrb[0].mxu0 %v2059
  %v2198 = vpop.f32.mrb[0].mxu0
  %v2199 = vadd.f32 %v2054, %v2198
  %v2200 = vpop.f32.mrb[0].mxu0
  %v2201 = vadd.f32 %v2056, %v2200
  %2202 = vdwg.mxu0
  %2203 = vrot.lane.b32.xlu0 %v1874, 15
  %v2204 = vpop.permute.xlu0 %2203
  %2205 = vrot.lane.b32.xlu0 %v1875, 15
  %v2206 = vpop.permute.xlu0 %2205
  %2207 = vrot.lane.b32.xlu0 %v1876, 15
  %v2208 = vpop.permute.xlu0 %2207
  %2209 = vrot.lane.b32.xlu0 %v1877, 15
  %v2210 = vpop.permute.xlu0 %2209
  %v2211 = vsel %vm575, %v2208, %v2210
  %v2212 = vsel %vm575, %v2206, %v2208
  %v2213 = vsel %vm575, %v2204, %v2206
  %v2214 = vsel %vm575, %v2210, %v2204
  %v2215 = vmul.f32 %v2214, %v586
  %v2216 = vmul.f32 %v2213, %v590
  %v2217 = vmul.f32 %v2212, %v594
  %v2218 = vmul.f32 %v2211, %v598
  %s2219 = scalar_lea.vmem %s3, 16
  %v2220 = vld [vmem:[%s2219] sm:$0xff]
  %v2222 = vsel %vm43, %v2220, 0
  %2224 = vmatprep.subr.mxu0 %v2216
  %2225 = vmatpush1.msra.mxu0 %v2215
  %2226 = vmatprep.subr.mxu0 0.0
  %2227 = vmatpush1.msra.mxu0 0.0
  %2228 = vmatprep.subr.mxu0 0.0
  %2229 = vmatpush1.msra.mxu0 0.0
  %2230 = vmatprep.subr.mxu0 0.0
  %2231 = vmatpush1.msra.mxu0 0.0
  %2232 = vmatprep.subr.mxu0 0.0
  %2233 = vmatpush1.msra.mxu0 0.0
  %2234 = vmatprep.subr.mxu0 0.0
  %2235 = vmatpush1.msra.mxu0 0.0
  %2236 = vmatprep.subr.mxu0 0.0
  %2237 = vmatpush1.msra.mxu0 0.0
  %2238 = vmatprep.subr.mxu0 0.0
  %2239 = vmatpush1.msra.mxu0 0.0
  %2240 = vmatprep.subr.mxu0 0.0
  %2241 = vmatpush1.msra.mxu0 0.0
  %2242 = vmatprep.subr.mxu0 0.0
  %2243 = vmatpush1.msra.mxu0 0.0
  %2244 = vmatprep.subr.mxu0 0.0
  %2245 = vmatpush1.msra.mxu0 0.0
  %2246 = vmatprep.subr.mxu0 0.0
  %2247 = vmatpush1.msra.mxu0 0.0
  %2248 = vmatprep.subr.mxu0 0.0
  %2249 = vmatpush1.msra.mxu0 0.0
  %2250 = vmatprep.subr.mxu0 0.0
  %2251 = vmatpush1.msra.mxu0 0.0
  %2252 = vmatprep.subr.mxu0 0.0
  %2253 = vmatpush1.msra.mxu0 0.0
  %2254 = vmatprep.subr.mxu0 0.0
  %2255 = vmatpush1.msra.mxu0 0.0
  %2256 = vmatprep.subr.mxu0 0.0
  %2257 = vmatpush1.msra.mxu0 0.0
  %2258 = vmatprep.subr.mxu0 0.0
  %2259 = vmatpush1.msra.mxu0 0.0
  %2260 = vmatprep.subr.mxu0 0.0
  %2261 = vmatpush1.msra.mxu0 0.0
  %2262 = vmatprep.subr.mxu0 0.0
  %2263 = vmatpush1.msra.mxu0 0.0
  %2264 = vmatprep.subr.mxu0 0.0
  %2265 = vmatpush1.msra.mxu0 0.0
  %2266 = vmatprep.subr.mxu0 0.0
  %2267 = vmatpush1.msra.mxu0 0.0
  %2268 = vmatprep.subr.mxu0 0.0
  %2269 = vmatpush1.msra.mxu0 0.0
  %2270 = vmatprep.subr.mxu0 0.0
  %2271 = vmatpush1.msra.mxu0 0.0
  %2272 = vmatprep.subr.mxu0 0.0
  %2273 = vmatpush1.msra.mxu0 0.0
  %2274 = vmatprep.subr.mxu0 0.0
  %2275 = vmatpush1.msra.mxu0 0.0
  %2276 = vmatprep.subr.mxu0 0.0
  %2277 = vmatpush1.msra.mxu0 0.0
  %2278 = vmatprep.subr.mxu0 0.0
  %2279 = vmatpush1.msra.mxu0 0.0
  %2280 = vmatprep.subr.mxu0 0.0
  %2281 = vmatpush1.msra.mxu0 0.0
  %2282 = vmatprep.subr.mxu0 0.0
  %2283 = vmatpush1.msra.mxu0 0.0
  %2284 = vmatprep.subr.mxu0 0.0
  %2285 = vmatpush1.msra.mxu0 0.0
  %2286 = vmatprep.subr.mxu0 0.0
  %2287 = vmatpush1.msra.mxu0 0.0
  %2288 = vmatprep.mubr.f32.mxu0 0.0
  %2289 = vmatmul.mubr.f32.gmra.mrb[0].mxu0 %v2222
  %v2290 = vpop.f32.mrb[0].mxu0
  %v2291 = vadd.f32 0.0, %v2290
  %v2292 = vpop.f32.mrb[0].mxu0
  %v2293 = vadd.f32 0.0, %v2292
  %2294 = vdwg.mxu0
  %2295 = vmatprep.subr.mxu0 %v2218
  %2296 = vmatpush1.msra.mxu0 %v2217
  %2297 = vmatprep.subr.mxu0 0.0
  %2298 = vmatpush1.msra.mxu0 0.0
  %2299 = vmatprep.subr.mxu0 0.0
  %2300 = vmatpush1.msra.mxu0 0.0
  %2301 = vmatprep.subr.mxu0 0.0
  %2302 = vmatpush1.msra.mxu0 0.0
  %2303 = vmatprep.subr.mxu0 0.0
  %2304 = vmatpush1.msra.mxu0 0.0
  %2305 = vmatprep.subr.mxu0 0.0
  %2306 = vmatpush1.msra.mxu0 0.0
  %2307 = vmatprep.subr.mxu0 0.0
  %2308 = vmatpush1.msra.mxu0 0.0
  %2309 = vmatprep.subr.mxu0 0.0
  %2310 = vmatpush1.msra.mxu0 0.0
  %2311 = vmatprep.subr.mxu0 0.0
  %2312 = vmatpush1.msra.mxu0 0.0
  %2313 = vmatprep.subr.mxu0 0.0
  %2314 = vmatpush1.msra.mxu0 0.0
  %2315 = vmatprep.subr.mxu0 0.0
  %2316 = vmatpush1.msra.mxu0 0.0
  %2317 = vmatprep.subr.mxu0 0.0
  %2318 = vmatpush1.msra.mxu0 0.0
  %2319 = vmatprep.subr.mxu0 0.0
  %2320 = vmatpush1.msra.mxu0 0.0
  %2321 = vmatprep.subr.mxu0 0.0
  %2322 = vmatpush1.msra.mxu0 0.0
  %2323 = vmatprep.subr.mxu0 0.0
  %2324 = vmatpush1.msra.mxu0 0.0
  %2325 = vmatprep.subr.mxu0 0.0
  %2326 = vmatpush1.msra.mxu0 0.0
  %2327 = vmatprep.subr.mxu0 0.0
  %2328 = vmatpush1.msra.mxu0 0.0
  %2329 = vmatprep.subr.mxu0 0.0
  %2330 = vmatpush1.msra.mxu0 0.0
  %2331 = vmatprep.subr.mxu0 0.0
  %2332 = vmatpush1.msra.mxu0 0.0
  %2333 = vmatprep.subr.mxu0 0.0
  %2334 = vmatpush1.msra.mxu0 0.0
  %2335 = vmatprep.subr.mxu0 0.0
  %2336 = vmatpush1.msra.mxu0 0.0
  %2337 = vmatprep.subr.mxu0 0.0
  %2338 = vmatpush1.msra.mxu0 0.0
  %2339 = vmatprep.subr.mxu0 0.0
  %2340 = vmatpush1.msra.mxu0 0.0
  %2341 = vmatprep.subr.mxu0 0.0
  %2342 = vmatpush1.msra.mxu0 0.0
  %2343 = vmatprep.subr.mxu0 0.0
  %2344 = vmatpush1.msra.mxu0 0.0
  %2345 = vmatprep.subr.mxu0 0.0
  %2346 = vmatpush1.msra.mxu0 0.0
  %2347 = vmatprep.subr.mxu0 0.0
  %2348 = vmatpush1.msra.mxu0 0.0
  %2349 = vmatprep.subr.mxu0 0.0
  %2350 = vmatpush1.msra.mxu0 0.0
  %2351 = vmatprep.subr.mxu0 0.0
  %2352 = vmatpush1.msra.mxu0 0.0
  %2353 = vmatprep.subr.mxu0 0.0
  %2354 = vmatpush1.msra.mxu0 0.0
  %2355 = vmatprep.subr.mxu0 0.0
  %2356 = vmatpush1.msra.mxu0 0.0
  %2357 = vmatprep.subr.mxu0 0.0
  %2358 = vmatpush1.msra.mxu0 0.0
  %2359 = vmatprep.mubr.f32.mxu0 0.0
  %2360 = vmatmul.mubr.f32.gmra.mrb[0].mxu0 %v2222
  %v2361 = vpop.f32.mrb[0].mxu0
  %v2362 = vadd.f32 0.0, %v2361
  %v2363 = vpop.f32.mrb[0].mxu0
  %v2364 = vadd.f32 0.0, %v2363
  %2365 = vdwg.mxu0
  %v2366 = vadd.f32 %v2128, %v2291
  %v2367 = vadd.f32 %v2130, %v2293
  %v2368 = vadd.f32 %v2199, %v2362
  %v2369 = vadd.f32 %v2201, %v2364
  %2370 = vrot.lane.b32.xlu0 %v1874, 1
  %v2371 = vpop.permute.xlu0 %2370
  %2372 = vrot.lane.b32.xlu0 %v1875, 1
  %v2373 = vpop.permute.xlu0 %2372
  %2374 = vrot.lane.b32.xlu0 %v1876, 1
  %v2375 = vpop.permute.xlu0 %2374
  %2376 = vrot.lane.b32.xlu0 %v1877, 1
  %v2377 = vpop.permute.xlu0 %2376
  %v2378 = vsel %vm766, %v2375, %v2377
  %v2379 = vsel %vm766, %v2373, %v2375
  %v2380 = vsel %vm766, %v2371, %v2373
  %v2381 = vsel %vm766, %v2377, %v2371
  %v2382 = vmul.f32 %v2381, %v777
  %v2383 = vmul.f32 %v2380, %v781
  %v2384 = vmul.f32 %v2379, %v785
  %v2385 = vmul.f32 %v2378, %v789
  %s2386 = scalar_lea.vmem %s3, 24
  %v2387 = vld [vmem:[%s2386] sm:$0xff]
  %v2389 = vsel %vm43, %v2387, 0
  %2391 = vmatprep.subr.mxu0 %v2383
  %2392 = vmatpush1.msra.mxu0 %v2382
  %2393 = vmatprep.subr.mxu0 0.0
  %2394 = vmatpush1.msra.mxu0 0.0
  %2395 = vmatprep.subr.mxu0 0.0
  %2396 = vmatpush1.msra.mxu0 0.0
  %2397 = vmatprep.subr.mxu0 0.0
  %2398 = vmatpush1.msra.mxu0 0.0
  %2399 = vmatprep.subr.mxu0 0.0
  %2400 = vmatpush1.msra.mxu0 0.0
  %2401 = vmatprep.subr.mxu0 0.0
  %2402 = vmatpush1.msra.mxu0 0.0
  %2403 = vmatprep.subr.mxu0 0.0
  %2404 = vmatpush1.msra.mxu0 0.0
  %2405 = vmatprep.subr.mxu0 0.0
  %2406 = vmatpush1.msra.mxu0 0.0
  %2407 = vmatprep.subr.mxu0 0.0
  %2408 = vmatpush1.msra.mxu0 0.0
  %2409 = vmatprep.subr.mxu0 0.0
  %2410 = vmatpush1.msra.mxu0 0.0
  %2411 = vmatprep.subr.mxu0 0.0
  %2412 = vmatpush1.msra.mxu0 0.0
  %2413 = vmatprep.subr.mxu0 0.0
  %2414 = vmatpush1.msra.mxu0 0.0
  %2415 = vmatprep.subr.mxu0 0.0
  %2416 = vmatpush1.msra.mxu0 0.0
  %2417 = vmatprep.subr.mxu0 0.0
  %2418 = vmatpush1.msra.mxu0 0.0
  %2419 = vmatprep.subr.mxu0 0.0
  %2420 = vmatpush1.msra.mxu0 0.0
  %2421 = vmatprep.subr.mxu0 0.0
  %2422 = vmatpush1.msra.mxu0 0.0
  %2423 = vmatprep.subr.mxu0 0.0
  %2424 = vmatpush1.msra.mxu0 0.0
  %2425 = vmatprep.subr.mxu0 0.0
  %2426 = vmatpush1.msra.mxu0 0.0
  %2427 = vmatprep.subr.mxu0 0.0
  %2428 = vmatpush1.msra.mxu0 0.0
  %2429 = vmatprep.subr.mxu0 0.0
  %2430 = vmatpush1.msra.mxu0 0.0
  %2431 = vmatprep.subr.mxu0 0.0
  %2432 = vmatpush1.msra.mxu0 0.0
  %2433 = vmatprep.subr.mxu0 0.0
  %2434 = vmatpush1.msra.mxu0 0.0
  %2435 = vmatprep.subr.mxu0 0.0
  %2436 = vmatpush1.msra.mxu0 0.0
  %2437 = vmatprep.subr.mxu0 0.0
  %2438 = vmatpush1.msra.mxu0 0.0
  %2439 = vmatprep.subr.mxu0 0.0
  %2440 = vmatpush1.msra.mxu0 0.0
  %2441 = vmatprep.subr.mxu0 0.0
  %2442 = vmatpush1.msra.mxu0 0.0
  %2443 = vmatprep.subr.mxu0 0.0
  %2444 = vmatpush1.msra.mxu0 0.0
  %2445 = vmatprep.subr.mxu0 0.0
  %2446 = vmatpush1.msra.mxu0 0.0
  %2447 = vmatprep.subr.mxu0 0.0
  %2448 = vmatpush1.msra.mxu0 0.0
  %2449 = vmatprep.subr.mxu0 0.0
  %2450 = vmatpush1.msra.mxu0 0.0
  %2451 = vmatprep.subr.mxu0 0.0
  %2452 = vmatpush1.msra.mxu0 0.0
  %2453 = vmatprep.subr.mxu0 0.0
  %2454 = vmatpush1.msra.mxu0 0.0
  %2455 = vmatprep.mubr.f32.mxu0 0.0
  %2456 = vmatmul.mubr.f32.gmra.mrb[0].mxu0 %v2389
  %v2457 = vpop.f32.mrb[0].mxu0
  %v2458 = vadd.f32 0.0, %v2457
  %v2459 = vpop.f32.mrb[0].mxu0
  %v2460 = vadd.f32 0.0, %v2459
  %2461 = vdwg.mxu0
  %2462 = vmatprep.subr.mxu0 %v2385
  %2463 = vmatpush1.msra.mxu0 %v2384
  %2464 = vmatprep.subr.mxu0 0.0
  %2465 = vmatpush1.msra.mxu0 0.0
  %2466 = vmatprep.subr.mxu0 0.0
  %2467 = vmatpush1.msra.mxu0 0.0
  %2468 = vmatprep.subr.mxu0 0.0
  %2469 = vmatpush1.msra.mxu0 0.0
  %2470 = vmatprep.subr.mxu0 0.0
  %2471 = vmatpush1.msra.mxu0 0.0
  %2472 = vmatprep.subr.mxu0 0.0
  %2473 = vmatpush1.msra.mxu0 0.0
  %2474 = vmatprep.subr.mxu0 0.0
  %2475 = vmatpush1.msra.mxu0 0.0
  %2476 = vmatprep.subr.mxu0 0.0
  %2477 = vmatpush1.msra.mxu0 0.0
  %2478 = vmatprep.subr.mxu0 0.0
  %2479 = vmatpush1.msra.mxu0 0.0
  %2480 = vmatprep.subr.mxu0 0.0
  %2481 = vmatpush1.msra.mxu0 0.0
  %2482 = vmatprep.subr.mxu0 0.0
  %2483 = vmatpush1.msra.mxu0 0.0
  %2484 = vmatprep.subr.mxu0 0.0
  %2485 = vmatpush1.msra.mxu0 0.0
  %2486 = vmatprep.subr.mxu0 0.0
  %2487 = vmatpush1.msra.mxu0 0.0
  %2488 = vmatprep.subr.mxu0 0.0
  %2489 = vmatpush1.msra.mxu0 0.0
  %2490 = vmatprep.subr.mxu0 0.0
  %2491 = vmatpush1.msra.mxu0 0.0
  %2492 = vmatprep.subr.mxu0 0.0
  %2493 = vmatpush1.msra.mxu0 0.0
  %2494 = vmatprep.subr.mxu0 0.0
  %2495 = vmatpush1.msra.mxu0 0.0
  %2496 = vmatprep.subr.mxu0 0.0
  %2497 = vmatpush1.msra.mxu0 0.0
  %2498 = vmatprep.subr.mxu0 0.0
  %2499 = vmatpush1.msra.mxu0 0.0
  %2500 = vmatprep.subr.mxu0 0.0
  %2501 = vmatpush1.msra.mxu0 0.0
  %2502 = vmatprep.subr.mxu0 0.0
  %2503 = vmatpush1.msra.mxu0 0.0
  %2504 = vmatprep.subr.mxu0 0.0
  %2505 = vmatpush1.msra.mxu0 0.0
  %2506 = vmatprep.subr.mxu0 0.0
  %2507 = vmatpush1.msra.mxu0 0.0
  %2508 = vmatprep.subr.mxu0 0.0
  %2509 = vmatpush1.msra.mxu0 0.0
  %2510 = vmatprep.subr.mxu0 0.0
  %2511 = vmatpush1.msra.mxu0 0.0
  %2512 = vmatprep.subr.mxu0 0.0
  %2513 = vmatpush1.msra.mxu0 0.0
  %2514 = vmatprep.subr.mxu0 0.0
  %2515 = vmatpush1.msra.mxu0 0.0
  %2516 = vmatprep.subr.mxu0 0.0
  %2517 = vmatpush1.msra.mxu0 0.0
  %2518 = vmatprep.subr.mxu0 0.0
  %2519 = vmatpush1.msra.mxu0 0.0
  %2520 = vmatprep.subr.mxu0 0.0
  %2521 = vmatpush1.msra.mxu0 0.0
  %2522 = vmatprep.subr.mxu0 0.0
  %2523 = vmatpush1.msra.mxu0 0.0
  %2524 = vmatprep.subr.mxu0 0.0
  %2525 = vmatpush1.msra.mxu0 0.0
  %2526 = vmatprep.mubr.f32.mxu0 0.0
  %2527 = vmatmul.mubr.f32.gmra.mrb[0].mxu0 %v2389
  %v2528 = vpop.f32.mrb[0].mxu0
  %v2529 = vadd.f32 0.0, %v2528
  %v2530 = vpop.f32.mrb[0].mxu0
  %v2531 = vadd.f32 0.0, %v2530
  %2532 = vdwg.mxu0
  %v2533 = vadd.f32 %v2366, %v2458
  %v2534 = vadd.f32 %v2367, %v2460
  %v2535 = vadd.f32 %v2368, %v2529
  %v2536 = vadd.f32 %v2369, %v2531
  %s2537 = scalar_lea.vmem %s3, 32
  %v2538 = vld [vmem:[%s2537] sm:$0xff]
  %v2540 = vsel %vm43, %v2538, 0
  %2542 = vmatprep.subr.mxu0 %v1875
  %2543 = vmatpush1.msra.mxu0 %v1874
  %2544 = vmatprep.subr.mxu0 0.0
  %2545 = vmatpush1.msra.mxu0 0.0
  %2546 = vmatprep.subr.mxu0 0.0
  %2547 = vmatpush1.msra.mxu0 0.0
  %2548 = vmatprep.subr.mxu0 0.0
  %2549 = vmatpush1.msra.mxu0 0.0
  %2550 = vmatprep.subr.mxu0 0.0
  %2551 = vmatpush1.msra.mxu0 0.0
  %2552 = vmatprep.subr.mxu0 0.0
  %2553 = vmatpush1.msra.mxu0 0.0
  %2554 = vmatprep.subr.mxu0 0.0
  %2555 = vmatpush1.msra.mxu0 0.0
  %2556 = vmatprep.subr.mxu0 0.0
  %2557 = vmatpush1.msra.mxu0 0.0
  %2558 = vmatprep.subr.mxu0 0.0
  %2559 = vmatpush1.msra.mxu0 0.0
  %2560 = vmatprep.subr.mxu0 0.0
  %2561 = vmatpush1.msra.mxu0 0.0
  %2562 = vmatprep.subr.mxu0 0.0
  %2563 = vmatpush1.msra.mxu0 0.0
  %2564 = vmatprep.subr.mxu0 0.0
  %2565 = vmatpush1.msra.mxu0 0.0
  %2566 = vmatprep.subr.mxu0 0.0
  %2567 = vmatpush1.msra.mxu0 0.0
  %2568 = vmatprep.subr.mxu0 0.0
  %2569 = vmatpush1.msra.mxu0 0.0
  %2570 = vmatprep.subr.mxu0 0.0
  %2571 = vmatpush1.msra.mxu0 0.0
  %2572 = vmatprep.subr.mxu0 0.0
  %2573 = vmatpush1.msra.mxu0 0.0
  %2574 = vmatprep.subr.mxu0 0.0
  %2575 = vmatpush1.msra.mxu0 0.0
  %2576 = vmatprep.subr.mxu0 0.0
  %2577 = vmatpush1.msra.mxu0 0.0
  %2578 = vmatprep.subr.mxu0 0.0
  %2579 = vmatpush1.msra.mxu0 0.0
  %2580 = vmatprep.subr.mxu0 0.0
  %2581 = vmatpush1.msra.mxu0 0.0
  %2582 = vmatprep.subr.mxu0 0.0
  %2583 = vmatpush1.msra.mxu0 0.0
  %2584 = vmatprep.subr.mxu0 0.0
  %2585 = vmatpush1.msra.mxu0 0.0
  %2586 = vmatprep.subr.mxu0 0.0
  %2587 = vmatpush1.msra.mxu0 0.0
  %2588 = vmatprep.subr.mxu0 0.0
  %2589 = vmatpush1.msra.mxu0 0.0
  %2590 = vmatprep.subr.mxu0 0.0
  %2591 = vmatpush1.msra.mxu0 0.0
  %2592 = vmatprep.subr.mxu0 0.0
  %2593 = vmatpush1.msra.mxu0 0.0
  %2594 = vmatprep.subr.mxu0 0.0
  %2595 = vmatpush1.msra.mxu0 0.0
  %2596 = vmatprep.subr.mxu0 0.0
  %2597 = vmatpush1.msra.mxu0 0.0
  %2598 = vmatprep.subr.mxu0 0.0
  %2599 = vmatpush1.msra.mxu0 0.0
  %2600 = vmatprep.subr.mxu0 0.0
  %2601 = vmatpush1.msra.mxu0 0.0
  %2602 = vmatprep.subr.mxu0 0.0
  %2603 = vmatpush1.msra.mxu0 0.0
  %2604 = vmatprep.subr.mxu0 0.0
  %2605 = vmatpush1.msra.mxu0 0.0
  %2606 = vmatprep.mubr.f32.mxu0 0.0
  %2607 = vmatmul.mubr.f32.gmra.mrb[0].mxu0 %v2540
  %v2608 = vpop.f32.mrb[0].mxu0
  %v2609 = vadd.f32 0.0, %v2608
  %v2610 = vpop.f32.mrb[0].mxu0
  %v2611 = vadd.f32 0.0, %v2610
  %2612 = vdwg.mxu0
  %2613 = vmatprep.subr.mxu0 %v1877
  %2614 = vmatpush1.msra.mxu0 %v1876
  %2615 = vmatprep.subr.mxu0 0.0
  %2616 = vmatpush1.msra.mxu0 0.0
  %2617 = vmatprep.subr.mxu0 0.0
  %2618 = vmatpush1.msra.mxu0 0.0
  %2619 = vmatprep.subr.mxu0 0.0
  %2620 = vmatpush1.msra.mxu0 0.0
  %2621 = vmatprep.subr.mxu0 0.0
  %2622 = vmatpush1.msra.mxu0 0.0
  %2623 = vmatprep.subr.mxu0 0.0
  %2624 = vmatpush1.msra.mxu0 0.0
  %2625 = vmatprep.subr.mxu0 0.0
  %2626 = vmatpush1.msra.mxu0 0.0
  %2627 = vmatprep.subr.mxu0 0.0
  %2628 = vmatpush1.msra.mxu0 0.0
  %2629 = vmatprep.subr.mxu0 0.0
  %2630 = vmatpush1.msra.mxu0 0.0
  %2631 = vmatprep.subr.mxu0 0.0
  %2632 = vmatpush1.msra.mxu0 0.0
  %2633 = vmatprep.subr.mxu0 0.0
  %2634 = vmatpush1.msra.mxu0 0.0
  %2635 = vmatprep.subr.mxu0 0.0
  %2636 = vmatpush1.msra.mxu0 0.0
  %2637 = vmatprep.subr.mxu0 0.0
  %2638 = vmatpush1.msra.mxu0 0.0
  %2639 = vmatprep.subr.mxu0 0.0
  %2640 = vmatpush1.msra.mxu0 0.0
  %2641 = vmatprep.subr.mxu0 0.0
  %2642 = vmatpush1.msra.mxu0 0.0
  %2643 = vmatprep.subr.mxu0 0.0
  %2644 = vmatpush1.msra.mxu0 0.0
  %2645 = vmatprep.subr.mxu0 0.0
  %2646 = vmatpush1.msra.mxu0 0.0
  %2647 = vmatprep.subr.mxu0 0.0
  %2648 = vmatpush1.msra.mxu0 0.0
  %2649 = vmatprep.subr.mxu0 0.0
  %2650 = vmatpush1.msra.mxu0 0.0
  %2651 = vmatprep.subr.mxu0 0.0
  %2652 = vmatpush1.msra.mxu0 0.0
  %2653 = vmatprep.subr.mxu0 0.0
  %2654 = vmatpush1.msra.mxu0 0.0
  %2655 = vmatprep.subr.mxu0 0.0
  %2656 = vmatpush1.msra.mxu0 0.0
  %2657 = vmatprep.subr.mxu0 0.0
  %2658 = vmatpush1.msra.mxu0 0.0
  %2659 = vmatprep.subr.mxu0 0.0
  %2660 = vmatpush1.msra.mxu0 0.0
  %2661 = vmatprep.subr.mxu0 0.0
  %2662 = vmatpush1.msra.mxu0 0.0
  %2663 = vmatprep.subr.mxu0 0.0
  %2664 = vmatpush1.msra.mxu0 0.0
  %2665 = vmatprep.subr.mxu0 0.0
  %2666 = vmatpush1.msra.mxu0 0.0
  %2667 = vmatprep.subr.mxu0 0.0
  %2668 = vmatpush1.msra.mxu0 0.0
  %2669 = vmatprep.subr.mxu0 0.0
  %2670 = vmatpush1.msra.mxu0 0.0
  %2671 = vmatprep.subr.mxu0 0.0
  %2672 = vmatpush1.msra.mxu0 0.0
  %2673 = vmatprep.subr.mxu0 0.0
  %2674 = vmatpush1.msra.mxu0 0.0
  %2675 = vmatprep.subr.mxu0 0.0
  %2676 = vmatpush1.msra.mxu0 0.0
  %2677 = vmatprep.mubr.f32.mxu0 0.0
  %2678 = vmatmul.mubr.f32.gmra.mrb[0].mxu0 %v2540
  %v2679 = vpop.f32.mrb[0].mxu0
  %v2680 = vadd.f32 0.0, %v2679
  %v2681 = vpop.f32.mrb[0].mxu0
  %v2682 = vadd.f32 0.0, %v2681
  %2683 = vdwg.mxu0
  %v2684 = vadd.f32 %v2533, %v2609
  %v2685 = vadd.f32 %v2534, %v2611
  %v2686 = vadd.f32 %v2535, %v2680
  %v2687 = vadd.f32 %v2536, %v2682
  %2688 = vrot.lane.b32.xlu0 %v1874, 127
  %v2689 = vpop.permute.xlu0 %2688
  %2690 = vrot.lane.b32.xlu0 %v1875, 127
  %v2691 = vpop.permute.xlu0 %2690
  %2692 = vrot.lane.b32.xlu0 %v1876, 127
  %v2693 = vpop.permute.xlu0 %2692
  %2694 = vrot.lane.b32.xlu0 %v1877, 127
  %v2695 = vpop.permute.xlu0 %2694
  %v2696 = vsel %vm1108, %v2693, %v2695
  %v2697 = vsel %vm1108, %v2691, %v2693
  %v2698 = vsel %vm1108, %v2689, %v2691
  %v2699 = vsel %vm1108, %v2695, %v2689
  %v2700 = vmul.f32 %v2698, %v1119
  %v2701 = vmul.f32 %v2697, %v1123
  %v2702 = vmul.f32 %v2696, %v1127
  %v2703 = vmul.f32 %v2699, %v1131
  %s2704 = scalar_lea.vmem %s3, 40
  %v2705 = vld [vmem:[%s2704] sm:$0xff]
  %v2707 = vsel %vm43, %v2705, 0
  %2709 = vmatprep.subr.mxu0 %v2701
  %2710 = vmatpush1.msra.mxu0 %v2700
  %2711 = vmatprep.subr.mxu0 0.0
  %2712 = vmatpush1.msra.mxu0 0.0
  %2713 = vmatprep.subr.mxu0 0.0
  %2714 = vmatpush1.msra.mxu0 0.0
  %2715 = vmatprep.subr.mxu0 0.0
  %2716 = vmatpush1.msra.mxu0 0.0
  %2717 = vmatprep.subr.mxu0 0.0
  %2718 = vmatpush1.msra.mxu0 0.0
  %2719 = vmatprep.subr.mxu0 0.0
  %2720 = vmatpush1.msra.mxu0 0.0
  %2721 = vmatprep.subr.mxu0 0.0
  %2722 = vmatpush1.msra.mxu0 0.0
  %2723 = vmatprep.subr.mxu0 0.0
  %2724 = vmatpush1.msra.mxu0 0.0
  %2725 = vmatprep.subr.mxu0 0.0
  %2726 = vmatpush1.msra.mxu0 0.0
  %2727 = vmatprep.subr.mxu0 0.0
  %2728 = vmatpush1.msra.mxu0 0.0
  %2729 = vmatprep.subr.mxu0 0.0
  %2730 = vmatpush1.msra.mxu0 0.0
  %2731 = vmatprep.subr.mxu0 0.0
  %2732 = vmatpush1.msra.mxu0 0.0
  %2733 = vmatprep.subr.mxu0 0.0
  %2734 = vmatpush1.msra.mxu0 0.0
  %2735 = vmatprep.subr.mxu0 0.0
  %2736 = vmatpush1.msra.mxu0 0.0
  %2737 = vmatprep.subr.mxu0 0.0
  %2738 = vmatpush1.msra.mxu0 0.0
  %2739 = vmatprep.subr.mxu0 0.0
  %2740 = vmatpush1.msra.mxu0 0.0
  %2741 = vmatprep.subr.mxu0 0.0
  %2742 = vmatpush1.msra.mxu0 0.0
  %2743 = vmatprep.subr.mxu0 0.0
  %2744 = vmatpush1.msra.mxu0 0.0
  %2745 = vmatprep.subr.mxu0 0.0
  %2746 = vmatpush1.msra.mxu0 0.0
  %2747 = vmatprep.subr.mxu0 0.0
  %2748 = vmatpush1.msra.mxu0 0.0
  %2749 = vmatprep.subr.mxu0 0.0
  %2750 = vmatpush1.msra.mxu0 0.0
  %2751 = vmatprep.subr.mxu0 0.0
  %2752 = vmatpush1.msra.mxu0 0.0
  %2753 = vmatprep.subr.mxu0 0.0
  %2754 = vmatpush1.msra.mxu0 0.0
  %2755 = vmatprep.subr.mxu0 0.0
  %2756 = vmatpush1.msra.mxu0 0.0
  %2757 = vmatprep.subr.mxu0 0.0
  %2758 = vmatpush1.msra.mxu0 0.0
  %2759 = vmatprep.subr.mxu0 0.0
  %2760 = vmatpush1.msra.mxu0 0.0
  %2761 = vmatprep.subr.mxu0 0.0
  %2762 = vmatpush1.msra.mxu0 0.0
  %2763 = vmatprep.subr.mxu0 0.0
  %2764 = vmatpush1.msra.mxu0 0.0
  %2765 = vmatprep.subr.mxu0 0.0
  %2766 = vmatpush1.msra.mxu0 0.0
  %2767 = vmatprep.subr.mxu0 0.0
  %2768 = vmatpush1.msra.mxu0 0.0
  %2769 = vmatprep.subr.mxu0 0.0
  %2770 = vmatpush1.msra.mxu0 0.0
  %2771 = vmatprep.subr.mxu0 0.0
  %2772 = vmatpush1.msra.mxu0 0.0
  %2773 = vmatprep.mubr.f32.mxu0 0.0
  %2774 = vmatmul.mubr.f32.gmra.mrb[0].mxu0 %v2707
  %v2775 = vpop.f32.mrb[0].mxu0
  %v2776 = vadd.f32 0.0, %v2775
  %v2777 = vpop.f32.mrb[0].mxu0
  %v2778 = vadd.f32 0.0, %v2777
  %2779 = vdwg.mxu0
  %2780 = vmatprep.subr.mxu0 %v2703
  %2781 = vmatpush1.msra.mxu0 %v2702
  %2782 = vmatprep.subr.mxu0 0.0
  %2783 = vmatpush1.msra.mxu0 0.0
  %2784 = vmatprep.subr.mxu0 0.0
  %2785 = vmatpush1.msra.mxu0 0.0
  %2786 = vmatprep.subr.mxu0 0.0
  %2787 = vmatpush1.msra.mxu0 0.0
  %2788 = vmatprep.subr.mxu0 0.0
  %2789 = vmatpush1.msra.mxu0 0.0
  %2790 = vmatprep.subr.mxu0 0.0
  %2791 = vmatpush1.msra.mxu0 0.0
  %2792 = vmatprep.subr.mxu0 0.0
  %2793 = vmatpush1.msra.mxu0 0.0
  %2794 = vmatprep.subr.mxu0 0.0
  %2795 = vmatpush1.msra.mxu0 0.0
  %2796 = vmatprep.subr.mxu0 0.0
  %2797 = vmatpush1.msra.mxu0 0.0
  %2798 = vmatprep.subr.mxu0 0.0
  %2799 = vmatpush1.msra.mxu0 0.0
  %2800 = vmatprep.subr.mxu0 0.0
  %2801 = vmatpush1.msra.mxu0 0.0
  %2802 = vmatprep.subr.mxu0 0.0
  %2803 = vmatpush1.msra.mxu0 0.0
  %2804 = vmatprep.subr.mxu0 0.0
  %2805 = vmatpush1.msra.mxu0 0.0
  %2806 = vmatprep.subr.mxu0 0.0
  %2807 = vmatpush1.msra.mxu0 0.0
  %2808 = vmatprep.subr.mxu0 0.0
  %2809 = vmatpush1.msra.mxu0 0.0
  %2810 = vmatprep.subr.mxu0 0.0
  %2811 = vmatpush1.msra.mxu0 0.0
  %2812 = vmatprep.subr.mxu0 0.0
  %2813 = vmatpush1.msra.mxu0 0.0
  %2814 = vmatprep.subr.mxu0 0.0
  %2815 = vmatpush1.msra.mxu0 0.0
  %2816 = vmatprep.subr.mxu0 0.0
  %2817 = vmatpush1.msra.mxu0 0.0
  %2818 = vmatprep.subr.mxu0 0.0
  %2819 = vmatpush1.msra.mxu0 0.0
  %2820 = vmatprep.subr.mxu0 0.0
  %2821 = vmatpush1.msra.mxu0 0.0
  %2822 = vmatprep.subr.mxu0 0.0
  %2823 = vmatpush1.msra.mxu0 0.0
  %2824 = vmatprep.subr.mxu0 0.0
  %2825 = vmatpush1.msra.mxu0 0.0
  %2826 = vmatprep.subr.mxu0 0.0
  %2827 = vmatpush1.msra.mxu0 0.0
  %2828 = vmatprep.subr.mxu0 0.0
  %2829 = vmatpush1.msra.mxu0 0.0
  %2830 = vmatprep.subr.mxu0 0.0
  %2831 = vmatpush1.msra.mxu0 0.0
  %2832 = vmatprep.subr.mxu0 0.0
  %2833 = vmatpush1.msra.mxu0 0.0
  %2834 = vmatprep.subr.mxu0 0.0
  %2835 = vmatpush1.msra.mxu0 0.0
  %2836 = vmatprep.subr.mxu0 0.0
  %2837 = vmatpush1.msra.mxu0 0.0
  %2838 = vmatprep.subr.mxu0 0.0
  %2839 = vmatpush1.msra.mxu0 0.0
  %2840 = vmatprep.subr.mxu0 0.0
  %2841 = vmatpush1.msra.mxu0 0.0
  %2842 = vmatprep.subr.mxu0 0.0
  %2843 = vmatpush1.msra.mxu0 0.0
  %2844 = vmatprep.mubr.f32.mxu0 0.0
  %2845 = vmatmul.mubr.f32.gmra.mrb[0].mxu0 %v2707
  %v2846 = vpop.f32.mrb[0].mxu0
  %v2847 = vadd.f32 0.0, %v2846
  %v2848 = vpop.f32.mrb[0].mxu0
  %v2849 = vadd.f32 0.0, %v2848
  %2850 = vdwg.mxu0
  %v2851 = vadd.f32 %v2684, %v2776
  %v2852 = vadd.f32 %v2685, %v2778
  %v2853 = vadd.f32 %v2686, %v2847
  %v2854 = vadd.f32 %v2687, %v2849
  %2855 = vrot.lane.b32.xlu0 %v1874, 113
  %v2856 = vpop.permute.xlu0 %2855
  %2857 = vrot.lane.b32.xlu0 %v1875, 113
  %v2858 = vpop.permute.xlu0 %2857
  %2859 = vrot.lane.b32.xlu0 %v1876, 113
  %v2860 = vpop.permute.xlu0 %2859
  %2861 = vrot.lane.b32.xlu0 %v1877, 113
  %v2862 = vpop.permute.xlu0 %2861
  %v2863 = vsel %vm1299, %v2860, %v2862
  %v2864 = vsel %vm1299, %v2858, %v2860
  %v2865 = vsel %vm1299, %v2856, %v2858
  %v2866 = vsel %vm1299, %v2862, %v2856
  %v2867 = vmul.f32 %v2865, %v1310
  %v2868 = vmul.f32 %v2864, %v1314
  %v2869 = vmul.f32 %v2863, %v1318
  %v2870 = vmul.f32 %v2866, %v1322
  %s2871 = scalar_lea.vmem %s3, 48
  %v2872 = vld [vmem:[%s2871] sm:$0xff]
  %v2874 = vsel %vm43, %v2872, 0
  %2876 = vmatprep.subr.mxu0 %v2868
  %2877 = vmatpush1.msra.mxu0 %v2867
  %2878 = vmatprep.subr.mxu0 0.0
  %2879 = vmatpush1.msra.mxu0 0.0
  %2880 = vmatprep.subr.mxu0 0.0
  %2881 = vmatpush1.msra.mxu0 0.0
  %2882 = vmatprep.subr.mxu0 0.0
  %2883 = vmatpush1.msra.mxu0 0.0
  %2884 = vmatprep.subr.mxu0 0.0
  %2885 = vmatpush1.msra.mxu0 0.0
  %2886 = vmatprep.subr.mxu0 0.0
  %2887 = vmatpush1.msra.mxu0 0.0
  %2888 = vmatprep.subr.mxu0 0.0
  %2889 = vmatpush1.msra.mxu0 0.0
  %2890 = vmatprep.subr.mxu0 0.0
  %2891 = vmatpush1.msra.mxu0 0.0
  %2892 = vmatprep.subr.mxu0 0.0
  %2893 = vmatpush1.msra.mxu0 0.0
  %2894 = vmatprep.subr.mxu0 0.0
  %2895 = vmatpush1.msra.mxu0 0.0
  %2896 = vmatprep.subr.mxu0 0.0
  %2897 = vmatpush1.msra.mxu0 0.0
  %2898 = vmatprep.subr.mxu0 0.0
  %2899 = vmatpush1.msra.mxu0 0.0
  %2900 = vmatprep.subr.mxu0 0.0
  %2901 = vmatpush1.msra.mxu0 0.0
  %2902 = vmatprep.subr.mxu0 0.0
  %2903 = vmatpush1.msra.mxu0 0.0
  %2904 = vmatprep.subr.mxu0 0.0
  %2905 = vmatpush1.msra.mxu0 0.0
  %2906 = vmatprep.subr.mxu0 0.0
  %2907 = vmatpush1.msra.mxu0 0.0
  %2908 = vmatprep.subr.mxu0 0.0
  %2909 = vmatpush1.msra.mxu0 0.0
  %2910 = vmatprep.subr.mxu0 0.0
  %2911 = vmatpush1.msra.mxu0 0.0
  %2912 = vmatprep.subr.mxu0 0.0
  %2913 = vmatpush1.msra.mxu0 0.0
  %2914 = vmatprep.subr.mxu0 0.0
  %2915 = vmatpush1.msra.mxu0 0.0
  %2916 = vmatprep.subr.mxu0 0.0
  %2917 = vmatpush1.msra.mxu0 0.0
  %2918 = vmatprep.subr.mxu0 0.0
  %2919 = vmatpush1.msra.mxu0 0.0
  %2920 = vmatprep.subr.mxu0 0.0
  %2921 = vmatpush1.msra.mxu0 0.0
  %2922 = vmatprep.subr.mxu0 0.0
  %2923 = vmatpush1.msra.mxu0 0.0
  %2924 = vmatprep.subr.mxu0 0.0
  %2925 = vmatpush1.msra.mxu0 0.0
  %2926 = vmatprep.subr.mxu0 0.0
  %2927 = vmatpush1.msra.mxu0 0.0
  %2928 = vmatprep.subr.mxu0 0.0
  %2929 = vmatpush1.msra.mxu0 0.0
  %2930 = vmatprep.subr.mxu0 0.0
  %2931 = vmatpush1.msra.mxu0 0.0
  %2932 = vmatprep.subr.mxu0 0.0
  %2933 = vmatpush1.msra.mxu0 0.0
  %2934 = vmatprep.subr.mxu0 0.0
  %2935 = vmatpush1.msra.mxu0 0.0
  %2936 = vmatprep.subr.mxu0 0.0
  %2937 = vmatpush1.msra.mxu0 0.0
  %2938 = vmatprep.subr.mxu0 0.0
  %2939 = vmatpush1.msra.mxu0 0.0
  %2940 = vmatprep.mubr.f32.mxu0 0.0
  %2941 = vmatmul.mubr.f32.gmra.mrb[0].mxu0 %v2874
  %v2942 = vpop.f32.mrb[0].mxu0
  %v2943 = vadd.f32 0.0, %v2942
  %v2944 = vpop.f32.mrb[0].mxu0
  %v2945 = vadd.f32 0.0, %v2944
  %2946 = vdwg.mxu0
  %2947 = vmatprep.subr.mxu0 %v2870
  %2948 = vmatpush1.msra.mxu0 %v2869
  %2949 = vmatprep.subr.mxu0 0.0
  %2950 = vmatpush1.msra.mxu0 0.0
  %2951 = vmatprep.subr.mxu0 0.0
  %2952 = vmatpush1.msra.mxu0 0.0
  %2953 = vmatprep.subr.mxu0 0.0
  %2954 = vmatpush1.msra.mxu0 0.0
  %2955 = vmatprep.subr.mxu0 0.0
  %2956 = vmatpush1.msra.mxu0 0.0
  %2957 = vmatprep.subr.mxu0 0.0
  %2958 = vmatpush1.msra.mxu0 0.0
  %2959 = vmatprep.subr.mxu0 0.0
  %2960 = vmatpush1.msra.mxu0 0.0
  %2961 = vmatprep.subr.mxu0 0.0
  %2962 = vmatpush1.msra.mxu0 0.0
  %2963 = vmatprep.subr.mxu0 0.0
  %2964 = vmatpush1.msra.mxu0 0.0
  %2965 = vmatprep.subr.mxu0 0.0
  %2966 = vmatpush1.msra.mxu0 0.0
  %2967 = vmatprep.subr.mxu0 0.0
  %2968 = vmatpush1.msra.mxu0 0.0
  %2969 = vmatprep.subr.mxu0 0.0
  %2970 = vmatpush1.msra.mxu0 0.0
  %2971 = vmatprep.subr.mxu0 0.0
  %2972 = vmatpush1.msra.mxu0 0.0
  %2973 = vmatprep.subr.mxu0 0.0
  %2974 = vmatpush1.msra.mxu0 0.0
  %2975 = vmatprep.subr.mxu0 0.0
  %2976 = vmatpush1.msra.mxu0 0.0
  %2977 = vmatprep.subr.mxu0 0.0
  %2978 = vmatpush1.msra.mxu0 0.0
  %2979 = vmatprep.subr.mxu0 0.0
  %2980 = vmatpush1.msra.mxu0 0.0
  %2981 = vmatprep.subr.mxu0 0.0
  %2982 = vmatpush1.msra.mxu0 0.0
  %2983 = vmatprep.subr.mxu0 0.0
  %2984 = vmatpush1.msra.mxu0 0.0
  %2985 = vmatprep.subr.mxu0 0.0
  %2986 = vmatpush1.msra.mxu0 0.0
  %2987 = vmatprep.subr.mxu0 0.0
  %2988 = vmatpush1.msra.mxu0 0.0
  %2989 = vmatprep.subr.mxu0 0.0
  %2990 = vmatpush1.msra.mxu0 0.0
  %2991 = vmatprep.subr.mxu0 0.0
  %2992 = vmatpush1.msra.mxu0 0.0
  %2993 = vmatprep.subr.mxu0 0.0
  %2994 = vmatpush1.msra.mxu0 0.0
  %2995 = vmatprep.subr.mxu0 0.0
  %2996 = vmatpush1.msra.mxu0 0.0
  %2997 = vmatprep.subr.mxu0 0.0
  %2998 = vmatpush1.msra.mxu0 0.0
  %2999 = vmatprep.subr.mxu0 0.0
  %3000 = vmatpush1.msra.mxu0 0.0
  %3001 = vmatprep.subr.mxu0 0.0
  %3002 = vmatpush1.msra.mxu0 0.0
  %3003 = vmatprep.subr.mxu0 0.0
  %3004 = vmatpush1.msra.mxu0 0.0
  %3005 = vmatprep.subr.mxu0 0.0
  %3006 = vmatpush1.msra.mxu0 0.0
  %3007 = vmatprep.subr.mxu0 0.0
  %3008 = vmatpush1.msra.mxu0 0.0
  %3009 = vmatprep.subr.mxu0 0.0
  %3010 = vmatpush1.msra.mxu0 0.0
  %3011 = vmatprep.mubr.f32.mxu0 0.0
  %3012 = vmatmul.mubr.f32.gmra.mrb[0].mxu0 %v2874
  %v3013 = vpop.f32.mrb[0].mxu0
  %v3014 = vadd.f32 0.0, %v3013
  %v3015 = vpop.f32.mrb[0].mxu0
  %v3016 = vadd.f32 0.0, %v3015
  %3017 = vdwg.mxu0
  %v3018 = vadd.f32 %v2851, %v2943
  %v3019 = vadd.f32 %v2852, %v2945
  %v3020 = vadd.f32 %v2853, %v3014
  %v3021 = vadd.f32 %v2854, %v3016
  %3022 = vrot.lane.b32.xlu0 %v1874, 112
  %v3023 = vpop.permute.xlu0 %3022
  %3024 = vrot.lane.b32.xlu0 %v1875, 112
  %v3025 = vpop.permute.xlu0 %3024
  %3026 = vrot.lane.b32.xlu0 %v1876, 112
  %v3027 = vpop.permute.xlu0 %3026
  %3028 = vrot.lane.b32.xlu0 %v1877, 112
  %v3029 = vpop.permute.xlu0 %3028
  %v3030 = vsel %vm1490, %v3027, %v3029
  %v3031 = vsel %vm1490, %v3025, %v3027
  %v3032 = vsel %vm1490, %v3023, %v3025
  %v3033 = vsel %vm1490, %v3029, %v3023
  %v3034 = vmul.f32 %v3032, %v1501
  %v3035 = vmul.f32 %v3031, %v1505
  %v3036 = vmul.f32 %v3030, %v1509
  %v3037 = vmul.f32 %v3033, %v1513
  %s3038 = scalar_lea.vmem %s3, 56
  %v3039 = vld [vmem:[%s3038] sm:$0xff]
  %v3041 = vsel %vm43, %v3039, 0
  %3043 = vmatprep.subr.mxu0 %v3035
  %3044 = vmatpush1.msra.mxu0 %v3034
  %3045 = vmatprep.subr.mxu0 0.0
  %3046 = vmatpush1.msra.mxu0 0.0
  %3047 = vmatprep.subr.mxu0 0.0
  %3048 = vmatpush1.msra.mxu0 0.0
  %3049 = vmatprep.subr.mxu0 0.0
  %3050 = vmatpush1.msra.mxu0 0.0
  %3051 = vmatprep.subr.mxu0 0.0
  %3052 = vmatpush1.msra.mxu0 0.0
  %3053 = vmatprep.subr.mxu0 0.0
  %3054 = vmatpush1.msra.mxu0 0.0
  %3055 = vmatprep.subr.mxu0 0.0
  %3056 = vmatpush1.msra.mxu0 0.0
  %3057 = vmatprep.subr.mxu0 0.0
  %3058 = vmatpush1.msra.mxu0 0.0
  %3059 = vmatprep.subr.mxu0 0.0
  %3060 = vmatpush1.msra.mxu0 0.0
  %3061 = vmatprep.subr.mxu0 0.0
  %3062 = vmatpush1.msra.mxu0 0.0
  %3063 = vmatprep.subr.mxu0 0.0
  %3064 = vmatpush1.msra.mxu0 0.0
  %3065 = vmatprep.subr.mxu0 0.0
  %3066 = vmatpush1.msra.mxu0 0.0
  %3067 = vmatprep.subr.mxu0 0.0
  %3068 = vmatpush1.msra.mxu0 0.0
  %3069 = vmatprep.subr.mxu0 0.0
  %3070 = vmatpush1.msra.mxu0 0.0
  %3071 = vmatprep.subr.mxu0 0.0
  %3072 = vmatpush1.msra.mxu0 0.0
  %3073 = vmatprep.subr.mxu0 0.0
  %3074 = vmatpush1.msra.mxu0 0.0
  %3075 = vmatprep.subr.mxu0 0.0
  %3076 = vmatpush1.msra.mxu0 0.0
  %3077 = vmatprep.subr.mxu0 0.0
  %3078 = vmatpush1.msra.mxu0 0.0
  %3079 = vmatprep.subr.mxu0 0.0
  %3080 = vmatpush1.msra.mxu0 0.0
  %3081 = vmatprep.subr.mxu0 0.0
  %3082 = vmatpush1.msra.mxu0 0.0
  %3083 = vmatprep.subr.mxu0 0.0
  %3084 = vmatpush1.msra.mxu0 0.0
  %3085 = vmatprep.subr.mxu0 0.0
  %3086 = vmatpush1.msra.mxu0 0.0
  %3087 = vmatprep.subr.mxu0 0.0
  %3088 = vmatpush1.msra.mxu0 0.0
  %3089 = vmatprep.subr.mxu0 0.0
  %3090 = vmatpush1.msra.mxu0 0.0
  %3091 = vmatprep.subr.mxu0 0.0
  %3092 = vmatpush1.msra.mxu0 0.0
  %3093 = vmatprep.subr.mxu0 0.0
  %3094 = vmatpush1.msra.mxu0 0.0
  %3095 = vmatprep.subr.mxu0 0.0
  %3096 = vmatpush1.msra.mxu0 0.0
  %3097 = vmatprep.subr.mxu0 0.0
  %3098 = vmatpush1.msra.mxu0 0.0
  %3099 = vmatprep.subr.mxu0 0.0
  %3100 = vmatpush1.msra.mxu0 0.0
  %3101 = vmatprep.subr.mxu0 0.0
  %3102 = vmatpush1.msra.mxu0 0.0
  %3103 = vmatprep.subr.mxu0 0.0
  %3104 = vmatpush1.msra.mxu0 0.0
  %3105 = vmatprep.subr.mxu0 0.0
  %3106 = vmatpush1.msra.mxu0 0.0
  %3107 = vmatprep.mubr.f32.mxu0 0.0
  %3108 = vmatmul.mubr.f32.gmra.mrb[0].mxu0 %v3041
  %v3109 = vpop.f32.mrb[0].mxu0
  %v3110 = vadd.f32 0.0, %v3109
  %v3111 = vpop.f32.mrb[0].mxu0
  %v3112 = vadd.f32 0.0, %v3111
  %3113 = vdwg.mxu0
  %3114 = vmatprep.subr.mxu0 %v3037
  %3115 = vmatpush1.msra.mxu0 %v3036
  %3116 = vmatprep.subr.mxu0 0.0
  %3117 = vmatpush1.msra.mxu0 0.0
  %3118 = vmatprep.subr.mxu0 0.0
  %3119 = vmatpush1.msra.mxu0 0.0
  %3120 = vmatprep.subr.mxu0 0.0
  %3121 = vmatpush1.msra.mxu0 0.0
  %3122 = vmatprep.subr.mxu0 0.0
  %3123 = vmatpush1.msra.mxu0 0.0
  %3124 = vmatprep.subr.mxu0 0.0
  %3125 = vmatpush1.msra.mxu0 0.0
  %3126 = vmatprep.subr.mxu0 0.0
  %3127 = vmatpush1.msra.mxu0 0.0
  %3128 = vmatprep.subr.mxu0 0.0
  %3129 = vmatpush1.msra.mxu0 0.0
  %3130 = vmatprep.subr.mxu0 0.0
  %3131 = vmatpush1.msra.mxu0 0.0
  %3132 = vmatprep.subr.mxu0 0.0
  %3133 = vmatpush1.msra.mxu0 0.0
  %3134 = vmatprep.subr.mxu0 0.0
  %3135 = vmatpush1.msra.mxu0 0.0
  %3136 = vmatprep.subr.mxu0 0.0
  %3137 = vmatpush1.msra.mxu0 0.0
  %3138 = vmatprep.subr.mxu0 0.0
  %3139 = vmatpush1.msra.mxu0 0.0
  %3140 = vmatprep.subr.mxu0 0.0
  %3141 = vmatpush1.msra.mxu0 0.0
  %3142 = vmatprep.subr.mxu0 0.0
  %3143 = vmatpush1.msra.mxu0 0.0
  %3144 = vmatprep.subr.mxu0 0.0
  %3145 = vmatpush1.msra.mxu0 0.0
  %3146 = vmatprep.subr.mxu0 0.0
  %3147 = vmatpush1.msra.mxu0 0.0
  %3148 = vmatprep.subr.mxu0 0.0
  %3149 = vmatpush1.msra.mxu0 0.0
  %3150 = vmatprep.subr.mxu0 0.0
  %3151 = vmatpush1.msra.mxu0 0.0
  %3152 = vmatprep.subr.mxu0 0.0
  %3153 = vmatpush1.msra.mxu0 0.0
  %3154 = vmatprep.subr.mxu0 0.0
  %3155 = vmatpush1.msra.mxu0 0.0
  %3156 = vmatprep.subr.mxu0 0.0
  %3157 = vmatpush1.msra.mxu0 0.0
  %3158 = vmatprep.subr.mxu0 0.0
  %3159 = vmatpush1.msra.mxu0 0.0
  %3160 = vmatprep.subr.mxu0 0.0
  %3161 = vmatpush1.msra.mxu0 0.0
  %3162 = vmatprep.subr.mxu0 0.0
  %3163 = vmatpush1.msra.mxu0 0.0
  %3164 = vmatprep.subr.mxu0 0.0
  %3165 = vmatpush1.msra.mxu0 0.0
  %3166 = vmatprep.subr.mxu0 0.0
  %3167 = vmatpush1.msra.mxu0 0.0
  %3168 = vmatprep.subr.mxu0 0.0
  %3169 = vmatpush1.msra.mxu0 0.0
  %3170 = vmatprep.subr.mxu0 0.0
  %3171 = vmatpush1.msra.mxu0 0.0
  %3172 = vmatprep.subr.mxu0 0.0
  %3173 = vmatpush1.msra.mxu0 0.0
  %3174 = vmatprep.subr.mxu0 0.0
  %3175 = vmatpush1.msra.mxu0 0.0
  %3176 = vmatprep.subr.mxu0 0.0
  %3177 = vmatpush1.msra.mxu0 0.0
  %3178 = vmatprep.mubr.f32.mxu0 0.0
  %3179 = vmatmul.mubr.f32.gmra.mrb[0].mxu0 %v3041
  %v3180 = vpop.f32.mrb[0].mxu0
  %v3181 = vadd.f32 0.0, %v3180
  %v3182 = vpop.f32.mrb[0].mxu0
  %v3183 = vadd.f32 0.0, %v3182
  %3184 = vdwg.mxu0
  %v3185 = vadd.f32 %v3018, %v3110
  %v3186 = vadd.f32 %v3019, %v3112
  %v3187 = vadd.f32 %v3020, %v3181
  %v3188 = vadd.f32 %v3021, %v3183
  %3189 = vrot.lane.b32.xlu0 %v1874, 111
  %v3190 = vpop.permute.xlu0 %3189
  %3191 = vrot.lane.b32.xlu0 %v1875, 111
  %v3192 = vpop.permute.xlu0 %3191
  %3193 = vrot.lane.b32.xlu0 %v1876, 111
  %v3194 = vpop.permute.xlu0 %3193
  %3195 = vrot.lane.b32.xlu0 %v1877, 111
  %v3196 = vpop.permute.xlu0 %3195
  %v3197 = vsel %vm1681, %v3194, %v3196
  %v3198 = vsel %vm1681, %v3192, %v3194
  %v3199 = vsel %vm1681, %v3190, %v3192
  %v3200 = vsel %vm1681, %v3196, %v3190
  %v3201 = vmul.f32 %v3199, %v1692
  %v3202 = vmul.f32 %v3198, %v1696
  %v3203 = vmul.f32 %v3197, %v1700
  %v3204 = vmul.f32 %v3200, %v1704
  %s3205 = scalar_lea.vmem %s3, 64
  %v3206 = vld [vmem:[%s3205] sm:$0xff]
  %v3208 = vsel %vm43, %v3206, 0
  %3210 = vmatprep.subr.mxu0 %v3202
  %3211 = vmatpush1.msra.mxu0 %v3201
  %3212 = vmatprep.subr.mxu0 0.0
  %3213 = vmatpush1.msra.mxu0 0.0
  %3214 = vmatprep.subr.mxu0 0.0
  %3215 = vmatpush1.msra.mxu0 0.0
  %3216 = vmatprep.subr.mxu0 0.0
  %3217 = vmatpush1.msra.mxu0 0.0
  %3218 = vmatprep.subr.mxu0 0.0
  %3219 = vmatpush1.msra.mxu0 0.0
  %3220 = vmatprep.subr.mxu0 0.0
  %3221 = vmatpush1.msra.mxu0 0.0
  %3222 = vmatprep.subr.mxu0 0.0
  %3223 = vmatpush1.msra.mxu0 0.0
  %3224 = vmatprep.subr.mxu0 0.0
  %3225 = vmatpush1.msra.mxu0 0.0
  %3226 = vmatprep.subr.mxu0 0.0
  %3227 = vmatpush1.msra.mxu0 0.0
  %3228 = vmatprep.subr.mxu0 0.0
  %3229 = vmatpush1.msra.mxu0 0.0
  %3230 = vmatprep.subr.mxu0 0.0
  %3231 = vmatpush1.msra.mxu0 0.0
  %3232 = vmatprep.subr.mxu0 0.0
  %3233 = vmatpush1.msra.mxu0 0.0
  %3234 = vmatprep.subr.mxu0 0.0
  %3235 = vmatpush1.msra.mxu0 0.0
  %3236 = vmatprep.subr.mxu0 0.0
  %3237 = vmatpush1.msra.mxu0 0.0
  %3238 = vmatprep.subr.mxu0 0.0
  %3239 = vmatpush1.msra.mxu0 0.0
  %3240 = vmatprep.subr.mxu0 0.0
  %3241 = vmatpush1.msra.mxu0 0.0
  %3242 = vmatprep.subr.mxu0 0.0
  %3243 = vmatpush1.msra.mxu0 0.0
  %3244 = vmatprep.subr.mxu0 0.0
  %3245 = vmatpush1.msra.mxu0 0.0
  %3246 = vmatprep.subr.mxu0 0.0
  %3247 = vmatpush1.msra.mxu0 0.0
  %3248 = vmatprep.subr.mxu0 0.0
  %3249 = vmatpush1.msra.mxu0 0.0
  %3250 = vmatprep.subr.mxu0 0.0
  %3251 = vmatpush1.msra.mxu0 0.0
  %3252 = vmatprep.subr.mxu0 0.0
  %3253 = vmatpush1.msra.mxu0 0.0
  %3254 = vmatprep.subr.mxu0 0.0
  %3255 = vmatpush1.msra.mxu0 0.0
  %3256 = vmatprep.subr.mxu0 0.0
  %3257 = vmatpush1.msra.mxu0 0.0
  %3258 = vmatprep.subr.mxu0 0.0
  %3259 = vmatpush1.msra.mxu0 0.0
  %3260 = vmatprep.subr.mxu0 0.0
  %3261 = vmatpush1.msra.mxu0 0.0
  %3262 = vmatprep.subr.mxu0 0.0
  %3263 = vmatpush1.msra.mxu0 0.0
  %3264 = vmatprep.subr.mxu0 0.0
  %3265 = vmatpush1.msra.mxu0 0.0
  %3266 = vmatprep.subr.mxu0 0.0
  %3267 = vmatpush1.msra.mxu0 0.0
  %3268 = vmatprep.subr.mxu0 0.0
  %3269 = vmatpush1.msra.mxu0 0.0
  %3270 = vmatprep.subr.mxu0 0.0
  %3271 = vmatpush1.msra.mxu0 0.0
  %3272 = vmatprep.subr.mxu0 0.0
  %3273 = vmatpush1.msra.mxu0 0.0
  %3274 = vmatprep.mubr.f32.mxu0 0.0
  %3275 = vmatmul.mubr.f32.gmra.mrb[0].mxu0 %v3208
  %v3276 = vpop.f32.mrb[0].mxu0
  %v3277 = vadd.f32 0.0, %v3276
  %v3278 = vpop.f32.mrb[0].mxu0
  %v3279 = vadd.f32 0.0, %v3278
  %3280 = vdwg.mxu0
  %3281 = vmatprep.subr.mxu0 %v3204
  %3282 = vmatpush1.msra.mxu0 %v3203
  %3283 = vmatprep.subr.mxu0 0.0
  %3284 = vmatpush1.msra.mxu0 0.0
  %3285 = vmatprep.subr.mxu0 0.0
  %3286 = vmatpush1.msra.mxu0 0.0
  %3287 = vmatprep.subr.mxu0 0.0
  %3288 = vmatpush1.msra.mxu0 0.0
  %3289 = vmatprep.subr.mxu0 0.0
  %3290 = vmatpush1.msra.mxu0 0.0
  %3291 = vmatprep.subr.mxu0 0.0
  %3292 = vmatpush1.msra.mxu0 0.0
  %3293 = vmatprep.subr.mxu0 0.0
  %3294 = vmatpush1.msra.mxu0 0.0
  %3295 = vmatprep.subr.mxu0 0.0
  %3296 = vmatpush1.msra.mxu0 0.0
  %3297 = vmatprep.subr.mxu0 0.0
  %3298 = vmatpush1.msra.mxu0 0.0
  %3299 = vmatprep.subr.mxu0 0.0
  %3300 = vmatpush1.msra.mxu0 0.0
  %3301 = vmatprep.subr.mxu0 0.0
  %3302 = vmatpush1.msra.mxu0 0.0
  %3303 = vmatprep.subr.mxu0 0.0
  %3304 = vmatpush1.msra.mxu0 0.0
  %3305 = vmatprep.subr.mxu0 0.0
  %3306 = vmatpush1.msra.mxu0 0.0
  %3307 = vmatprep.subr.mxu0 0.0
  %3308 = vmatpush1.msra.mxu0 0.0
  %3309 = vmatprep.subr.mxu0 0.0
  %3310 = vmatpush1.msra.mxu0 0.0
  %3311 = vmatprep.subr.mxu0 0.0
  %3312 = vmatpush1.msra.mxu0 0.0
  %3313 = vmatprep.subr.mxu0 0.0
  %3314 = vmatpush1.msra.mxu0 0.0
  %3315 = vmatprep.subr.mxu0 0.0
  %3316 = vmatpush1.msra.mxu0 0.0
  %3317 = vmatprep.subr.mxu0 0.0
  %3318 = vmatpush1.msra.mxu0 0.0
  %3319 = vmatprep.subr.mxu0 0.0
  %3320 = vmatpush1.msra.mxu0 0.0
  %3321 = vmatprep.subr.mxu0 0.0
  %3322 = vmatpush1.msra.mxu0 0.0
  %3323 = vmatprep.subr.mxu0 0.0
  %3324 = vmatpush1.msra.mxu0 0.0
  %3325 = vmatprep.subr.mxu0 0.0
  %3326 = vmatpush1.msra.mxu0 0.0
  %3327 = vmatprep.subr.mxu0 0.0
  %3328 = vmatpush1.msra.mxu0 0.0
  %3329 = vmatprep.subr.mxu0 0.0
  %3330 = vmatpush1.msra.mxu0 0.0
  %3331 = vmatprep.subr.mxu0 0.0
  %3332 = vmatpush1.msra.mxu0 0.0
  %3333 = vmatprep.subr.mxu0 0.0
  %3334 = vmatpush1.msra.mxu0 0.0
  %3335 = vmatprep.subr.mxu0 0.0
  %3336 = vmatpush1.msra.mxu0 0.0
  %3337 = vmatprep.subr.mxu0 0.0
  %3338 = vmatpush1.msra.mxu0 0.0
  %3339 = vmatprep.subr.mxu0 0.0
  %3340 = vmatpush1.msra.mxu0 0.0
  %3341 = vmatprep.subr.mxu0 0.0
  %3342 = vmatpush1.msra.mxu0 0.0
  %3343 = vmatprep.subr.mxu0 0.0
  %3344 = vmatpush1.msra.mxu0 0.0
  %3345 = vmatprep.mubr.f32.mxu0 0.0
  %3346 = vmatmul.mubr.f32.gmra.mrb[0].mxu0 %v3208
  %v3347 = vpop.f32.mrb[0].mxu0
  %v3348 = vadd.f32 0.0, %v3347
  %v3349 = vpop.f32.mrb[0].mxu0
  %v3350 = vadd.f32 0.0, %v3349
  %3351 = vdwg.mxu0
  %v3352 = vadd.f32 %v3185, %v3277
  %v3353 = vadd.f32 %v3186, %v3279
  %v3354 = vadd.f32 %v3187, %v3348
  %v3355 = vadd.f32 %v3188, %v3350
  %v3356 = vld [vmem:[%s4] sm:$0xff]
  %3358 = vset.pattern.permute.xlu0 0
  %3359 = vperm.xlu0 %3358, %v3356
  %v3360 = vpop.permute.xlu0 %3359
  %v3362 = vadd.f32 %v3352, %v3360
  %v3363 = vadd.f32 %v3353, %v3360
  %v3364 = vadd.f32 %v3354, %v3360
  %v3365 = vadd.f32 %v3355, %v3360
  %v3366 = vadd.f32 %v114, %v3362
  %v3367 = vadd.f32 %v116, %v3363
  %v3368 = vadd.f32 %v185, %v3364
  %v3369 = vadd.f32 %v187, %v3365
  %v3370 = vld [vmem:[%s8] sm:$0xff]
  %v3371 = vld [vmem:[%s8 + $0x8] sm:$0xff]
  %v3372 = vld [vmem:[%s8 + $0x10] sm:$0xff]
  %v3373 = vld [vmem:[%s8 + $0x18] sm:$0xff]
  %v3374 = vld [vmem:[%s8 + $0x20] sm:$0xff]
  %v3375 = vld [vmem:[%s8 + $0x28] sm:$0xff]
  %v3376 = vld [vmem:[%s8 + $0x30] sm:$0xff]
  %v3377 = vld [vmem:[%s8 + $0x38] sm:$0xff]
  %v3378 = vld [vmem:[%s8 + $0x40] sm:$0xff]
  %v3379 = vld [vmem:[%s8 + $0x48] sm:$0xff]
  %v3380 = vld [vmem:[%s8 + $0x50] sm:$0xff]
  %v3381 = vld [vmem:[%s8 + $0x58] sm:$0xff]
  %v3382 = vld [vmem:[%s8 + $0x60] sm:$0xff]
  %v3383 = vld [vmem:[%s8 + $0x68] sm:$0xff]
  %v3384 = vld [vmem:[%s8 + $0x70] sm:$0xff]
  %v3385 = vld [vmem:[%s8 + $0x78] sm:$0xff]
  %v3386 = vld [vmem:[%s8 + $0x80] sm:$0xff]
  %v3387 = vld [vmem:[%s8 + $0x88] sm:$0xff]
  %v3388 = vld [vmem:[%s8 + $0x90] sm:$0xff]
  %v3389 = vld [vmem:[%s8 + $0x98] sm:$0xff]
  %v3390 = vld [vmem:[%s8 + $0xa0] sm:$0xff]
  %v3391 = vld [vmem:[%s8 + $0xa8] sm:$0xff]
  %v3392 = vld [vmem:[%s8 + $0xb0] sm:$0xff]
  %v3393 = vld [vmem:[%s8 + $0xb8] sm:$0xff]
  %v3394 = vld [vmem:[%s8 + $0xc0] sm:$0xff]
  %v3395 = vld [vmem:[%s8 + $0xc8] sm:$0xff]
  %v3396 = vld [vmem:[%s8 + $0xd0] sm:$0xff]
  %v3397 = vld [vmem:[%s8 + $0xd8] sm:$0xff]
  %v3398 = vld [vmem:[%s8 + $0xe0] sm:$0xff]
  %v3399 = vld [vmem:[%s8 + $0xe8] sm:$0xff]
  %v3400 = vld [vmem:[%s8 + $0xf0] sm:$0xff]
  %v3401 = vld [vmem:[%s8 + $0xf8] sm:$0xff]
  %v3402 = vld [vmem:[%s8 + $0x100] sm:$0xff]
  %v3403 = vld [vmem:[%s8 + $0x108] sm:$0xff]
  %v3404 = vld [vmem:[%s8 + $0x110] sm:$0xff]
  %v3405 = vld [vmem:[%s8 + $0x118] sm:$0xff]
  %v3406 = vld [vmem:[%s8 + $0x120] sm:$0xff]
  %v3407 = vld [vmem:[%s8 + $0x128] sm:$0xff]
  %v3408 = vld [vmem:[%s8 + $0x130] sm:$0xff]
  %v3409 = vld [vmem:[%s8 + $0x138] sm:$0xff]
  %v3410 = vld [vmem:[%s8 + $0x140] sm:$0xff]
  %v3411 = vld [vmem:[%s8 + $0x148] sm:$0xff]
  %v3412 = vld [vmem:[%s8 + $0x150] sm:$0xff]
  %v3413 = vld [vmem:[%s8 + $0x158] sm:$0xff]
  %v3414 = vld [vmem:[%s8 + $0x160] sm:$0xff]
  %v3415 = vld [vmem:[%s8 + $0x168] sm:$0xff]
  %v3416 = vld [vmem:[%s8 + $0x170] sm:$0xff]
  %v3417 = vld [vmem:[%s8 + $0x178] sm:$0xff]
  %v3418 = vld [vmem:[%s8 + $0x180] sm:$0xff]
  %v3419 = vld [vmem:[%s8 + $0x188] sm:$0xff]
  %v3420 = vld [vmem:[%s8 + $0x190] sm:$0xff]
  %v3421 = vld [vmem:[%s8 + $0x198] sm:$0xff]
  %v3422 = vld [vmem:[%s8 + $0x1a0] sm:$0xff]
  %v3423 = vld [vmem:[%s8 + $0x1a8] sm:$0xff]
  %v3424 = vld [vmem:[%s8 + $0x1b0] sm:$0xff]
  %v3425 = vld [vmem:[%s8 + $0x1b8] sm:$0xff]
  %v3426 = vld [vmem:[%s8 + $0x1c0] sm:$0xff]
  %v3427 = vld [vmem:[%s8 + $0x1c8] sm:$0xff]
  %v3428 = vld [vmem:[%s8 + $0x1d0] sm:$0xff]
  %v3429 = vld [vmem:[%s8 + $0x1d8] sm:$0xff]
  %v3430 = vld [vmem:[%s8 + $0x1e0] sm:$0xff]
  %v3431 = vld [vmem:[%s8 + $0x1e8] sm:$0xff]
  %v3432 = vld [vmem:[%s8 + $0x1f0] sm:$0xff]
  %v3433 = vld [vmem:[%s8 + $0x1f8] sm:$0xff]
  %3434 = vmatprep.subr.mxu0 0.0
  %3435 = vmatpush1.msra.mxu0 %v3370
  %3436 = vmatprep.subr.mxu0 0.0
  %3437 = vmatpush1.msra.mxu0 %v3371
  %3438 = vmatprep.subr.mxu0 0.0
  %3439 = vmatpush1.msra.mxu0 %v3372
  %3440 = vmatprep.subr.mxu0 0.0
  %3441 = vmatpush1.msra.mxu0 %v3373
  %3442 = vmatprep.subr.mxu0 0.0
  %3443 = vmatpush1.msra.mxu0 %v3374
  %3444 = vmatprep.subr.mxu0 0.0
  %3445 = vmatpush1.msra.mxu0 %v3375
  %3446 = vmatprep.subr.mxu0 0.0
  %3447 = vmatpush1.msra.mxu0 %v3376
  %3448 = vmatprep.subr.mxu0 0.0
  %3449 = vmatpush1.msra.mxu0 %v3377
  %3450 = vmatprep.subr.mxu0 0.0
  %3451 = vmatpush1.msra.mxu0 %v3378
  %3452 = vmatprep.subr.mxu0 0.0
  %3453 = vmatpush1.msra.mxu0 %v3379
  %3454 = vmatprep.subr.mxu0 0.0
  %3455 = vmatpush1.msra.mxu0 %v3380
  %3456 = vmatprep.subr.mxu0 0.0
  %3457 = vmatpush1.msra.mxu0 %v3381
  %3458 = vmatprep.subr.mxu0 0.0
  %3459 = vmatpush1.msra.mxu0 %v3382
  %3460 = vmatprep.subr.mxu0 0.0
  %3461 = vmatpush1.msra.mxu0 %v3383
  %3462 = vmatprep.subr.mxu0 0.0
  %3463 = vmatpush1.msra.mxu0 %v3384
  %3464 = vmatprep.subr.mxu0 0.0
  %3465 = vmatpush1.msra.mxu0 %v3385
  %3466 = vmatprep.subr.mxu0 0.0
  %3467 = vmatpush1.msra.mxu0 %v3386
  %3468 = vmatprep.subr.mxu0 0.0
  %3469 = vmatpush1.msra.mxu0 %v3387
  %3470 = vmatprep.subr.mxu0 0.0
  %3471 = vmatpush1.msra.mxu0 %v3388
  %3472 = vmatprep.subr.mxu0 0.0
  %3473 = vmatpush1.msra.mxu0 %v3389
  %3474 = vmatprep.subr.mxu0 0.0
  %3475 = vmatpush1.msra.mxu0 %v3390
  %3476 = vmatprep.subr.mxu0 0.0
  %3477 = vmatpush1.msra.mxu0 %v3391
  %3478 = vmatprep.subr.mxu0 0.0
  %3479 = vmatpush1.msra.mxu0 %v3392
  %3480 = vmatprep.subr.mxu0 0.0
  %3481 = vmatpush1.msra.mxu0 %v3393
  %3482 = vmatprep.subr.mxu0 0.0
  %3483 = vmatpush1.msra.mxu0 %v3394
  %3484 = vmatprep.subr.mxu0 0.0
  %3485 = vmatpush1.msra.mxu0 %v3395
  %3486 = vmatprep.subr.mxu0 0.0
  %3487 = vmatpush1.msra.mxu0 %v3396
  %3488 = vmatprep.subr.mxu0 0.0
  %3489 = vmatpush1.msra.mxu0 %v3397
  %3490 = vmatprep.subr.mxu0 0.0
  %3491 = vmatpush1.msra.mxu0 %v3398
  %3492 = vmatprep.subr.mxu0 0.0
  %3493 = vmatpush1.msra.mxu0 %v3399
  %3494 = vmatprep.subr.mxu0 0.0
  %3495 = vmatpush1.msra.mxu0 %v3400
  %3496 = vmatprep.subr.mxu0 0.0
  %3497 = vmatpush1.msra.mxu0 %v3401
  %3498 = vmatprep.mubr.f32.mxu0 %v3367
  %3499 = vmatmul.mubr.f32.gmra.mrb[0].mxu0 %v3366
  %v3500 = vpop.f32.mrb[0].mxu0
  %v3501 = vadd.f32 0.0, %v3500
  %v3502 = vpop.f32.mrb[0].mxu0
  %3503 = vdwg.mxu0
  %3504 = vmatprep.subr.mxu0 0.0
  %3505 = vmatpush1.msra.mxu0 %v3402
  %3506 = vmatprep.subr.mxu0 0.0
  %3507 = vmatpush1.msra.mxu0 %v3403
  %3508 = vmatprep.subr.mxu0 0.0
  %3509 = vmatpush1.msra.mxu0 %v3404
  %3510 = vmatprep.subr.mxu0 0.0
  %3511 = vmatpush1.msra.mxu0 %v3405
  %3512 = vmatprep.subr.mxu0 0.0
  %3513 = vmatpush1.msra.mxu0 %v3406
  %3514 = vmatprep.subr.mxu0 0.0
  %3515 = vmatpush1.msra.mxu0 %v3407
  %3516 = vmatprep.subr.mxu0 0.0
  %3517 = vmatpush1.msra.mxu0 %v3408
  %3518 = vmatprep.subr.mxu0 0.0
  %3519 = vmatpush1.msra.mxu0 %v3409
  %3520 = vmatprep.subr.mxu0 0.0
  %3521 = vmatpush1.msra.mxu0 %v3410
  %3522 = vmatprep.subr.mxu0 0.0
  %3523 = vmatpush1.msra.mxu0 %v3411
  %3524 = vmatprep.subr.mxu0 0.0
  %3525 = vmatpush1.msra.mxu0 %v3412
  %3526 = vmatprep.subr.mxu0 0.0
  %3527 = vmatpush1.msra.mxu0 %v3413
  %3528 = vmatprep.subr.mxu0 0.0
  %3529 = vmatpush1.msra.mxu0 %v3414
  %3530 = vmatprep.subr.mxu0 0.0
  %3531 = vmatpush1.msra.mxu0 %v3415
  %3532 = vmatprep.subr.mxu0 0.0
  %3533 = vmatpush1.msra.mxu0 %v3416
  %3534 = vmatprep.subr.mxu0 0.0
  %3535 = vmatpush1.msra.mxu0 %v3417
  %3536 = vmatprep.subr.mxu0 0.0
  %3537 = vmatpush1.msra.mxu0 %v3418
  %3538 = vmatprep.subr.mxu0 0.0
  %3539 = vmatpush1.msra.mxu0 %v3419
  %3540 = vmatprep.subr.mxu0 0.0
  %3541 = vmatpush1.msra.mxu0 %v3420
  %3542 = vmatprep.subr.mxu0 0.0
  %3543 = vmatpush1.msra.mxu0 %v3421
  %3544 = vmatprep.subr.mxu0 0.0
  %3545 = vmatpush1.msra.mxu0 %v3422
  %3546 = vmatprep.subr.mxu0 0.0
  %3547 = vmatpush1.msra.mxu0 %v3423
  %3548 = vmatprep.subr.mxu0 0.0
  %3549 = vmatpush1.msra.mxu0 %v3424
  %3550 = vmatprep.subr.mxu0 0.0
  %3551 = vmatpush1.msra.mxu0 %v3425
  %3552 = vmatprep.subr.mxu0 0.0
  %3553 = vmatpush1.msra.mxu0 %v3426
  %3554 = vmatprep.subr.mxu0 0.0
  %3555 = vmatpush1.msra.mxu0 %v3427
  %3556 = vmatprep.subr.mxu0 0.0
  %3557 = vmatpush1.msra.mxu0 %v3428
  %3558 = vmatprep.subr.mxu0 0.0
  %3559 = vmatpush1.msra.mxu0 %v3429
  %3560 = vmatprep.subr.mxu0 0.0
  %3561 = vmatpush1.msra.mxu0 %v3430
  %3562 = vmatprep.subr.mxu0 0.0
  %3563 = vmatpush1.msra.mxu0 %v3431
  %3564 = vmatprep.subr.mxu0 0.0
  %3565 = vmatpush1.msra.mxu0 %v3432
  %3566 = vmatprep.subr.mxu0 0.0
  %3567 = vmatpush1.msra.mxu0 %v3433
  %3568 = vmatprep.mubr.f32.mxu0 %v3369
  %3569 = vmatmul.mubr.f32.gmra.mrb[0].mxu0 %v3368
  %v3570 = vpop.f32.mrb[0].mxu0
  %v3571 = vadd.f32 %v3501, %v3570
  %v3572 = vpop.f32.mrb[0].mxu0
  %3573 = vdwg.mxu0
  %3574 = vst [vmem:[%s9] sm:$0xff] %v3571
  // Predicated region
  $region38: #{block_no_sn_forward.1} parent=0 // pred_check
    _
  $region39: #{block_no_sn_forward.1} parent=0 // pred_check_branch
    %3576 = sbr.rel (0) target = $region41
  $region40: #{block_no_sn_forward.1} parent=0 // pred_region
    _
  $region41: #{block_no_sn_forward.1} parent=0 // pred_fallthru
    _
  // Predicated region
  $region42: #{block_no_sn_forward.1} parent=0 // pred_check
    _
  $region43: #{block_no_sn_forward.1} parent=0 // pred_check_branch
    %3578 = sbr.rel (0) target = $region45
  $region44: #{block_no_sn_forward.1} parent=0 // pred_region
    _
  $region45: #{block_no_sn_forward.1} parent=0 // pred_fallthru
    _

</llo_original>
